<compile_context>
chip_gen: v5e
topology: v5e:2x2
jax: 0.10.0
libtpu: 0.0.40
codegen_flags: <defaults>
</compile_context>

<pallas_src>
import functools

import jax
import jax.numpy as jnp
import numpy as np
from jax.experimental import pallas as pl
from jax.experimental.pallas import tpu as pltpu

EPS = 1e-5
VMEM_LIMIT = 32 * 1024 * 1024


# ----------------------------- conv (+affine, +stats) kernel -----------------------------
def conv_affine_stats_kernel(x_ref, scale_ref, shift_ref, w_ref, b_ref,
                             h_ref, stats_ref, pad_ref, slab_ref):
    """One image tile per grid step.

    x_ref     : (1, H, W, C)   input tile (NHWC)
    scale/shift: (1, C)        folded BatchNorm affine applied BEFORE the conv
                               (identity for the first conv)
    w_ref     : (9C, C)        tap-major im2col conv weight (already flipped/transposed)
    b_ref     : (1, C)         conv bias
    h_ref     : (1, H, W, C)   conv output tile
    stats_ref : (1, 2, C)      row 0: per-channel sum, row 1: per-channel sum of squares
    pad_ref   : (H+2, W+2, C)  VMEM scratch, 1-pixel zero halo
    slab_ref  : (H*W, 9C)      VMEM scratch, im2col slab
    """
    _, H, W, C = x_ref.shape
    M = H * W

    # Per-channel affine on the input (folded BN of the previous stage).
    xa = (x_ref[0] * scale_ref[...].reshape(1, 1, C)
          + shift_ref[...].reshape(1, 1, C))

    # Zero ONLY the halo ring (not the whole padded buffer), then write the interior.
    zrow = jnp.zeros((1, W + 2, C), jnp.float32)
    zcol = jnp.zeros((H, 1, C), jnp.float32)
    pad_ref[0:1, :, :] = zrow
    pad_ref[H + 1:H + 2, :, :] = zrow
    pad_ref[1:H + 1, 0:1, :] = zcol
    pad_ref[1:H + 1, W + 1:W + 2, :] = zcol
    pad_ref[1:H + 1, 1:W + 1, :] = xa

    # im2col slab: tap-major channel blocks, then ONE (M, 9C) x (9C, C) MXU matmul
    # instead of nine tiny K=C matmuls.
    for dy in range(3):
        for dx in range(3):
            t = dy * 3 + dx
            slab_ref[:, t * C:(t + 1) * C] = (
                pad_ref[dy:dy + H, dx:dx + W, :].reshape(M, C))

    h = jnp.dot(slab_ref[...], w_ref[...],
                preferred_element_type=jnp.float32) + b_ref[...]

    h_ref[0] = h.reshape(H, W, C)

    # Single-pass BatchNorm statistics (sum, sum of squares) for this tile.
    stats_ref[0, 0:1, :] = jnp.sum(h, axis=0, keepdims=True)
    stats_ref[0, 1:2, :] = jnp.sum(h * h, axis=0, keepdims=True)


# ------------------------- BN-affine + LeakyReLU + residual (lane-dense) ------------------
def bn_act_res_kernel(h_ref, x_ref, scale_ref, shift_ref, o_ref, *, leak):
    h = h_ref[...] * scale_ref[...] + shift_ref[...]
    h = jnp.where(h > 0, h, leak * h)          # LeakyReLU(leak)
    o_ref[...] = h + x_ref[...]                # residual add


# --------------------------------------- wrappers -----------------------------------------
def _effective_conv_weight(w_ct):
    """ConvTranspose2d weight (Cin, Cout, 3, 3) -> im2col conv weight (9*Cin, Cout).

    ConvTranspose2d(stride=1, pad=1) == Conv2d(same pad) with the kernel spatially
    flipped and in/out channels swapped; rows are ordered (tap-major, then channel).
    """
    c_in, c_out = w_ct.shape[0], w_ct.shape[1]
    w = jnp.flip(w_ct, axis=(2, 3))          # spatial flip
    w = jnp.transpose(w, (2, 3, 0, 1))       # (kH, kW, Cin, Cout)
    return w.reshape(9 * c_in, c_out).astype(jnp.float32)


def _fold_bn(stats, gamma, beta, count):
    """Reduce per-tile (sum, sumsq) -> per-channel scale/shift of training-mode BN."""
    s = jnp.sum(stats[:, 0, :], axis=0)
    s2 = jnp.sum(stats[:, 1, :], axis=0)
    mean = s / count
    var = s2 / count - mean * mean            # biased variance (training-mode BN)
    scale = gamma.astype(jnp.float32) * jax.lax.rsqrt(var + EPS)
    shift = beta.astype(jnp.float32) - mean * scale
    c = scale.shape[0]
    return scale.reshape(1, c), shift.reshape(1, c)


def _make_conv_call(N, H, W, C):
    return pl.pallas_call(
        conv_affine_stats_kernel,
        out_shape=(jax.ShapeDtypeStruct((N, H, W, C), jnp.float32),
                   jax.ShapeDtypeStruct((N, 2, C), jnp.float32)),
        grid=(N,),
        in_specs=[
            pl.BlockSpec((1, H, W, C), lambda n: (n, 0, 0, 0)),   # x tile
            pl.BlockSpec((1, C), lambda n: (0, 0)),               # scale (resident)
            pl.BlockSpec((1, C), lambda n: (0, 0)),               # shift
            pl.BlockSpec((9 * C, C), lambda n: (0, 0)),           # im2col weight
            pl.BlockSpec((1, C), lambda n: (0, 0)),               # bias
        ],
        out_specs=(pl.BlockSpec((1, H, W, C), lambda n: (n, 0, 0, 0)),
                   pl.BlockSpec((1, 2, C), lambda n: (n, 0, 0))),
        scratch_shapes=[pltpu.VMEM((H + 2, W + 2, C), jnp.float32),
                        pltpu.VMEM((H * W, 9 * C), jnp.float32)],
        compiler_params=pltpu.CompilerParams(
            dimension_semantics=("parallel",),
            vmem_limit_bytes=VMEM_LIMIT),
    )


def _lane_layout(total, W, C):
    """Pick a lane-dense 2-D view (rows, L) for the elementwise epilogue."""
    if total % 128 == 0 and 128 % C == 0:
        L = 128                      # fully lane-dense slabs
    else:
        L = W * C                    # channels-last row fallback
    R = total // L
    TR = R
    for cand in (512, 256, 64, 8):
        if R % cand == 0:
            TR = cand
            break
    return L, R, TR


def resblock_forward(x_nchw, params, leak=0.1):
    N, C, H, W = x_nchw.shape
    x = jnp.transpose(x_nchw, (0, 2, 3, 1)).astype(jnp.float32)   # NHWC
    count = float(N * H * W)

    w1 = _effective_conv_weight(params["w1"])
    w2 = _effective_conv_weight(params["w2"])
    b1 = params["b1"].reshape(1, C).astype(jnp.float32)
    b2 = params["b2"].reshape(1, C).astype(jnp.float32)

    ones = jnp.ones((1, C), jnp.float32)
    zeros = jnp.zeros((1, C), jnp.float32)

    conv = _make_conv_call(N, H, W, C)

    # conv1 (+ BN1 stats), fold BN1, conv2 applied on BN1-normalized input (+ BN2 stats)
    h1, st1 = conv(x, ones, zeros, w1, b1)
    sc1, sh1 = _fold_bn(st1, params["g1"], params["be1"], count)
    h2, st2 = conv(h1, sc1, sh1, w2, b2)
    sc2, sh2 = _fold_bn(st2, params["g2"], params["be2"], count)

    # BN2 affine + LeakyReLU + residual on lane-dense slabs.
    total = N * H * W * C
    L, R, TR = _lane_layout(total, W, C)
    reps = L // C
    h2f = h2.reshape(R, L)
    xf = x.reshape(R, L)
    sc2t = jnp.tile(sc2.reshape(-1), reps).reshape(1, L)
    sh2t = jnp.tile(sh2.reshape(-1), reps).reshape(1, L)

    out = pl.pallas_call(
        functools.partial(bn_act_res_kernel, leak=leak),
        out_shape=jax.ShapeDtypeStruct((R, L), jnp.float32),
        grid=(R // TR,),
        in_specs=[pl.BlockSpec((TR, L), lambda i: (i, 0)),
                  pl.BlockSpec((TR, L), lambda i: (i, 0)),
                  pl.BlockSpec((1, L), lambda i: (0, 0)),
                  pl.BlockSpec((1, L), lambda i: (0, 0))],
        out_specs=pl.BlockSpec((TR, L), lambda i: (i, 0)),
        compiler_params=pltpu.CompilerParams(
            dimension_semantics=("parallel",),
            vmem_limit_bytes=VMEM_LIMIT),
    )(h2f, xf, sc2t, sh2t)

    out = out.reshape(N, H, W, C)
    return jnp.transpose(out, (0, 3, 1, 2))   # back to NCHW
    # TODO(synk): keep the surrounding model end-to-end NHWC to drop these two transposes.


# ------------------------- pure-JAX reference (NCHW) -------------------------
def _ref_resblock(x, params, leak=0.1):
    def conv_t(x, w_ct, b):
        w_conv = jnp.transpose(jnp.flip(w_ct, axis=(2, 3)), (1, 0, 2, 3))  # OIHW
        y = jax.lax.conv_general_dilated(
            x, w_conv, window_strides=(1, 1), padding=((1, 1), (1, 1)),
            dimension_numbers=("NCHW", "OIHW", "NCHW"))
        return y + b[None, :, None, None]

    def bn(x, g, b):
        mean = jnp.mean(x, axis=(0, 2, 3), keepdims=True)
        var = jnp.mean((x - mean) ** 2, axis=(0, 2, 3), keepdims=True)
        return (x - mean) * jax.lax.rsqrt(var + EPS) * g[None, :, None, None] \
            + b[None, :, None, None]

    h = conv_t(x, params["w1"], params["b1"])
    h = bn(h, params["g1"], params["be1"])
    h = conv_t(h, params["w2"], params["b2"])
    h = bn(h, params["g2"], params["be2"])
    h = jnp.where(h > 0, h, leak * h)
    return h + x


if __name__ == "__main__":
    N, C, H, W = 2, 4, 16, 16
    key = jax.random.PRNGKey(0)
    kx, k1, k2, k3, k4, k5, k6, k7, k8 = jax.random.split(key, 9)

    x = jax.random.normal(kx, (N, C, H, W), jnp.float32)

    # ConvTranspose2d weights are (Cin, Cout, kH, kW).
    params = {
        "w1": 0.2 * jax.random.normal(k1, (C, C, 3, 3), jnp.float32),
        "b1": 0.1 * jax.random.normal(k2, (C,), jnp.float32),
        "w2": 0.2 * jax.random.normal(k3, (C, C, 3, 3), jnp.float32),
        "b2": 0.1 * jax.random.normal(k4, (C,), jnp.float32),
        "g1": 1.0 + 0.1 * jax.random.normal(k5, (C,), jnp.float32),
        "be1": 0.1 * jax.random.normal(k6, (C,), jnp.float32),
        "g2": 1.0 + 0.1 * jax.random.normal(k7, (C,), jnp.float32),
        "be2": 0.1 * jax.random.normal(k8, (C,), jnp.float32),
    }

    fwd = jax.jit(lambda xx, pp: resblock_forward(xx, pp, leak=0.1))
    out = jax.block_until_ready(fwd(x, params))

    ref = jax.block_until_ready(_ref_resblock(x, params, leak=0.1))
    np.testing.assert_allclose(np.asarray(out), np.asarray(ref), rtol=1e-4, atol=1e-4)

    print("KERNEL_OK")
</pallas_src>

<mosaic_0001>
module attributes {stable_mosaic.version = 11 : i64} {
  func.func @conv_affine_stats_kernel(%arg0: i32, %arg1: memref<1x16x16x4xf32, #tpu.memory_space<vmem>>, %arg2: memref<1x4xf32, #tpu.memory_space<vmem>>, %arg3: memref<1x4xf32, #tpu.memory_space<vmem>>, %arg4: memref<36x4xf32, #tpu.memory_space<vmem>>, %arg5: memref<1x4xf32, #tpu.memory_space<vmem>>, %arg6: memref<1x16x16x4xf32, #tpu.memory_space<vmem>>, %arg7: memref<1x2x4xf32, #tpu.memory_space<vmem>>, %arg8: memref<18x18x4xf32, #tpu.memory_space<vmem>>, %arg9: memref<256x36xf32, #tpu.memory_space<vmem>>) attributes {dimension_semantics = [#tpu.dimension_semantics<parallel>], iteration_bounds = array<i64: 2>, scalar_prefetch = 0 : i64, scratch_operands = 2 : i64, tpu.core_type = #tpu.core_type<tc>, window_params = [{transform_indices = @transform_0, window_bounds = array<i64: 1, 16, 16, 4>}, {pipeline_mode = #tpu.pipeline_mode<synchronous>, transform_indices = @transform_1, window_bounds = array<i64: 1, 4>}, {pipeline_mode = #tpu.pipeline_mode<synchronous>, transform_indices = @transform_2, window_bounds = array<i64: 1, 4>}, {pipeline_mode = #tpu.pipeline_mode<synchronous>, transform_indices = @transform_3, window_bounds = array<i64: 36, 4>}, {pipeline_mode = #tpu.pipeline_mode<synchronous>, transform_indices = @transform_4, window_bounds = array<i64: 1, 4>}, {transform_indices = @transform_5, window_bounds = array<i64: 1, 16, 16, 4>}, {transform_indices = @transform_6, window_bounds = array<i64: 1, 2, 4>}]} {
    %c0 = arith.constant 0 : index
    %c0_0 = arith.constant 0 : index
    %c0_1 = arith.constant 0 : index
    %c0_2 = arith.constant 0 : index
    %0 = vector.load %arg1[%c0, %c0_0, %c0_1, %c0_2] : memref<1x16x16x4xf32, #tpu.memory_space<vmem>>, vector<1x16x16x4xf32>
    %1 = vector.shape_cast %0 : vector<1x16x16x4xf32> to vector<16x16x4xf32>
    %c0_3 = arith.constant 0 : index
    %c0_4 = arith.constant 0 : index
    %2 = vector.load %arg2[%c0_3, %c0_4] : memref<1x4xf32, #tpu.memory_space<vmem>>, vector<1x4xf32>
    %3 = vector.shape_cast %2 : vector<1x4xf32> to vector<1x1x4xf32>
    %4 = vector.broadcast %3 : vector<1x1x4xf32> to vector<16x16x4xf32>
    %5 = arith.mulf %1, %4 : vector<16x16x4xf32>
    %c0_5 = arith.constant 0 : index
    %c0_6 = arith.constant 0 : index
    %6 = vector.load %arg3[%c0_5, %c0_6] : memref<1x4xf32, #tpu.memory_space<vmem>>, vector<1x4xf32>
    %7 = vector.shape_cast %6 : vector<1x4xf32> to vector<1x1x4xf32>
    %8 = vector.broadcast %7 : vector<1x1x4xf32> to vector<16x16x4xf32>
    %9 = arith.addf %5, %8 : vector<16x16x4xf32>
    %cst = arith.constant 0.000000e+00 : f32
    %10 = vector.broadcast %cst : f32 to vector<1x18x4xf32>
    %cst_7 = arith.constant 0.000000e+00 : f32
    %11 = vector.broadcast %cst_7 : f32 to vector<16x1x4xf32>
    %c0_8 = arith.constant 0 : index
    %c0_9 = arith.constant 0 : index
    %c0_10 = arith.constant 0 : index
    %12 = vector.load %arg8[%c0_8, %c0_9, %c0_10] : memref<18x18x4xf32, #tpu.memory_space<vmem>>, vector<1x18x4xf32>
    tpu.vector_store %arg8[%c0_8, %c0_9, %c0_10], %10 {strides = array<i32>} : memref<18x18x4xf32, #tpu.memory_space<vmem>>, vector<1x18x4xf32>,
    %c17 = arith.constant 17 : index
    %c0_11 = arith.constant 0 : index
    %c0_12 = arith.constant 0 : index
    %13 = vector.load %arg8[%c17, %c0_11, %c0_12] : memref<18x18x4xf32, #tpu.memory_space<vmem>>, vector<1x18x4xf32>
    tpu.vector_store %arg8[%c17, %c0_11, %c0_12], %10 {strides = array<i32>} : memref<18x18x4xf32, #tpu.memory_space<vmem>>, vector<1x18x4xf32>,
    %c1 = arith.constant 1 : index
    %c0_13 = arith.constant 0 : index
    %c0_14 = arith.constant 0 : index
    %14 = vector.load %arg8[%c1, %c0_13, %c0_14] : memref<18x18x4xf32, #tpu.memory_space<vmem>>, vector<16x1x4xf32>
    tpu.vector_store %arg8[%c1, %c0_13, %c0_14], %11 {strides = array<i32>} : memref<18x18x4xf32, #tpu.memory_space<vmem>>, vector<16x1x4xf32>,
    %c1_15 = arith.constant 1 : index
    %c17_16 = arith.constant 17 : index
    %c0_17 = arith.constant 0 : index
    %15 = vector.load %arg8[%c1_15, %c17_16, %c0_17] : memref<18x18x4xf32, #tpu.memory_space<vmem>>, vector<16x1x4xf32>
    tpu.vector_store %arg8[%c1_15, %c17_16, %c0_17], %11 {strides = array<i32>} : memref<18x18x4xf32, #tpu.memory_space<vmem>>, vector<16x1x4xf32>,
    %c1_18 = arith.constant 1 : index
    %c1_19 = arith.constant 1 : index
    %c0_20 = arith.constant 0 : index
    %16 = vector.load %arg8[%c1_18, %c1_19, %c0_20] : memref<18x18x4xf32, #tpu.memory_space<vmem>>, vector<16x16x4xf32>
    tpu.vector_store %arg8[%c1_18, %c1_19, %c0_20], %9 {strides = array<i32>} : memref<18x18x4xf32, #tpu.memory_space<vmem>>, vector<16x16x4xf32>,
    %c0_21 = arith.constant 0 : index
    %c0_22 = arith.constant 0 : index
    %c0_23 = arith.constant 0 : index
    %17 = vector.load %arg8[%c0_21, %c0_22, %c0_23] : memref<18x18x4xf32, #tpu.memory_space<vmem>>, vector<16x16x4xf32>
    %18 = vector.shape_cast %17 : vector<16x16x4xf32> to vector<256x4xf32>
    %c0_24 = arith.constant 0 : index
    %c0_25 = arith.constant 0 : index
    %19 = vector.load %arg9[%c0_24, %c0_25] : memref<256x36xf32, #tpu.memory_space<vmem>>, vector<256x4xf32>
    tpu.vector_store %arg9[%c0_24, %c0_25], %18 {strides = array<i32>} : memref<256x36xf32, #tpu.memory_space<vmem>>, vector<256x4xf32>,
    %c0_26 = arith.constant 0 : index
    %c1_27 = arith.constant 1 : index
    %c0_28 = arith.constant 0 : index
    %20 = vector.load %arg8[%c0_26, %c1_27, %c0_28] : memref<18x18x4xf32, #tpu.memory_space<vmem>>, vector<16x16x4xf32>
    %21 = vector.shape_cast %20 : vector<16x16x4xf32> to vector<256x4xf32>
    %c0_29 = arith.constant 0 : index
    %c4 = arith.constant 4 : index
    %22 = vector.load %arg9[%c0_29, %c4] : memref<256x36xf32, #tpu.memory_space<vmem>>, vector<256x4xf32>
    tpu.vector_store %arg9[%c0_29, %c4], %21 {strides = array<i32>} : memref<256x36xf32, #tpu.memory_space<vmem>>, vector<256x4xf32>,
    %c0_30 = arith.constant 0 : index
    %c2 = arith.constant 2 : index
    %c0_31 = arith.constant 0 : index
    %23 = vector.load %arg8[%c0_30, %c2, %c0_31] : memref<18x18x4xf32, #tpu.memory_space<vmem>>, vector<16x16x4xf32>
    %24 = vector.shape_cast %23 : vector<16x16x4xf32> to vector<256x4xf32>
    %c0_32 = arith.constant 0 : index
    %c8 = arith.constant 8 : index
    %25 = vector.load %arg9[%c0_32, %c8] : memref<256x36xf32, #tpu.memory_space<vmem>>, vector<256x4xf32>
    tpu.vector_store %arg9[%c0_32, %c8], %24 {strides = array<i32>} : memref<256x36xf32, #tpu.memory_space<vmem>>, vector<256x4xf32>,
    %c1_33 = arith.constant 1 : index
    %c0_34 = arith.constant 0 : index
    %c0_35 = arith.constant 0 : index
    %26 = vector.load %arg8[%c1_33, %c0_34, %c0_35] : memref<18x18x4xf32, #tpu.memory_space<vmem>>, vector<16x16x4xf32>
    %27 = vector.shape_cast %26 : vector<16x16x4xf32> to vector<256x4xf32>
    %c0_36 = arith.constant 0 : index
    %c12 = arith.constant 12 : index
    %28 = vector.load %arg9[%c0_36, %c12] : memref<256x36xf32, #tpu.memory_space<vmem>>, vector<256x4xf32>
    tpu.vector_store %arg9[%c0_36, %c12], %27 {strides = array<i32>} : memref<256x36xf32, #tpu.memory_space<vmem>>, vector<256x4xf32>,
    %c1_37 = arith.constant 1 : index
    %c1_38 = arith.constant 1 : index
    %c0_39 = arith.constant 0 : index
    %29 = vector.load %arg8[%c1_37, %c1_38, %c0_39] : memref<18x18x4xf32, #tpu.memory_space<vmem>>, vector<16x16x4xf32>
    %30 = vector.shape_cast %29 : vector<16x16x4xf32> to vector<256x4xf32>
    %c0_40 = arith.constant 0 : index
    %c16 = arith.constant 16 : index
    %31 = vector.load %arg9[%c0_40, %c16] : memref<256x36xf32, #tpu.memory_space<vmem>>, vector<256x4xf32>
    tpu.vector_store %arg9[%c0_40, %c16], %30 {strides = array<i32>} : memref<256x36xf32, #tpu.memory_space<vmem>>, vector<256x4xf32>,
    %c1_41 = arith.constant 1 : index
    %c2_42 = arith.constant 2 : index
    %c0_43 = arith.constant 0 : index
    %32 = vector.load %arg8[%c1_41, %c2_42, %c0_43] : memref<18x18x4xf32, #tpu.memory_space<vmem>>, vector<16x16x4xf32>
    %33 = vector.shape_cast %32 : vector<16x16x4xf32> to vector<256x4xf32>
    %c0_44 = arith.constant 0 : index
    %c20 = arith.constant 20 : index
    %34 = vector.load %arg9[%c0_44, %c20] : memref<256x36xf32, #tpu.memory_space<vmem>>, vector<256x4xf32>
    tpu.vector_store %arg9[%c0_44, %c20], %33 {strides = array<i32>} : memref<256x36xf32, #tpu.memory_space<vmem>>, vector<256x4xf32>,
    %c2_45 = arith.constant 2 : index
    %c0_46 = arith.constant 0 : index
    %c0_47 = arith.constant 0 : index
    %35 = vector.load %arg8[%c2_45, %c0_46, %c0_47] : memref<18x18x4xf32, #tpu.memory_space<vmem>>, vector<16x16x4xf32>
    %36 = vector.shape_cast %35 : vector<16x16x4xf32> to vector<256x4xf32>
    %c0_48 = arith.constant 0 : index
    %c24 = arith.constant 24 : index
    %37 = vector.load %arg9[%c0_48, %c24] : memref<256x36xf32, #tpu.memory_space<vmem>>, vector<256x4xf32>
    tpu.vector_store %arg9[%c0_48, %c24], %36 {strides = array<i32>} : memref<256x36xf32, #tpu.memory_space<vmem>>, vector<256x4xf32>,
    %c2_49 = arith.constant 2 : index
    %c1_50 = arith.constant 1 : index
    %c0_51 = arith.constant 0 : index
    %38 = vector.load %arg8[%c2_49, %c1_50, %c0_51] : memref<18x18x4xf32, #tpu.memory_space<vmem>>, vector<16x16x4xf32>
    %39 = vector.shape_cast %38 : vector<16x16x4xf32> to vector<256x4xf32>
    %c0_52 = arith.constant 0 : index
    %c28 = arith.constant 28 : index
    %40 = vector.load %arg9[%c0_52, %c28] : memref<256x36xf32, #tpu.memory_space<vmem>>, vector<256x4xf32>
    tpu.vector_store %arg9[%c0_52, %c28], %39 {strides = array<i32>} : memref<256x36xf32, #tpu.memory_space<vmem>>, vector<256x4xf32>,
    %c2_53 = arith.constant 2 : index
    %c2_54 = arith.constant 2 : index
    %c0_55 = arith.constant 0 : index
    %41 = vector.load %arg8[%c2_53, %c2_54, %c0_55] : memref<18x18x4xf32, #tpu.memory_space<vmem>>, vector<16x16x4xf32>
    %42 = vector.shape_cast %41 : vector<16x16x4xf32> to vector<256x4xf32>
    %c0_56 = arith.constant 0 : index
    %c32 = arith.constant 32 : index
    %43 = vector.load %arg9[%c0_56, %c32] : memref<256x36xf32, #tpu.memory_space<vmem>>, vector<256x4xf32>
    tpu.vector_store %arg9[%c0_56, %c32], %42 {strides = array<i32>} : memref<256x36xf32, #tpu.memory_space<vmem>>, vector<256x4xf32>,
    %c0_57 = arith.constant 0 : index
    %c0_58 = arith.constant 0 : index
    %44 = vector.load %arg9[%c0_57, %c0_58] : memref<256x36xf32, #tpu.memory_space<vmem>>, vector<256x36xf32>
    %c0_59 = arith.constant 0 : index
    %c0_60 = arith.constant 0 : index
    %45 = vector.load %arg4[%c0_59, %c0_60] : memref<36x4xf32, #tpu.memory_space<vmem>>, vector<36x4xf32>
    %cst_61 = arith.constant dense<0.000000e+00> : vector<256x4xf32>
    %46 = tpu.matmul %44, %45, %cst_61 {dimension_numbers = #tpu.dot_dimension_numbers<[1], [0], [0], [1], [0, 0, 1, 1], [], []>} : vector<256x36xf32>, vector<36x4xf32>, vector<256x4xf32> -> vector<256x4xf32>
    %c0_62 = arith.constant 0 : index
    %c0_63 = arith.constant 0 : index
    %47 = vector.load %arg5[%c0_62, %c0_63] : memref<1x4xf32, #tpu.memory_space<vmem>>, vector<1x4xf32>
    %48 = vector.broadcast %47 : vector<1x4xf32> to vector<256x4xf32>
    %49 = arith.addf %46, %48 : vector<256x4xf32>
    %50 = vector.shape_cast %49 : vector<256x4xf32> to vector<16x16x4xf32>
    %c0_64 = arith.constant 0 : index
    %c0_65 = arith.constant 0 : index
    %c0_66 = arith.constant 0 : index
    %c0_67 = arith.constant 0 : index
    %51 = vector.load %arg6[%c0_64, %c0_65, %c0_66, %c0_67] : memref<1x16x16x4xf32, #tpu.memory_space<vmem>>, vector<1x16x16x4xf32>
    %52 = vector.shape_cast %51 : vector<1x16x16x4xf32> to vector<16x16x4xf32>
    %53 = vector.shape_cast %50 : vector<16x16x4xf32> to vector<1x16x16x4xf32>
    tpu.vector_store %arg6[%c0_64, %c0_65, %c0_66, %c0_67], %53 {strides = array<i32>} : memref<1x16x16x4xf32, #tpu.memory_space<vmem>>, vector<1x16x16x4xf32>,
    %cst_68 = arith.constant dense<0.000000e+00> : vector<4xf32>
    %54 = vector.multi_reduction <add>, %49, %cst_68 [0] : vector<256x4xf32> to vector<4xf32>
    %55 = vector.shape_cast %54 : vector<4xf32> to vector<1x4xf32>
    %c0_69 = arith.constant 0 : index
    %c0_70 = arith.constant 0 : index
    %c0_71 = arith.constant 0 : index
    %56 = vector.load %arg7[%c0_69, %c0_70, %c0_71] : memref<1x2x4xf32, #tpu.memory_space<vmem>>, vector<1x1x4xf32>
    %57 = vector.shape_cast %56 : vector<1x1x4xf32> to vector<1x4xf32>
    %58 = vector.shape_cast %55 : vector<1x4xf32> to vector<1x1x4xf32>
    tpu.vector_store %arg7[%c0_69, %c0_70, %c0_71], %58 {strides = array<i32>} : memref<1x2x4xf32, #tpu.memory_space<vmem>>, vector<1x1x4xf32>,
    %59 = arith.mulf %49, %49 : vector<256x4xf32>
    %cst_72 = arith.constant dense<0.000000e+00> : vector<4xf32>
    %60 = vector.multi_reduction <add>, %59, %cst_72 [0] : vector<256x4xf32> to vector<4xf32>
    %61 = vector.shape_cast %60 : vector<4xf32> to vector<1x4xf32>
    %c0_73 = arith.constant 0 : index
    %c1_74 = arith.constant 1 : index
    %c0_75 = arith.constant 0 : index
    %62 = vector.load %arg7[%c0_73, %c1_74, %c0_75] : memref<1x2x4xf32, #tpu.memory_space<vmem>>, vector<1x1x4xf32>
    %63 = vector.shape_cast %62 : vector<1x1x4xf32> to vector<1x4xf32>
    %64 = vector.shape_cast %61 : vector<1x4xf32> to vector<1x1x4xf32>
    tpu.vector_store %arg7[%c0_73, %c1_74, %c0_75], %64 {strides = array<i32>} : memref<1x2x4xf32, #tpu.memory_space<vmem>>, vector<1x1x4xf32>,
    return
  }
  func.func @transform_0(%arg0: i32) -> (i32, i32, i32, i32) {
    %c0_i32 = arith.constant 0 : i32
    %c0_i32_0 = arith.constant 0 : i32
    %c0_i32_1 = arith.constant 0 : i32
    %c0_i32_2 = arith.constant 0 : i32
    return %arg0, %c0_i32, %c0_i32_0, %c0_i32_1 : i32, i32, i32, i32
  }
  func.func @transform_1(%arg0: i32) -> (i32, i32) {
    %c0_i32 = arith.constant 0 : i32
    %c0_i32_0 = arith.constant 0 : i32
    %c0_i32_1 = arith.constant 0 : i32
    return %c0_i32, %c0_i32_0 : i32, i32
  }
  func.func @transform_2(%arg0: i32) -> (i32, i32) {
    %c0_i32 = arith.constant 0 : i32
    %c0_i32_0 = arith.constant 0 : i32
    %c0_i32_1 = arith.constant 0 : i32
    return %c0_i32, %c0_i32_0 : i32, i32
  }
  func.func @transform_3(%arg0: i32) -> (i32, i32) {
    %c0_i32 = arith.constant 0 : i32
    %c0_i32_0 = arith.constant 0 : i32
    %c0_i32_1 = arith.constant 0 : i32
    return %c0_i32, %c0_i32_0 : i32, i32
  }
  func.func @transform_4(%arg0: i32) -> (i32, i32) {
    %c0_i32 = arith.constant 0 : i32
    %c0_i32_0 = arith.constant 0 : i32
    %c0_i32_1 = arith.constant 0 : i32
    return %c0_i32, %c0_i32_0 : i32, i32
  }
  func.func @transform_5(%arg0: i32) -> (i32, i32, i32, i32) {
    %c0_i32 = arith.constant 0 : i32
    %c0_i32_0 = arith.constant 0 : i32
    %c0_i32_1 = arith.constant 0 : i32
    %c0_i32_2 = arith.constant 0 : i32
    return %arg0, %c0_i32, %c0_i32_0, %c0_i32_1 : i32, i32, i32, i32
  }
  func.func @transform_6(%arg0: i32) -> (i32, i32, i32) {
    %c0_i32 = arith.constant 0 : i32
    %c0_i32_0 = arith.constant 0 : i32
    %c0_i32_1 = arith.constant 0 : i32
    return %arg0, %c0_i32, %c0_i32_0 : i32, i32, i32
  }
}

module attributes {stable_mosaic.version = 11 : i64} {
  func.func @bn_act_res_kernel(%arg0: i32, %arg1: memref<8x128xf32, #tpu.memory_space<vmem>>, %arg2: memref<8x128xf32, #tpu.memory_space<vmem>>, %arg3: memref<1x128xf32, #tpu.memory_space<vmem>>, %arg4: memref<1x128xf32, #tpu.memory_space<vmem>>, %arg5: memref<8x128xf32, #tpu.memory_space<vmem>>) attributes {dimension_semantics = [#tpu.dimension_semantics<parallel>], iteration_bounds = array<i64: 2>, scalar_prefetch = 0 : i64, scratch_operands = 0 : i64, tpu.core_type = #tpu.core_type<tc>, window_params = [{transform_indices = @transform_0, window_bounds = array<i64: 8, 128>}, {transform_indices = @transform_1, window_bounds = array<i64: 8, 128>}, {pipeline_mode = #tpu.pipeline_mode<synchronous>, transform_indices = @transform_2, window_bounds = array<i64: 1, 128>}, {pipeline_mode = #tpu.pipeline_mode<synchronous>, transform_indices = @transform_3, window_bounds = array<i64: 1, 128>}, {transform_indices = @transform_4, window_bounds = array<i64: 8, 128>}]} {
    %c0 = arith.constant 0 : index
    %c0_0 = arith.constant 0 : index
    %0 = vector.load %arg1[%c0, %c0_0] : memref<8x128xf32, #tpu.memory_space<vmem>>, vector<8x128xf32>
    %c0_1 = arith.constant 0 : index
    %c0_2 = arith.constant 0 : index
    %1 = vector.load %arg3[%c0_1, %c0_2] : memref<1x128xf32, #tpu.memory_space<vmem>>, vector<1x128xf32>
    %2 = vector.broadcast %1 : vector<1x128xf32> to vector<8x128xf32>
    %3 = arith.mulf %0, %2 : vector<8x128xf32>
    %c0_3 = arith.constant 0 : index
    %c0_4 = arith.constant 0 : index
    %4 = vector.load %arg4[%c0_3, %c0_4] : memref<1x128xf32, #tpu.memory_space<vmem>>, vector<1x128xf32>
    %5 = vector.broadcast %4 : vector<1x128xf32> to vector<8x128xf32>
    %6 = arith.addf %3, %5 : vector<8x128xf32>
    %cst = arith.constant 0.000000e+00 : f32
    %7 = vector.broadcast %cst : f32 to vector<8x128xf32>
    %8 = arith.cmpf ogt, %6, %7 : vector<8x128xf32>
    %cst_5 = arith.constant 1.000000e-01 : f32
    %9 = vector.broadcast %cst_5 : f32 to vector<8x128xf32>
    %10 = arith.mulf %9, %6 : vector<8x128xf32>
    %11 = arith.select %8, %6, %10 : vector<8x128xi1>, vector<8x128xf32>
    %c0_6 = arith.constant 0 : index
    %c0_7 = arith.constant 0 : index
    %12 = vector.load %arg2[%c0_6, %c0_7] : memref<8x128xf32, #tpu.memory_space<vmem>>, vector<8x128xf32>
    %13 = arith.addf %11, %12 : vector<8x128xf32>
    %c0_8 = arith.constant 0 : index
    %c0_9 = arith.constant 0 : index
    %14 = vector.load %arg5[%c0_8, %c0_9] : memref<8x128xf32, #tpu.memory_space<vmem>>, vector<8x128xf32>
    tpu.vector_store %arg5[%c0_8, %c0_9], %13 {strides = array<i32>} : memref<8x128xf32, #tpu.memory_space<vmem>>, vector<8x128xf32>,
    return
  }
  func.func @transform_0(%arg0: i32) -> (i32, i32) {
    %c0_i32 = arith.constant 0 : i32
    %c0_i32_0 = arith.constant 0 : i32
    return %arg0, %c0_i32 : i32, i32
  }
  func.func @transform_1(%arg0: i32) -> (i32, i32) {
    %c0_i32 = arith.constant 0 : i32
    %c0_i32_0 = arith.constant 0 : i32
    return %arg0, %c0_i32 : i32, i32
  }
  func.func @transform_2(%arg0: i32) -> (i32, i32) {
    %c0_i32 = arith.constant 0 : i32
    %c0_i32_0 = arith.constant 0 : i32
    %c0_i32_1 = arith.constant 0 : i32
    return %c0_i32, %c0_i32_0 : i32, i32
  }
  func.func @transform_3(%arg0: i32) -> (i32, i32) {
    %c0_i32 = arith.constant 0 : i32
    %c0_i32_0 = arith.constant 0 : i32
    %c0_i32_1 = arith.constant 0 : i32
    return %c0_i32, %c0_i32_0 : i32, i32
  }
  func.func @transform_4(%arg0: i32) -> (i32, i32) {
    %c0_i32 = arith.constant 0 : i32
    %c0_i32_0 = arith.constant 0 : i32
    return %arg0, %c0_i32 : i32, i32
  }
}

</mosaic_0001>

<llo_original>
// kernel: tile.14
$region0: #{tile.14}
  #allocation0 [shape = 's32[1]{0}', space=sflag, size = 0x4, scoped, tag = 'scoped memory for tile.14']
  %s0 = inlined_call_operand.vmem [shape: f32[4], index: 0, kind: input, shape index: {}]
  %s1 = inlined_call_operand.vmem [shape: f32[32,4], index: 1, kind: output, shape index: {}]
  // Predicated region
  $region2: #{tile.14} parent=0 // pred_check
    _
  $region3: #{tile.14} parent=0 // pred_check_branch
    %3 = sbr.rel (0) target = $region5
  $region4: #{tile.14} parent=0 // pred_region
    _
  $region5: #{tile.14} parent=0 // pred_fallthru
    _
  %v4 = vld [vmem:[%s0] ss:$0 sm:$0xff]
  %5 = vst [vmem:[%s1] sm:$0xff] %v4
  %s6 = scalar_lea.vmem %s1, 8
  %7 = vst [vmem:[%s6] sm:$0xff] %v4
  %s8 = scalar_lea.vmem %s1, 16
  %9 = vst [vmem:[%s8] sm:$0xff] %v4
  %s10 = scalar_lea.vmem %s1, 24
  %11 = vst [vmem:[%s10] sm:$0xff] %v4

// kernel: tile.15
$region0: #{tile.15}
  %s0 = inlined_call_operand.vmem [shape: f32[32,4], index: 0, kind: input, shape index: {}]
  %s1 = inlined_call_operand.vmem [shape: f32[1,128], index: 1, kind: output, shape index: {}]
  $region1: #{tile.15} parent=0
    #allocation0 [shape = 'u8[4096]{0}', space=vmem, size = 0x1000, scoped, tag = 'scoped mem for output reshape']
    %v2 = vld [vmem:[%s0] sm:$0x1]
    %vm3 = vcmask 31744
    %4 = vst.msk [vmem:[#allocation0] sm:$0x1] %vm3, %v2
    %s5 = scalar_lea.vmem %s0, 31
    %v6 = vld [vmem:[%s5] sm:$0x1]
    %7 = vrot.lane.b32.xlu0 %v6, 124
    %v8 = vpop.permute.xlu0 %7
    %vm9 = vcmask 1048544
    %10 = vst.msk [vmem:[#allocation0] sm:$0x1] %vm9, %v8
    %s11 = scalar_lea.vmem %s0, 30
    %v12 = vld [vmem:[%s11] sm:$0x1]
    %13 = vrot.lane.b32.xlu0 %v12, 120
    %v14 = vpop.permute.xlu0 %13
    %vm15 = vcmask 1015744
    %16 = vst.msk [vmem:[#allocation0] sm:$0x1] %vm15, %v14
    %s17 = scalar_lea.vmem %s0, 29
    %v18 = vld [vmem:[%s17] sm:$0x1]
    %19 = vrot.lane.b32.xlu0 %v18, 116
    %v20 = vpop.permute.xlu0 %19
    %vm21 = vcmask 982944
    %22 = vst.msk [vmem:[#allocation0] sm:$0x1] %vm21, %v20
    %s23 = scalar_lea.vmem %s0, 28
    %v24 = vld [vmem:[%s23] sm:$0x1]
    %25 = vrot.lane.b32.xlu0 %v24, 112
    %v26 = vpop.permute.xlu0 %25
    %vm27 = vcmask 950144
    %28 = vst.msk [vmem:[#allocation0] sm:$0x1] %vm27, %v26
    %s29 = scalar_lea.vmem %s0, 27
    %v30 = vld [vmem:[%s29] sm:$0x1]
    %31 = vrot.lane.b32.xlu0 %v30, 108
    %v32 = vpop.permute.xlu0 %31
    %vm33 = vcmask 917344
    %34 = vst.msk [vmem:[#allocation0] sm:$0x1] %vm33, %v32
    %s35 = scalar_lea.vmem %s0, 26
    %v36 = vld [vmem:[%s35] sm:$0x1]
    %37 = vrot.lane.b32.xlu0 %v36, 104
    %v38 = vpop.permute.xlu0 %37
    %vm39 = vcmask 884544
    %40 = vst.msk [vmem:[#allocation0] sm:$0x1] %vm39, %v38
    %s41 = scalar_lea.vmem %s0, 25
    %v42 = vld [vmem:[%s41] sm:$0x1]
    %43 = vrot.lane.b32.xlu0 %v42, 100
    %v44 = vpop.permute.xlu0 %43
    %vm45 = vcmask 851744
    %46 = vst.msk [vmem:[#allocation0] sm:$0x1] %vm45, %v44
    %s47 = scalar_lea.vmem %s0, 24
    %v48 = vld [vmem:[%s47] sm:$0x1]
    %49 = vrot.lane.b32.xlu0 %v48, 96
    %v50 = vpop.permute.xlu0 %49
    %vm51 = vcmask 818944
    %52 = vst.msk [vmem:[#allocation0] sm:$0x1] %vm51, %v50
    %s53 = scalar_lea.vmem %s0, 23
    %v54 = vld [vmem:[%s53] sm:$0x1]
    %55 = vrot.lane.b32.xlu0 %v54, 92
    %v56 = vpop.permute.xlu0 %55
    %vm57 = vcmask 786144
    %58 = vst.msk [vmem:[#allocation0] sm:$0x1] %vm57, %v56
    %s59 = scalar_lea.vmem %s0, 22
    %v60 = vld [vmem:[%s59] sm:$0x1]
    %61 = vrot.lane.b32.xlu0 %v60, 88
    %v62 = vpop.permute.xlu0 %61
    %vm63 = vcmask 753344
    %64 = vst.msk [vmem:[#allocation0] sm:$0x1] %vm63, %v62
    %s65 = scalar_lea.vmem %s0, 21
    %v66 = vld [vmem:[%s65] sm:$0x1]
    %67 = vrot.lane.b32.xlu0 %v66, 84
    %v68 = vpop.permute.xlu0 %67
    %vm69 = vcmask 720544
    %70 = vst.msk [vmem:[#allocation0] sm:$0x1] %vm69, %v68
    %s71 = scalar_lea.vmem %s0, 20
    %v72 = vld [vmem:[%s71] sm:$0x1]
    %73 = vrot.lane.b32.xlu0 %v72, 80
    %v74 = vpop.permute.xlu0 %73
    %vm75 = vcmask 687744
    %76 = vst.msk [vmem:[#allocation0] sm:$0x1] %vm75, %v74
    %s77 = scalar_lea.vmem %s0, 19
    %v78 = vld [vmem:[%s77] sm:$0x1]
    %79 = vrot.lane.b32.xlu0 %v78, 76
    %v80 = vpop.permute.xlu0 %79
    %vm81 = vcmask 654944
    %82 = vst.msk [vmem:[#allocation0] sm:$0x1] %vm81, %v80
    %s83 = scalar_lea.vmem %s0, 18
    %v84 = vld [vmem:[%s83] sm:$0x1]
    %85 = vrot.lane.b32.xlu0 %v84, 72
    %v86 = vpop.permute.xlu0 %85
    %vm87 = vcmask 622144
    %88 = vst.msk [vmem:[#allocation0] sm:$0x1] %vm87, %v86
    %s89 = scalar_lea.vmem %s0, 17
    %v90 = vld [vmem:[%s89] sm:$0x1]
    %91 = vrot.lane.b32.xlu0 %v90, 68
    %v92 = vpop.permute.xlu0 %91
    %vm93 = vcmask 589344
    %94 = vst.msk [vmem:[#allocation0] sm:$0x1] %vm93, %v92
    %s95 = scalar_lea.vmem %s0, 16
    %v96 = vld [vmem:[%s95] sm:$0x1]
    %97 = vrot.lane.b32.xlu0 %v96, 64
    %v98 = vpop.permute.xlu0 %97
    %vm99 = vcmask 556544
    %100 = vst.msk [vmem:[#allocation0] sm:$0x1] %vm99, %v98
    %s101 = scalar_lea.vmem %s0, 15
    %v102 = vld [vmem:[%s101] sm:$0x1]
    %103 = vrot.lane.b32.xlu0 %v102, 60
    %v104 = vpop.permute.xlu0 %103
    %vm105 = vcmask 523744
    %106 = vst.msk [vmem:[#allocation0] sm:$0x1] %vm105, %v104
    %s107 = scalar_lea.vmem %s0, 14
    %v108 = vld [vmem:[%s107] sm:$0x1]
    %109 = vrot.lane.b32.xlu0 %v108, 56
    %v110 = vpop.permute.xlu0 %109
    %vm111 = vcmask 490944
    %112 = vst.msk [vmem:[#allocation0] sm:$0x1] %vm111, %v110
    %s113 = scalar_lea.vmem %s0, 13
    %v114 = vld [vmem:[%s113] sm:$0x1]
    %115 = vrot.lane.b32.xlu0 %v114, 52
    %v116 = vpop.permute.xlu0 %115
    %vm117 = vcmask 458144
    %118 = vst.msk [vmem:[#allocation0] sm:$0x1] %vm117, %v116
    %s119 = scalar_lea.vmem %s0, 12
    %v120 = vld [vmem:[%s119] sm:$0x1]
    %121 = vrot.lane.b32.xlu0 %v120, 48
    %v122 = vpop.permute.xlu0 %121
    %vm123 = vcmask 425344
    %124 = vst.msk [vmem:[#allocation0] sm:$0x1] %vm123, %v122
    %s125 = scalar_lea.vmem %s0, 11
    %v126 = vld [vmem:[%s125] sm:$0x1]
    %127 = vrot.lane.b32.xlu0 %v126, 44
    %v128 = vpop.permute.xlu0 %127
    %vm129 = vcmask 392544
    %130 = vst.msk [vmem:[#allocation0] sm:$0x1] %vm129, %v128
    %s131 = scalar_lea.vmem %s0, 10
    %v132 = vld [vmem:[%s131] sm:$0x1]
    %133 = vrot.lane.b32.xlu0 %v132, 40
    %v134 = vpop.permute.xlu0 %133
    %vm135 = vcmask 359744
    %136 = vst.msk [vmem:[#allocation0] sm:$0x1] %vm135, %v134
    %s137 = scalar_lea.vmem %s0, 9
    %v138 = vld [vmem:[%s137] sm:$0x1]
    %139 = vrot.lane.b32.xlu0 %v138, 36
    %v140 = vpop.permute.xlu0 %139
    %vm141 = vcmask 326944
    %142 = vst.msk [vmem:[#allocation0] sm:$0x1] %vm141, %v140
    %s143 = scalar_lea.vmem %s0, 8
    %v144 = vld [vmem:[%s143] sm:$0x1]
    %145 = vrot.lane.b32.xlu0 %v144, 32
    %v146 = vpop.permute.xlu0 %145
    %vm147 = vcmask 294144
    %148 = vst.msk [vmem:[#allocation0] sm:$0x1] %vm147, %v146
    %s149 = scalar_lea.vmem %s0, 7
    %v150 = vld [vmem:[%s149] sm:$0x1]
    %151 = vrot.lane.b32.xlu0 %v150, 28
    %v152 = vpop.permute.xlu0 %151
    %vm153 = vcmask 261344
    %154 = vst.msk [vmem:[#allocation0] sm:$0x1] %vm153, %v152
    %s155 = scalar_lea.vmem %s0, 6
    %v156 = vld [vmem:[%s155] sm:$0x1]
    %157 = vrot.lane.b32.xlu0 %v156, 24
    %v158 = vpop.permute.xlu0 %157
    %vm159 = vcmask 228544
    %160 = vst.msk [vmem:[#allocation0] sm:$0x1] %vm159, %v158
    %s161 = scalar_lea.vmem %s0, 5
    %v162 = vld [vmem:[%s161] sm:$0x1]
    %163 = vrot.lane.b32.xlu0 %v162, 20
    %v164 = vpop.permute.xlu0 %163
    %vm165 = vcmask 195744
    %166 = vst.msk [vmem:[#allocation0] sm:$0x1] %vm165, %v164
    %s167 = scalar_lea.vmem %s0, 4
    %v168 = vld [vmem:[%s167] sm:$0x1]
    %169 = vrot.lane.b32.xlu0 %v168, 16
    %v170 = vpop.permute.xlu0 %169
    %vm171 = vcmask 162944
    %172 = vst.msk [vmem:[#allocation0] sm:$0x1] %vm171, %v170
    %s173 = scalar_lea.vmem %s0, 3
    %v174 = vld [vmem:[%s173] sm:$0x1]
    %175 = vrot.lane.b32.xlu0 %v174, 12
    %v176 = vpop.permute.xlu0 %175
    %vm177 = vcmask 130144
    %178 = vst.msk [vmem:[#allocation0] sm:$0x1] %vm177, %v176
    %s179 = scalar_lea.vmem %s0, 2
    %v180 = vld [vmem:[%s179] sm:$0x1]
    %181 = vrot.lane.b32.xlu0 %v180, 8
    %v182 = vpop.permute.xlu0 %181
    %vm183 = vcmask 97344
    %184 = vst.msk [vmem:[#allocation0] sm:$0x1] %vm183, %v182
    %s185 = scalar_lea.vmem %s0, 1
    %v186 = vld [vmem:[%s185] sm:$0x1]
    %187 = vrot.lane.b32.xlu0 %v186, 4
    %v188 = vpop.permute.xlu0 %187
    %vm189 = vcmask 64544
    %190 = vst.msk [vmem:[#allocation0] sm:$0x1] %vm189, %v188
    %s192 = ssub.s32 2, 1
    %v193 = vld [vmem:[#allocation0] sm:%s192]
    %s195 = ssub.s32 2, 1
    %196 = vst [vmem:[%s1] sm:%s195] %v193

// kernel: _lambda_.5
$region0: #{_lambda_.5}
  #allocation0 [shape = 'u32[]', space=smem, size = 0x4, offset = 0x4, fixed_abs, tag = 'smem constant byte address 0x4 - core index']
  #allocation1 [shape = 'u32[72,128]{1,0:T(1,128)}', space=vmem, size = 0x9000, scoped, tag = 'internal scratch']
  %s0 = inlined_call_operand.vmem [shape: f32[16,128], index: 0, kind: input, shape index: {}]
  %s1 = inlined_call_operand.vmem [shape: f32[16,128], index: 1, kind: input, shape index: {}]
  %s2 = inlined_call_operand.vmem [shape: f32[1,128], index: 2, kind: input, shape index: {}]
  %s3 = inlined_call_operand.vmem [shape: f32[1,128], index: 3, kind: input, shape index: {}]
  %s4 = inlined_call_operand.vmem [shape: f32[16,128], index: 4, kind: output, shape index: {}]
  %s5 = sld [smem:[#allocation0]]
  $region49: #{_lambda_.5} parent=0
    _
  %s7 = ssub.s32 1, %s5
  %s8 = scalar_select 0, %s7, %s5
  loop: start=0, step=1, limit=4
  $region2: #{_lambda_.5} parent=0 // loop_pre_header
    _
  $region3: #{_lambda_.5} parent=0 // loop_header
    %s10 = sphi 0, %s14
    %p11 = scmp.ge.s32.totalorder %s10, 4
    %s20 = sphi 0, %s22
    %s23 = sphi 0, %s20
    %s24 = sphi 0, %s23
    %s40 = sphi 0, %s24
    %s46 = sphi 0, %s48
    %s49 = sphi 0, %s46
    %s50 = sphi 0, %s49
    %s66 = sphi 0, %s50
    %s70 = sphi 0, %s70
    %s72 = sphi 0, %s70
    %s73 = sphi 0, %s72
    %s87 = sphi 0, %s73
    %s91 = sphi 0, %s91
    %s93 = sphi 0, %s91
    %s94 = sphi 0, %s93
    %s108 = sphi 0, %s94
    %s114 = sphi 0, %s116
    %s117 = sphi 0, %s114
    %s118 = sphi 0, %s117
    %s134 = sphi 0, %s118
  $region4: #{_lambda_.5} parent=0 // loop_header_branch
    %13 = sbr.rel (%p11) target = $region8
  $region5: #{_lambda_.5} parent=0 // loop_body
    %s15 = ssub.s32 %s10, 1
    %s16 = ssub.s32 %s10, 2
    %s17 = sadd.s32 %s10, 1
    %s18 = ssub.s32 %s10, %s17
    %p19 = scmp.eq.s32.totalorder %s18, 0
    %s21 = sadd.s32 %s20, 1
    %s22 = scalar_select %p19, %s20, %s21
    %p25 = pneg %p19
    %p26 = scmp.eq.s32.totalorder %s10, 1
    %p27 = por %p25, %p26
    %p28 = scmp.ne.s32.totalorder %s20, %s23
    %p29 = scmp.eq.s32.totalorder %s10, 0
    %p30 = por %p28, %p29
    %p31 = scmp.ne.s32.totalorder %s20, %s23
    %p32 = scmp.eq.s32.totalorder %s15, 1
    %p33 = por %p31, %p32
    %p34 = scmp.ne.s32.totalorder %s23, %s24
    %p35 = scmp.eq.s32.totalorder %s15, 0
    %p36 = por %p34, %p35
    %p37 = scmp.ne.s32.totalorder %s23, %s24
    %p38 = scmp.eq.s32.totalorder %s16, 1
    %p39 = por %p37, %p38
    %p41 = scmp.ne.s32.totalorder %s24, %s40
    %p42 = scmp.eq.s32.totalorder %s16, 0
    %p43 = por %p41, %p42
    %s44 = ssub.s32 %s10, %s17
    %p45 = scmp.eq.s32.totalorder %s44, 0
    %s47 = sadd.s32 %s46, 1
    %s48 = scalar_select %p45, %s46, %s47
    %p51 = pneg %p45
    %p52 = scmp.eq.s32.totalorder %s10, 1
    %p53 = por %p51, %p52
    %p54 = scmp.ne.s32.totalorder %s46, %s49
    %p55 = scmp.eq.s32.totalorder %s10, 0
    %p56 = por %p54, %p55
    %p57 = scmp.ne.s32.totalorder %s46, %s49
    %p58 = scmp.eq.s32.totalorder %s15, 1
    %p59 = por %p57, %p58
    %p60 = scmp.ne.s32.totalorder %s49, %s50
    %p61 = scmp.eq.s32.totalorder %s15, 0
    %p62 = por %p60, %p61
    %p63 = scmp.ne.s32.totalorder %s49, %s50
    %p64 = scmp.eq.s32.totalorder %s16, 1
    %p65 = por %p63, %p64
    %p67 = scmp.ne.s32.totalorder %s50, %s66
    %p68 = scmp.eq.s32.totalorder %s16, 0
    %p69 = por %p67, %p68
    %s71 = sadd.s32 %s70, 1
    %p74 = scmp.eq.s32.totalorder %s10, 1
    %p75 = scmp.ne.s32.totalorder %s70, %s72
    %p76 = scmp.eq.s32.totalorder %s10, 0
    %p77 = por %p75, %p76
    %p78 = scmp.ne.s32.totalorder %s70, %s72
    %p79 = scmp.eq.s32.totalorder %s15, 1
    %p80 = por %p78, %p79
    %p81 = scmp.ne.s32.totalorder %s72, %s73
    %p82 = scmp.eq.s32.totalorder %s15, 0
    %p83 = por %p81, %p82
    %p84 = scmp.ne.s32.totalorder %s72, %s73
    %p85 = scmp.eq.s32.totalorder %s16, 1
    %p86 = por %p84, %p85
    %p88 = scmp.ne.s32.totalorder %s73, %s87
    %p89 = scmp.eq.s32.totalorder %s16, 0
    %p90 = por %p88, %p89
    %s92 = sadd.s32 %s91, 1
    %p95 = scmp.eq.s32.totalorder %s10, 1
    %p96 = scmp.ne.s32.totalorder %s91, %s93
    %p97 = scmp.eq.s32.totalorder %s10, 0
    %p98 = por %p96, %p97
    %p99 = scmp.ne.s32.totalorder %s91, %s93
    %p100 = scmp.eq.s32.totalorder %s15, 1
    %p101 = por %p99, %p100
    %p102 = scmp.ne.s32.totalorder %s93, %s94
    %p103 = scmp.eq.s32.totalorder %s15, 0
    %p104 = por %p102, %p103
    %p105 = scmp.ne.s32.totalorder %s93, %s94
    %p106 = scmp.eq.s32.totalorder %s16, 1
    %p107 = por %p105, %p106
    %p109 = scmp.ne.s32.totalorder %s94, %s108
    %p110 = scmp.eq.s32.totalorder %s16, 0
    %p111 = por %p109, %p110
    %s112 = ssub.s32 %s10, %s17
    %p113 = scmp.eq.s32.totalorder %s112, 0
    %s115 = sadd.s32 %s114, 1
    %s116 = scalar_select %p113, %s114, %s115
    %p119 = pneg %p113
    %p120 = scmp.eq.s32.totalorder %s10, 1
    %p121 = por %p119, %p120
    %p122 = scmp.ne.s32.totalorder %s114, %s117
    %p123 = scmp.eq.s32.totalorder %s10, 0
    %p124 = por %p122, %p123
    %p125 = scmp.ne.s32.totalorder %s114, %s117
    %p126 = scmp.eq.s32.totalorder %s15, 1
    %p127 = por %p125, %p126
    %p128 = scmp.ne.s32.totalorder %s117, %s118
    %p129 = scmp.eq.s32.totalorder %s15, 0
    %p130 = por %p128, %p129
    %p131 = scmp.ne.s32.totalorder %s117, %s118
    %p132 = scmp.eq.s32.totalorder %s16, 1
    %p133 = por %p131, %p132
    %p135 = scmp.ne.s32.totalorder %s118, %s134
    %p136 = scmp.eq.s32.totalorder %s16, 0
    %p137 = por %p135, %p136
    %p138 = scmp.le.s32.totalorder 1, %s10
    %p139 = scmp.lt.s32.totalorder %s10, 3
    %p140 = pnand %p138, %p139
    %p141 = pneg %p140
    // Predicated region
    $region9: #{_lambda_.5} parent=5 // pred_check
      _
    $region10: #{_lambda_.5} parent=5 // pred_check_branch
      %143 = sbr.rel (%p140) target = $region12
    $region11: #{_lambda_.5} parent=5 // pred_region
      %s144 = ssub.s32 %s10, 1
      // Predicated region
      $region13: #{_lambda_.5} parent=11 // pred_check
        %p145 = pneg %p83
      $region14: #{_lambda_.5} parent=11 // pred_check_branch
        %147 = sbr.rel (%p145) target = $region16
      $region15: #{_lambda_.5} parent=11 // pred_region
        _
      $region16: #{_lambda_.5} parent=11 // pred_fallthru
        _
      // Predicated region
      $region17: #{_lambda_.5} parent=11 // pred_check
        %p148 = pneg %p104
      $region18: #{_lambda_.5} parent=11 // pred_check_branch
        %150 = sbr.rel (%p148) target = $region20
      $region19: #{_lambda_.5} parent=11 // pred_region
        _
      $region20: #{_lambda_.5} parent=11 // pred_fallthru
        _
    $region12: #{_lambda_.5} parent=5 // pred_fallthru
      _
    %p151 = scmp.lt.s32.totalorder %s10, 2
    // Predicated region
    $region21: #{_lambda_.5} parent=5 // pred_check
      %p152 = pneg %p151
    $region22: #{_lambda_.5} parent=5 // pred_check_branch
      %154 = sbr.rel (%p152) target = $region24
    $region23: #{_lambda_.5} parent=5 // pred_region
      // Predicated region
      $region25: #{_lambda_.5} parent=23 // pred_check
        %p155 = pneg %p30
      $region26: #{_lambda_.5} parent=23 // pred_check_branch
        %157 = sbr.rel (%p155) target = $region28
      $region27: #{_lambda_.5} parent=23 // pred_region
        %p158 = scmp.lt.s32.totalorder %s10, 1
        %s159 = scalar_select %p158, %s10, 1
        %s160 = smul.addr %s159, 8
        %s161 = scalar_lea.vmem %s0, %s160
      $region28: #{_lambda_.5} parent=23 // pred_fallthru
        _
      // Predicated region
      $region29: #{_lambda_.5} parent=23 // pred_check
        %p162 = pneg %p56
      $region30: #{_lambda_.5} parent=23 // pred_check_branch
        %164 = sbr.rel (%p162) target = $region32
      $region31: #{_lambda_.5} parent=23 // pred_region
        %p165 = scmp.lt.s32.totalorder %s10, 1
        %s166 = scalar_select %p165, %s10, 1
        %s167 = smul.addr %s166, 8
        %s168 = scalar_lea.vmem %s1, %s167
      $region32: #{_lambda_.5} parent=23 // pred_fallthru
        _
    $region24: #{_lambda_.5} parent=5 // pred_fallthru
      _
    %p169 = scmp.le.s32.totalorder 1, %s10
    %p170 = scmp.lt.s32.totalorder %s10, 3
    %p171 = pnand %p169, %p170
    %p172 = pneg %p171
    // Predicated region
    $region33: #{_lambda_.5} parent=5 // pred_check
      _
    $region34: #{_lambda_.5} parent=5 // pred_check_branch
      %174 = sbr.rel (%p171) target = $region36
    $region35: #{_lambda_.5} parent=5 // pred_region
      %s175 = ssub.s32 %s10, 1
      %p176 = scmp.lt.s32.totalorder %s15, 1
      %s177 = scalar_select %p176, %s15, 1
      %s178 = smul.addr %s177, 8
      %s179 = scalar_lea.vmem %s0, %s178
      %p180 = pneg %p36
      %p181 = pneg %p33
      %p182 = scmp.lt.s32.totalorder %s15, 1
      %s183 = scalar_select %p182, %s15, 1
      %s184 = smul.addr %s183, 8
      %s185 = scalar_lea.vmem %s1, %s184
      %p186 = pneg %p62
      %p187 = pneg %p59
      %p188 = pneg %p83
      %p189 = pneg %p80
      %p190 = pneg %p104
      %p191 = pneg %p101
      %p192 = pneg %p130
      %p193 = pneg %p127
      %p194 = scmp.lt.s32.totalorder %s15, 1
      %s195 = scalar_select %p194, %s15, 1
      %s196 = smul.addr %s195, 8
      %s197 = scalar_lea.vmem %s4, %s196
      %p198 = scmp.lt.s32.totalorder %s15, 1
      %s199 = scalar_select %p198, %s15, 1
      %s200 = smul.addr %s199, 8
      %s201 = scalar_lea.vmem %s0, %s200
      %p202 = scmp.lt.s32.totalorder %s15, 1
      %s203 = scalar_select %p202, %s15, 1
      %s204 = smul.addr %s203, 8
      %s205 = scalar_lea.vmem %s1, %s204
      %p206 = scmp.lt.s32.totalorder %s15, 1
      %s207 = scalar_select %p206, %s15, 1
      %s208 = smul.addr %s207, 8
      %s209 = scalar_lea.vmem %s4, %s208
      %v210 = vld [vmem:[%s201] sm:$0xff]
      %v211 = vld [vmem:[%s2] sm:$0x1]
      %v213 = vperm.slane %v211, 0
      %v215 = vmul.f32 %v210, %v213
      %v216 = vld [vmem:[%s3] sm:$0x1]
      %v218 = vperm.slane %v216, 0
      %v220 = vadd.f32 %v215, %v218
      %vm221 = vcmp.gt.f32.partialorder %v220, 0.0
      %v222 = vmul.f32 %v220, 0.1
      %v223 = vsel %vm221, %v220, %v222
      %v224 = vld [vmem:[%s205] sm:$0xff]
      %v225 = vadd.f32 %v223, %v224
      %226 = vst [vmem:[%s209] sm:$0xff] %v225
      %p227 = scmp.lt.s32.totalorder %s15, 1
      %s228 = scalar_select %p227, %s15, 1
      %s229 = smul.addr %s228, 8
      %s230 = scalar_lea.vmem %s4, %s229
      // Predicated region
      $region37: #{_lambda_.5} parent=35 // pred_check
        %p231 = pneg %p127
      $region38: #{_lambda_.5} parent=35 // pred_check_branch
        %233 = sbr.rel (%p231) target = $region40
      $region39: #{_lambda_.5} parent=35 // pred_region
        _
      $region40: #{_lambda_.5} parent=35 // pred_fallthru
        _
    $region36: #{_lambda_.5} parent=5 // pred_fallthru
      _
    %p234 = scmp.le.s32.totalorder 2, %s10
    // Predicated region
    $region41: #{_lambda_.5} parent=5 // pred_check
      %p235 = pneg %p234
    $region42: #{_lambda_.5} parent=5 // pred_check_branch
      %237 = sbr.rel (%p235) target = $region44
    $region43: #{_lambda_.5} parent=5 // pred_region
      %s238 = ssub.s32 %s10, 2
      // Predicated region
      $region45: #{_lambda_.5} parent=43 // pred_check
        %p239 = pneg %p133
      $region46: #{_lambda_.5} parent=43 // pred_check_branch
        %241 = sbr.rel (%p239) target = $region48
      $region47: #{_lambda_.5} parent=43 // pred_region
        %p242 = scmp.lt.s32.totalorder %s16, 1
        %s243 = scalar_select %p242, %s16, 1
        %s244 = smul.addr %s243, 8
        %s245 = scalar_lea.vmem %s4, %s244
      $region48: #{_lambda_.5} parent=43 // pred_fallthru
        _
    $region44: #{_lambda_.5} parent=5 // pred_fallthru
      _
  $region6: #{_lambda_.5} parent=0 // loop_footer
    %s14 = sadd.s32 1, %s10
  $region7: #{_lambda_.5} parent=0 // loop_footer_branch
    %9 = sbr.rel target = $region3
  $region8: #{_lambda_.5} parent=0 // loop_exit
    _

// kernel: _lambda_.3
$region0: #{_lambda_.3}
  #allocation0 [shape = 'u32[]', space=smem, size = 0x4, offset = 0x4, fixed_abs, tag = 'smem constant byte address 0x4 - core index']
  #allocation1 [shape = 'u32[72,128]{1,0:T(1,128)}', space=vmem, size = 0x9000, scoped, tag = 'internal scratch']
  #allocation2 [shape = 'f32[18,18,4]{2,1,0:T(8,128)}', space=vmem, size = 0x36000, scoped, tag = 'scratch operand']
  #allocation3 [shape = 'f32[256,36]{1,0:T(8,128)}', space=vmem, size = 0x20000, scoped, tag = 'scratch operand']
  %s0 = inlined_call_operand.vmem [shape: f32[2,16,16,4], index: 0, kind: input, shape index: {}]
  %s1 = inlined_call_operand.vmem [shape: f32[1,4], index: 1, kind: input, shape index: {}]
  %s2 = inlined_call_operand.vmem [shape: f32[1,4], index: 2, kind: input, shape index: {}]
  %s3 = inlined_call_operand.vmem [shape: f32[36,4], index: 3, kind: input, shape index: {}]
  %s4 = inlined_call_operand.vmem [shape: f32[1,4], index: 4, kind: input, shape index: {}]
  %s5 = inlined_call_operand.vmem [shape: f32[2,16,16,4], index: 5, kind: output, shape index: {0}]
  %s6 = inlined_call_operand.vmem [shape: f32[2,2,4], index: 6, kind: output, shape index: {1}]
  %7 = xla_tuple %s5, %s6
  %s8 = sld [smem:[#allocation0]]
  $region61: #{_lambda_.3} parent=0
    _
  %s10 = ssub.s32 1, %s8
  %s11 = scalar_select 0, %s10, %s8
  loop: start=0, step=1, limit=4
  $region2: #{_lambda_.3} parent=0 // loop_pre_header
    _
  $region3: #{_lambda_.3} parent=0 // loop_header
    %s13 = sphi 0, %s17
    %p14 = scmp.ge.s32.totalorder %s13, 4
    %s23 = sphi 0, %s25
    %s26 = sphi 0, %s23
    %s27 = sphi 0, %s26
    %s43 = sphi 0, %s27
    %s47 = sphi 0, %s47
    %s49 = sphi 0, %s47
    %s50 = sphi 0, %s49
    %s64 = sphi 0, %s50
    %s68 = sphi 0, %s68
    %s70 = sphi 0, %s68
    %s71 = sphi 0, %s70
    %s85 = sphi 0, %s71
    %s89 = sphi 0, %s89
    %s91 = sphi 0, %s89
    %s92 = sphi 0, %s91
    %s106 = sphi 0, %s92
    %s110 = sphi 0, %s110
    %s112 = sphi 0, %s110
    %s113 = sphi 0, %s112
    %s127 = sphi 0, %s113
    %s133 = sphi 0, %s135
    %s136 = sphi 0, %s133
    %s137 = sphi 0, %s136
    %s153 = sphi 0, %s137
    %s159 = sphi 0, %s161
    %s162 = sphi 0, %s159
    %s163 = sphi 0, %s162
    %s179 = sphi 0, %s163
  $region4: #{_lambda_.3} parent=0 // loop_header_branch
    %16 = sbr.rel (%p14) target = $region8
  $region5: #{_lambda_.3} parent=0 // loop_body
    %s18 = ssub.s32 %s13, 1
    %s19 = ssub.s32 %s13, 2
    %s20 = sadd.s32 %s13, 1
    %s21 = ssub.s32 %s13, %s20
    %p22 = scmp.eq.s32.totalorder %s21, 0
    %s24 = sadd.s32 %s23, 1
    %s25 = scalar_select %p22, %s23, %s24
    %p28 = pneg %p22
    %p29 = scmp.eq.s32.totalorder %s13, 1
    %p30 = por %p28, %p29
    %p31 = scmp.ne.s32.totalorder %s23, %s26
    %p32 = scmp.eq.s32.totalorder %s13, 0
    %p33 = por %p31, %p32
    %p34 = scmp.ne.s32.totalorder %s23, %s26
    %p35 = scmp.eq.s32.totalorder %s18, 1
    %p36 = por %p34, %p35
    %p37 = scmp.ne.s32.totalorder %s26, %s27
    %p38 = scmp.eq.s32.totalorder %s18, 0
    %p39 = por %p37, %p38
    %p40 = scmp.ne.s32.totalorder %s26, %s27
    %p41 = scmp.eq.s32.totalorder %s19, 1
    %p42 = por %p40, %p41
    %p44 = scmp.ne.s32.totalorder %s27, %s43
    %p45 = scmp.eq.s32.totalorder %s19, 0
    %p46 = por %p44, %p45
    %s48 = sadd.s32 %s47, 1
    %p51 = scmp.eq.s32.totalorder %s13, 1
    %p52 = scmp.ne.s32.totalorder %s47, %s49
    %p53 = scmp.eq.s32.totalorder %s13, 0
    %p54 = por %p52, %p53
    %p55 = scmp.ne.s32.totalorder %s47, %s49
    %p56 = scmp.eq.s32.totalorder %s18, 1
    %p57 = por %p55, %p56
    %p58 = scmp.ne.s32.totalorder %s49, %s50
    %p59 = scmp.eq.s32.totalorder %s18, 0
    %p60 = por %p58, %p59
    %p61 = scmp.ne.s32.totalorder %s49, %s50
    %p62 = scmp.eq.s32.totalorder %s19, 1
    %p63 = por %p61, %p62
    %p65 = scmp.ne.s32.totalorder %s50, %s64
    %p66 = scmp.eq.s32.totalorder %s19, 0
    %p67 = por %p65, %p66
    %s69 = sadd.s32 %s68, 1
    %p72 = scmp.eq.s32.totalorder %s13, 1
    %p73 = scmp.ne.s32.totalorder %s68, %s70
    %p74 = scmp.eq.s32.totalorder %s13, 0
    %p75 = por %p73, %p74
    %p76 = scmp.ne.s32.totalorder %s68, %s70
    %p77 = scmp.eq.s32.totalorder %s18, 1
    %p78 = por %p76, %p77
    %p79 = scmp.ne.s32.totalorder %s70, %s71
    %p80 = scmp.eq.s32.totalorder %s18, 0
    %p81 = por %p79, %p80
    %p82 = scmp.ne.s32.totalorder %s70, %s71
    %p83 = scmp.eq.s32.totalorder %s19, 1
    %p84 = por %p82, %p83
    %p86 = scmp.ne.s32.totalorder %s71, %s85
    %p87 = scmp.eq.s32.totalorder %s19, 0
    %p88 = por %p86, %p87
    %s90 = sadd.s32 %s89, 1
    %p93 = scmp.eq.s32.totalorder %s13, 1
    %p94 = scmp.ne.s32.totalorder %s89, %s91
    %p95 = scmp.eq.s32.totalorder %s13, 0
    %p96 = por %p94, %p95
    %p97 = scmp.ne.s32.totalorder %s89, %s91
    %p98 = scmp.eq.s32.totalorder %s18, 1
    %p99 = por %p97, %p98
    %p100 = scmp.ne.s32.totalorder %s91, %s92
    %p101 = scmp.eq.s32.totalorder %s18, 0
    %p102 = por %p100, %p101
    %p103 = scmp.ne.s32.totalorder %s91, %s92
    %p104 = scmp.eq.s32.totalorder %s19, 1
    %p105 = por %p103, %p104
    %p107 = scmp.ne.s32.totalorder %s92, %s106
    %p108 = scmp.eq.s32.totalorder %s19, 0
    %p109 = por %p107, %p108
    %s111 = sadd.s32 %s110, 1
    %p114 = scmp.eq.s32.totalorder %s13, 1
    %p115 = scmp.ne.s32.totalorder %s110, %s112
    %p116 = scmp.eq.s32.totalorder %s13, 0
    %p117 = por %p115, %p116
    %p118 = scmp.ne.s32.totalorder %s110, %s112
    %p119 = scmp.eq.s32.totalorder %s18, 1
    %p120 = por %p118, %p119
    %p121 = scmp.ne.s32.totalorder %s112, %s113
    %p122 = scmp.eq.s32.totalorder %s18, 0
    %p123 = por %p121, %p122
    %p124 = scmp.ne.s32.totalorder %s112, %s113
    %p125 = scmp.eq.s32.totalorder %s19, 1
    %p126 = por %p124, %p125
    %p128 = scmp.ne.s32.totalorder %s113, %s127
    %p129 = scmp.eq.s32.totalorder %s19, 0
    %p130 = por %p128, %p129
    %s131 = ssub.s32 %s13, %s20
    %p132 = scmp.eq.s32.totalorder %s131, 0
    %s134 = sadd.s32 %s133, 1
    %s135 = scalar_select %p132, %s133, %s134
    %p138 = pneg %p132
    %p139 = scmp.eq.s32.totalorder %s13, 1
    %p140 = por %p138, %p139
    %p141 = scmp.ne.s32.totalorder %s133, %s136
    %p142 = scmp.eq.s32.totalorder %s13, 0
    %p143 = por %p141, %p142
    %p144 = scmp.ne.s32.totalorder %s133, %s136
    %p145 = scmp.eq.s32.totalorder %s18, 1
    %p146 = por %p144, %p145
    %p147 = scmp.ne.s32.totalorder %s136, %s137
    %p148 = scmp.eq.s32.totalorder %s18, 0
    %p149 = por %p147, %p148
    %p150 = scmp.ne.s32.totalorder %s136, %s137
    %p151 = scmp.eq.s32.totalorder %s19, 1
    %p152 = por %p150, %p151
    %p154 = scmp.ne.s32.totalorder %s137, %s153
    %p155 = scmp.eq.s32.totalorder %s19, 0
    %p156 = por %p154, %p155
    %s157 = ssub.s32 %s13, %s20
    %p158 = scmp.eq.s32.totalorder %s157, 0
    %s160 = sadd.s32 %s159, 1
    %s161 = scalar_select %p158, %s159, %s160
    %p164 = pneg %p158
    %p165 = scmp.eq.s32.totalorder %s13, 1
    %p166 = por %p164, %p165
    %p167 = scmp.ne.s32.totalorder %s159, %s162
    %p168 = scmp.eq.s32.totalorder %s13, 0
    %p169 = por %p167, %p168
    %p170 = scmp.ne.s32.totalorder %s159, %s162
    %p171 = scmp.eq.s32.totalorder %s18, 1
    %p172 = por %p170, %p171
    %p173 = scmp.ne.s32.totalorder %s162, %s163
    %p174 = scmp.eq.s32.totalorder %s18, 0
    %p175 = por %p173, %p174
    %p176 = scmp.ne.s32.totalorder %s162, %s163
    %p177 = scmp.eq.s32.totalorder %s19, 1
    %p178 = por %p176, %p177
    %p180 = scmp.ne.s32.totalorder %s163, %s179
    %p181 = scmp.eq.s32.totalorder %s19, 0
    %p182 = por %p180, %p181
    %p183 = scmp.le.s32.totalorder 1, %s13
    %p184 = scmp.lt.s32.totalorder %s13, 3
    %p185 = pnand %p183, %p184
    %p186 = pneg %p185
    // Predicated region
    $region9: #{_lambda_.3} parent=5 // pred_check
      _
    $region10: #{_lambda_.3} parent=5 // pred_check_branch
      %188 = sbr.rel (%p185) target = $region12
    $region11: #{_lambda_.3} parent=5 // pred_region
      %s189 = ssub.s32 %s13, 1
      // Predicated region
      $region13: #{_lambda_.3} parent=11 // pred_check
        %p190 = pneg %p60
      $region14: #{_lambda_.3} parent=11 // pred_check_branch
        %192 = sbr.rel (%p190) target = $region16
      $region15: #{_lambda_.3} parent=11 // pred_region
        _
      $region16: #{_lambda_.3} parent=11 // pred_fallthru
        _
      // Predicated region
      $region17: #{_lambda_.3} parent=11 // pred_check
        %p193 = pneg %p81
      $region18: #{_lambda_.3} parent=11 // pred_check_branch
        %195 = sbr.rel (%p193) target = $region20
      $region19: #{_lambda_.3} parent=11 // pred_region
        _
      $region20: #{_lambda_.3} parent=11 // pred_fallthru
        _
      // Predicated region
      $region21: #{_lambda_.3} parent=11 // pred_check
        %p196 = pneg %p102
      $region22: #{_lambda_.3} parent=11 // pred_check_branch
        %198 = sbr.rel (%p196) target = $region24
      $region23: #{_lambda_.3} parent=11 // pred_region
        _
      $region24: #{_lambda_.3} parent=11 // pred_fallthru
        _
      // Predicated region
      $region25: #{_lambda_.3} parent=11 // pred_check
        %p199 = pneg %p123
      $region26: #{_lambda_.3} parent=11 // pred_check_branch
        %201 = sbr.rel (%p199) target = $region28
      $region27: #{_lambda_.3} parent=11 // pred_region
        _
      $region28: #{_lambda_.3} parent=11 // pred_fallthru
        _
    $region12: #{_lambda_.3} parent=5 // pred_fallthru
      _
    %p202 = scmp.lt.s32.totalorder %s13, 2
    // Predicated region
    $region29: #{_lambda_.3} parent=5 // pred_check
      %p203 = pneg %p202
    $region30: #{_lambda_.3} parent=5 // pred_check_branch
      %205 = sbr.rel (%p203) target = $region32
    $region31: #{_lambda_.3} parent=5 // pred_region
      // Predicated region
      $region33: #{_lambda_.3} parent=31 // pred_check
        %p206 = pneg %p33
      $region34: #{_lambda_.3} parent=31 // pred_check_branch
        %208 = sbr.rel (%p206) target = $region36
      $region35: #{_lambda_.3} parent=31 // pred_region
        %p209 = scmp.lt.s32.totalorder %s13, 1
        %s210 = scalar_select %p209, %s13, 1
        %s211 = smul.addr %s210, 32
        %s212 = smul.addr %s211, 8
        %s213 = scalar_lea.vmem %s0, %s212
      $region36: #{_lambda_.3} parent=31 // pred_fallthru
        _
    $region32: #{_lambda_.3} parent=5 // pred_fallthru
      _
    %p214 = scmp.le.s32.totalorder 1, %s13
    %p215 = scmp.lt.s32.totalorder %s13, 3
    %p216 = pnand %p214, %p215
    %p217 = pneg %p216
    // Predicated region
    $region37: #{_lambda_.3} parent=5 // pred_check
      _
    $region38: #{_lambda_.3} parent=5 // pred_check_branch
      %219 = sbr.rel (%p216) target = $region40
    $region39: #{_lambda_.3} parent=5 // pred_region
      %s220 = ssub.s32 %s13, 1
      %p221 = scmp.lt.s32.totalorder %s18, 1
      %s222 = scalar_select %p221, %s18, 1
      %s223 = smul.addr %s222, 32
      %s224 = smul.addr %s223, 8
      %s225 = scalar_lea.vmem %s0, %s224
      %p226 = pneg %p39
      %p227 = pneg %p36
      %p228 = pneg %p60
      %p229 = pneg %p57
      %p230 = pneg %p81
      %p231 = pneg %p78
      %p232 = pneg %p102
      %p233 = pneg %p99
      %p234 = pneg %p123
      %p235 = pneg %p120
      %p236 = pneg %p149
      %p237 = pneg %p146
      %p238 = scmp.lt.s32.totalorder %s18, 1
      %s239 = scalar_select %p238, %s18, 1
      %s240 = smul.addr %s239, 32
      %s241 = smul.addr %s240, 8
      %s242 = scalar_lea.vmem %s5, %s241
      %p243 = pneg %p175
      %p244 = pneg %p172
      %p245 = scmp.lt.s32.totalorder %s18, 1
      %s246 = scalar_select %p245, %s18, 1
      %s247 = smul.addr %s246, 2
      %s248 = scalar_lea.vmem %s6, %s247
      %p249 = scmp.lt.s32.totalorder %s18, 1
      %s250 = scalar_select %p249, %s18, 1
      %s251 = smul.addr %s250, 32
      %s252 = smul.addr %s251, 8
      %s253 = scalar_lea.vmem %s0, %s252
      %p254 = scmp.lt.s32.totalorder %s18, 1
      %s255 = scalar_select %p254, %s18, 1
      %s256 = smul.addr %s255, 32
      %s257 = smul.addr %s256, 8
      %s258 = scalar_lea.vmem %s5, %s257
      %p259 = scmp.lt.s32.totalorder %s18, 1
      %s260 = scalar_select %p259, %s18, 1
      %s261 = smul.addr %s260, 2
      %s262 = scalar_lea.vmem %s6, %s261
      %v263 = vld [vmem:[%s253] sm:$0xff]
      %v264 = vld [vmem:[%s253 + $0x8] sm:$0xff]
      %v265 = vld [vmem:[%s253 + $0x10] sm:$0xff]
      %v266 = vld [vmem:[%s253 + $0x18] sm:$0xff]
      %v267 = vld [vmem:[%s253 + $0x20] sm:$0xff]
      %v268 = vld [vmem:[%s253 + $0x28] sm:$0xff]
      %v269 = vld [vmem:[%s253 + $0x30] sm:$0xff]
      %v270 = vld [vmem:[%s253 + $0x38] sm:$0xff]
      %v271 = vld [vmem:[%s253 + $0x40] sm:$0xff]
      %v272 = vld [vmem:[%s253 + $0x48] sm:$0xff]
      %v273 = vld [vmem:[%s253 + $0x50] sm:$0xff]
      %v274 = vld [vmem:[%s253 + $0x58] sm:$0xff]
      %v275 = vld [vmem:[%s253 + $0x60] sm:$0xff]
      %v276 = vld [vmem:[%s253 + $0x68] sm:$0xff]
      %v277 = vld [vmem:[%s253 + $0x70] sm:$0xff]
      %v278 = vld [vmem:[%s253 + $0x78] sm:$0xff]
      %v279 = vld [vmem:[%s253 + $0x80] sm:$0xff]
      %v280 = vld [vmem:[%s253 + $0x88] sm:$0xff]
      %v281 = vld [vmem:[%s253 + $0x90] sm:$0xff]
      %v282 = vld [vmem:[%s253 + $0x98] sm:$0xff]
      %v283 = vld [vmem:[%s253 + $0xa0] sm:$0xff]
      %v284 = vld [vmem:[%s253 + $0xa8] sm:$0xff]
      %v285 = vld [vmem:[%s253 + $0xb0] sm:$0xff]
      %v286 = vld [vmem:[%s253 + $0xb8] sm:$0xff]
      %v287 = vld [vmem:[%s253 + $0xc0] sm:$0xff]
      %v288 = vld [vmem:[%s253 + $0xc8] sm:$0xff]
      %v289 = vld [vmem:[%s253 + $0xd0] sm:$0xff]
      %v290 = vld [vmem:[%s253 + $0xd8] sm:$0xff]
      %v291 = vld [vmem:[%s253 + $0xe0] sm:$0xff]
      %v292 = vld [vmem:[%s253 + $0xe8] sm:$0xff]
      %v293 = vld [vmem:[%s253 + $0xf0] sm:$0xff]
      %v294 = vld [vmem:[%s253 + $0xf8] sm:$0xff]
      %v295 = vld [vmem:[%s1] sm:$0x1]
      %v297 = vperm.slane %v295, 0
      %v299 = vmul.f32 %v263, %v297
      %v300 = vmul.f32 %v264, %v297
      %v301 = vmul.f32 %v265, %v297
      %v302 = vmul.f32 %v266, %v297
      %v303 = vmul.f32 %v267, %v297
      %v304 = vmul.f32 %v268, %v297
      %v305 = vmul.f32 %v269, %v297
      %v306 = vmul.f32 %v270, %v297
      %v307 = vmul.f32 %v271, %v297
      %v308 = vmul.f32 %v272, %v297
      %v309 = vmul.f32 %v273, %v297
      %v310 = vmul.f32 %v274, %v297
      %v311 = vmul.f32 %v275, %v297
      %v312 = vmul.f32 %v276, %v297
      %v313 = vmul.f32 %v277, %v297
      %v314 = vmul.f32 %v278, %v297
      %v315 = vmul.f32 %v279, %v297
      %v316 = vmul.f32 %v280, %v297
      %v317 = vmul.f32 %v281, %v297
      %v318 = vmul.f32 %v282, %v297
      %v319 = vmul.f32 %v283, %v297
      %v320 = vmul.f32 %v284, %v297
      %v321 = vmul.f32 %v285, %v297
      %v322 = vmul.f32 %v286, %v297
      %v323 = vmul.f32 %v287, %v297
      %v324 = vmul.f32 %v288, %v297
      %v325 = vmul.f32 %v289, %v297
      %v326 = vmul.f32 %v290, %v297
      %v327 = vmul.f32 %v291, %v297
      %v328 = vmul.f32 %v292, %v297
      %v329 = vmul.f32 %v293, %v297
      %v330 = vmul.f32 %v294, %v297
      %v331 = vld [vmem:[%s2] sm:$0x1]
      %v333 = vperm.slane %v331, 0
      %v335 = vadd.f32 %v299, %v333
      %v336 = vadd.f32 %v300, %v333
      %v337 = vadd.f32 %v301, %v333
      %v338 = vadd.f32 %v302, %v333
      %v339 = vadd.f32 %v303, %v333
      %v340 = vadd.f32 %v304, %v333
      %v341 = vadd.f32 %v305, %v333
      %v342 = vadd.f32 %v306, %v333
      %v343 = vadd.f32 %v307, %v333
      %v344 = vadd.f32 %v308, %v333
      %v345 = vadd.f32 %v309, %v333
      %v346 = vadd.f32 %v310, %v333
      %v347 = vadd.f32 %v311, %v333
      %v348 = vadd.f32 %v312, %v333
      %v349 = vadd.f32 %v313, %v333
      %v350 = vadd.f32 %v314, %v333
      %v351 = vadd.f32 %v315, %v333
      %v352 = vadd.f32 %v316, %v333
      %v353 = vadd.f32 %v317, %v333
      %v354 = vadd.f32 %v318, %v333
      %v355 = vadd.f32 %v319, %v333
      %v356 = vadd.f32 %v320, %v333
      %v357 = vadd.f32 %v321, %v333
      %v358 = vadd.f32 %v322, %v333
      %v359 = vadd.f32 %v323, %v333
      %v360 = vadd.f32 %v324, %v333
      %v361 = vadd.f32 %v325, %v333
      %v362 = vadd.f32 %v326, %v333
      %v363 = vadd.f32 %v327, %v333
      %v364 = vadd.f32 %v328, %v333
      %v365 = vadd.f32 %v329, %v333
      %v366 = vadd.f32 %v330, %v333
      %vm367 = vcmask 31744
      %368 = vst.msk [vmem:[#allocation2] sm:$0xff] %vm367, 0.0
      %369 = vst.msk [vmem:[#allocation2 + $0x8] sm:$0xff] %vm367, 0.0
      %vm370 = vcmask 25600
      %371 = vst.msk [vmem:[#allocation2 + $0x10] sm:$0x3] %vm370, 0.0
      %s372 = scalar_lea.vmem [#allocation2], 408
      %373 = vst.msk [vmem:[%s372] sm:$0xff] %vm367, 0.0
      %374 = vst.msk [vmem:[%s372 + $0x8] sm:$0xff] %vm367, 0.0
      %375 = vst.msk [vmem:[%s372 + $0x10] sm:$0x3] %vm370, 0.0
      %s376 = scalar_lea.vmem [#allocation2], 24
      %vm377 = vcmask 24576
      %378 = vst.msk [vmem:[%s376] sm:$0x1] %vm377, 0.0
      %379 = vst.msk [vmem:[%s376 + $0x18] sm:$0x1] %vm377, 0.0
      %380 = vst.msk [vmem:[%s376 + $0x30] sm:$0x1] %vm377, 0.0
      %381 = vst.msk [vmem:[%s376 + $0x48] sm:$0x1] %vm377, 0.0
      %382 = vst.msk [vmem:[%s376 + $0x60] sm:$0x1] %vm377, 0.0
      %383 = vst.msk [vmem:[%s376 + $0x78] sm:$0x1] %vm377, 0.0
      %384 = vst.msk [vmem:[%s376 + $0x90] sm:$0x1] %vm377, 0.0
      %385 = vst.msk [vmem:[%s376 + $0xa8] sm:$0x1] %vm377, 0.0
      %386 = vst.msk [vmem:[%s376 + $0xc0] sm:$0x1] %vm377, 0.0
      %387 = vst.msk [vmem:[%s376 + $0xd8] sm:$0x1] %vm377, 0.0
      %388 = vst.msk [vmem:[%s376 + $0xf0] sm:$0x1] %vm377, 0.0
      %389 = vst.msk [vmem:[%s376 + $0x108] sm:$0x1] %vm377, 0.0
      %390 = vst.msk [vmem:[%s376 + $0x120] sm:$0x1] %vm377, 0.0
      %391 = vst.msk [vmem:[%s376 + $0x138] sm:$0x1] %vm377, 0.0
      %392 = vst.msk [vmem:[%s376 + $0x150] sm:$0x1] %vm377, 0.0
      %393 = vst.msk [vmem:[%s376 + $0x168] sm:$0x1] %vm377, 0.0
      %394 = vst.msk [vmem:[%s376 + $0x11] sm:$0x1] %vm377, 0.0
      %395 = vst.msk [vmem:[%s376 + $0x29] sm:$0x1] %vm377, 0.0
      %396 = vst.msk [vmem:[%s376 + $0x41] sm:$0x1] %vm377, 0.0
      %397 = vst.msk [vmem:[%s376 + $0x59] sm:$0x1] %vm377, 0.0
      %398 = vst.msk [vmem:[%s376 + $0x71] sm:$0x1] %vm377, 0.0
      %399 = vst.msk [vmem:[%s376 + $0x89] sm:$0x1] %vm377, 0.0
      %400 = vst.msk [vmem:[%s376 + $0xa1] sm:$0x1] %vm377, 0.0
      %401 = vst.msk [vmem:[%s376 + $0xb9] sm:$0x1] %vm377, 0.0
      %402 = vst.msk [vmem:[%s376 + $0xd1] sm:$0x1] %vm377, 0.0
      %403 = vst.msk [vmem:[%s376 + $0xe9] sm:$0x1] %vm377, 0.0
      %404 = vst.msk [vmem:[%s376 + $0x101] sm:$0x1] %vm377, 0.0
      %405 = vst.msk [vmem:[%s376 + $0x119] sm:$0x1] %vm377, 0.0
      %406 = vst.msk [vmem:[%s376 + $0x131] sm:$0x1] %vm377, 0.0
      %407 = vst.msk [vmem:[%s376 + $0x149] sm:$0x1] %vm377, 0.0
      %408 = vst.msk [vmem:[%s376 + $0x161] sm:$0x1] %vm377, 0.0
      %409 = vst.msk [vmem:[%s376 + $0x179] sm:$0x1] %vm377, 0.0
      %410 = vst.msk [vmem:[%s376 + $0x1] sm:$0xff] %vm367, %v335
      %411 = vst.msk [vmem:[%s376 + $0x9] sm:$0xff] %vm367, %v336
      %412 = vst.msk [vmem:[%s376 + $0x19] sm:$0xff] %vm367, %v337
      %413 = vst.msk [vmem:[%s376 + $0x21] sm:$0xff] %vm367, %v338
      %414 = vst.msk [vmem:[%s376 + $0x31] sm:$0xff] %vm367, %v339
      %415 = vst.msk [vmem:[%s376 + $0x39] sm:$0xff] %vm367, %v340
      %416 = vst.msk [vmem:[%s376 + $0x49] sm:$0xff] %vm367, %v341
      %417 = vst.msk [vmem:[%s376 + $0x51] sm:$0xff] %vm367, %v342
      %418 = vst.msk [vmem:[%s376 + $0x61] sm:$0xff] %vm367, %v343
      %419 = vst.msk [vmem:[%s376 + $0x69] sm:$0xff] %vm367, %v344
      %420 = vst.msk [vmem:[%s376 + $0x79] sm:$0xff] %vm367, %v345
      %421 = vst.msk [vmem:[%s376 + $0x81] sm:$0xff] %vm367, %v346
      %422 = vst.msk [vmem:[%s376 + $0x91] sm:$0xff] %vm367, %v347
      %423 = vst.msk [vmem:[%s376 + $0x99] sm:$0xff] %vm367, %v348
      %424 = vst.msk [vmem:[%s376 + $0xa9] sm:$0xff] %vm367, %v349
      %425 = vst.msk [vmem:[%s376 + $0xb1] sm:$0xff] %vm367, %v350
      %426 = vst.msk [vmem:[%s376 + $0xc1] sm:$0xff] %vm367, %v351
      %427 = vst.msk [vmem:[%s376 + $0xc9] sm:$0xff] %vm367, %v352
      %428 = vst.msk [vmem:[%s376 + $0xd9] sm:$0xff] %vm367, %v353
      %429 = vst.msk [vmem:[%s376 + $0xe1] sm:$0xff] %vm367, %v354
      %430 = vst.msk [vmem:[%s376 + $0xf1] sm:$0xff] %vm367, %v355
      %431 = vst.msk [vmem:[%s376 + $0xf9] sm:$0xff] %vm367, %v356
      %432 = vst.msk [vmem:[%s376 + $0x109] sm:$0xff] %vm367, %v357
      %433 = vst.msk [vmem:[%s376 + $0x111] sm:$0xff] %vm367, %v358
      %434 = vst.msk [vmem:[%s376 + $0x121] sm:$0xff] %vm367, %v359
      %435 = vst.msk [vmem:[%s376 + $0x129] sm:$0xff] %vm367, %v360
      %436 = vst.msk [vmem:[%s376 + $0x139] sm:$0xff] %vm367, %v361
      %437 = vst.msk [vmem:[%s376 + $0x141] sm:$0xff] %vm367, %v362
      %438 = vst.msk [vmem:[%s376 + $0x151] sm:$0xff] %vm367, %v363
      %439 = vst.msk [vmem:[%s376 + $0x159] sm:$0xff] %vm367, %v364
      %440 = vst.msk [vmem:[%s376 + $0x169] sm:$0xff] %vm367, %v365
      %441 = vst.msk [vmem:[%s376 + $0x171] sm:$0xff] %vm367, %v366
      %v442 = vld [vmem:[#allocation2] sm:$0xff]
      %v443 = vld [vmem:[#allocation2 + $0x8] sm:$0xff]
      %v444 = vld [vmem:[#allocation2 + $0x18] sm:$0xff]
      %v445 = vld [vmem:[#allocation2 + $0x20] sm:$0xff]
      %v446 = vld [vmem:[#allocation2 + $0x30] sm:$0xff]
      %v447 = vld [vmem:[#allocation2 + $0x38] sm:$0xff]
      %v448 = vld [vmem:[#allocation2 + $0x48] sm:$0xff]
      %v449 = vld [vmem:[#allocation2 + $0x50] sm:$0xff]
      %v450 = vld [vmem:[#allocation2 + $0x60] sm:$0xff]
      %v451 = vld [vmem:[#allocation2 + $0x68] sm:$0xff]
      %v452 = vld [vmem:[#allocation2 + $0x78] sm:$0xff]
      %v453 = vld [vmem:[#allocation2 + $0x80] sm:$0xff]
      %v454 = vld [vmem:[#allocation2 + $0x90] sm:$0xff]
      %v455 = vld [vmem:[#allocation2 + $0x98] sm:$0xff]
      %v456 = vld [vmem:[#allocation2 + $0xa8] sm:$0xff]
      %v457 = vld [vmem:[#allocation2 + $0xb0] sm:$0xff]
      %v458 = vld [vmem:[#allocation2 + $0xc0] sm:$0xff]
      %v459 = vld [vmem:[#allocation2 + $0xc8] sm:$0xff]
      %v460 = vld [vmem:[#allocation2 + $0xd8] sm:$0xff]
      %v461 = vld [vmem:[#allocation2 + $0xe0] sm:$0xff]
      %v462 = vld [vmem:[#allocation2 + $0xf0] sm:$0xff]
      %v463 = vld [vmem:[#allocation2 + $0xf8] sm:$0xff]
      %v464 = vld [vmem:[#allocation2 + $0x108] sm:$0xff]
      %v465 = vld [vmem:[#allocation2 + $0x110] sm:$0xff]
      %v466 = vld [vmem:[#allocation2 + $0x120] sm:$0xff]
      %v467 = vld [vmem:[#allocation2 + $0x128] sm:$0xff]
      %v468 = vld [vmem:[#allocation2 + $0x138] sm:$0xff]
      %v469 = vld [vmem:[#allocation2 + $0x140] sm:$0xff]
      %v470 = vld [vmem:[#allocation2 + $0x150] sm:$0xff]
      %v471 = vld [vmem:[#allocation2 + $0x158] sm:$0xff]
      %v472 = vld [vmem:[#allocation2 + $0x168] sm:$0xff]
      %v473 = vld [vmem:[#allocation2 + $0x170] sm:$0xff]
      %474 = vst.msk [vmem:[#allocation3] sm:$0xff] %vm367, %v442
      %475 = vst.msk [vmem:[#allocation3 + $0x8] sm:$0xff] %vm367, %v443
      %476 = vst.msk [vmem:[#allocation3 + $0x10] sm:$0xff] %vm367, %v444
      %477 = vst.msk [vmem:[#allocation3 + $0x18] sm:$0xff] %vm367, %v445
      %478 = vst.msk [vmem:[#allocation3 + $0x20] sm:$0xff] %vm367, %v446
      %479 = vst.msk [vmem:[#allocation3 + $0x28] sm:$0xff] %vm367, %v447
      %480 = vst.msk [vmem:[#allocation3 + $0x30] sm:$0xff] %vm367, %v448
      %481 = vst.msk [vmem:[#allocation3 + $0x38] sm:$0xff] %vm367, %v449
      %482 = vst.msk [vmem:[#allocation3 + $0x40] sm:$0xff] %vm367, %v450
      %483 = vst.msk [vmem:[#allocation3 + $0x48] sm:$0xff] %vm367, %v451
      %484 = vst.msk [vmem:[#allocation3 + $0x50] sm:$0xff] %vm367, %v452
      %485 = vst.msk [vmem:[#allocation3 + $0x58] sm:$0xff] %vm367, %v453
      %486 = vst.msk [vmem:[#allocation3 + $0x60] sm:$0xff] %vm367, %v454
      %487 = vst.msk [vmem:[#allocation3 + $0x68] sm:$0xff] %vm367, %v455
      %488 = vst.msk [vmem:[#allocation3 + $0x70] sm:$0xff] %vm367, %v456
      %489 = vst.msk [vmem:[#allocation3 + $0x78] sm:$0xff] %vm367, %v457
      %490 = vst.msk [vmem:[#allocation3 + $0x80] sm:$0xff] %vm367, %v458
      %491 = vst.msk [vmem:[#allocation3 + $0x88] sm:$0xff] %vm367, %v459
      %492 = vst.msk [vmem:[#allocation3 + $0x90] sm:$0xff] %vm367, %v460
      %493 = vst.msk [vmem:[#allocation3 + $0x98] sm:$0xff] %vm367, %v461
      %494 = vst.msk [vmem:[#allocation3 + $0xa0] sm:$0xff] %vm367, %v462
      %495 = vst.msk [vmem:[#allocation3 + $0xa8] sm:$0xff] %vm367, %v463
      %496 = vst.msk [vmem:[#allocation3 + $0xb0] sm:$0xff] %vm367, %v464
      %497 = vst.msk [vmem:[#allocation3 + $0xb8] sm:$0xff] %vm367, %v465
      %498 = vst.msk [vmem:[#allocation3 + $0xc0] sm:$0xff] %vm367, %v466
      %499 = vst.msk [vmem:[#allocation3 + $0xc8] sm:$0xff] %vm367, %v467
      %500 = vst.msk [vmem:[#allocation3 + $0xd0] sm:$0xff] %vm367, %v468
      %501 = vst.msk [vmem:[#allocation3 + $0xd8] sm:$0xff] %vm367, %v469
      %502 = vst.msk [vmem:[#allocation3 + $0xe0] sm:$0xff] %vm367, %v470
      %503 = vst.msk [vmem:[#allocation3 + $0xe8] sm:$0xff] %vm367, %v471
      %504 = vst.msk [vmem:[#allocation3 + $0xf0] sm:$0xff] %vm367, %v472
      %505 = vst.msk [vmem:[#allocation3 + $0xf8] sm:$0xff] %vm367, %v473
      %v506 = vld [vmem:[#allocation2 + $0x1] sm:$0xff]
      %v507 = vld [vmem:[#allocation2 + $0x9] sm:$0xff]
      %v508 = vld [vmem:[#allocation2 + $0x19] sm:$0xff]
      %v509 = vld [vmem:[#allocation2 + $0x21] sm:$0xff]
      %v510 = vld [vmem:[#allocation2 + $0x31] sm:$0xff]
      %v511 = vld [vmem:[#allocation2 + $0x39] sm:$0xff]
      %v512 = vld [vmem:[#allocation2 + $0x49] sm:$0xff]
      %v513 = vld [vmem:[#allocation2 + $0x51] sm:$0xff]
      %v514 = vld [vmem:[#allocation2 + $0x61] sm:$0xff]
      %v515 = vld [vmem:[#allocation2 + $0x69] sm:$0xff]
      %v516 = vld [vmem:[#allocation2 + $0x79] sm:$0xff]
      %v517 = vld [vmem:[#allocation2 + $0x81] sm:$0xff]
      %v518 = vld [vmem:[#allocation2 + $0x91] sm:$0xff]
      %v519 = vld [vmem:[#allocation2 + $0x99] sm:$0xff]
      %v520 = vld [vmem:[#allocation2 + $0xa9] sm:$0xff]
      %v521 = vld [vmem:[#allocation2 + $0xb1] sm:$0xff]
      %v522 = vld [vmem:[#allocation2 + $0xc1] sm:$0xff]
      %v523 = vld [vmem:[#allocation2 + $0xc9] sm:$0xff]
      %v524 = vld [vmem:[#allocation2 + $0xd9] sm:$0xff]
      %v525 = vld [vmem:[#allocation2 + $0xe1] sm:$0xff]
      %v526 = vld [vmem:[#allocation2 + $0xf1] sm:$0xff]
      %v527 = vld [vmem:[#allocation2 + $0xf9] sm:$0xff]
      %v528 = vld [vmem:[#allocation2 + $0x109] sm:$0xff]
      %v529 = vld [vmem:[#allocation2 + $0x111] sm:$0xff]
      %v530 = vld [vmem:[#allocation2 + $0x121] sm:$0xff]
      %v531 = vld [vmem:[#allocation2 + $0x129] sm:$0xff]
      %v532 = vld [vmem:[#allocation2 + $0x139] sm:$0xff]
      %v533 = vld [vmem:[#allocation2 + $0x141] sm:$0xff]
      %v534 = vld [vmem:[#allocation2 + $0x151] sm:$0xff]
      %v535 = vld [vmem:[#allocation2 + $0x159] sm:$0xff]
      %v536 = vld [vmem:[#allocation2 + $0x169] sm:$0xff]
      %v537 = vld [vmem:[#allocation2 + $0x171] sm:$0xff]
      %570 = vrot.lane.b32.xlu0 %v506, 4
      %v571 = vpop.permute.xlu0 %570
      %572 = vrot.lane.b32.xlu0 %v507, 4
      %v573 = vpop.permute.xlu0 %572
      %574 = vrot.lane.b32.xlu0 %v508, 4
      %v575 = vpop.permute.xlu0 %574
      %576 = vrot.lane.b32.xlu0 %v509, 4
      %v577 = vpop.permute.xlu0 %576
      %578 = vrot.lane.b32.xlu0 %v510, 4
      %v579 = vpop.permute.xlu0 %578
      %580 = vrot.lane.b32.xlu0 %v511, 4
      %v581 = vpop.permute.xlu0 %580
      %582 = vrot.lane.b32.xlu0 %v512, 4
      %v583 = vpop.permute.xlu0 %582
      %584 = vrot.lane.b32.xlu0 %v513, 4
      %v585 = vpop.permute.xlu0 %584
      %586 = vrot.lane.b32.xlu0 %v514, 4
      %v587 = vpop.permute.xlu0 %586
      %588 = vrot.lane.b32.xlu0 %v515, 4
      %v589 = vpop.permute.xlu0 %588
      %590 = vrot.lane.b32.xlu0 %v516, 4
      %v591 = vpop.permute.xlu0 %590
      %592 = vrot.lane.b32.xlu0 %v517, 4
      %v593 = vpop.permute.xlu0 %592
      %594 = vrot.lane.b32.xlu0 %v518, 4
      %v595 = vpop.permute.xlu0 %594
      %596 = vrot.lane.b32.xlu0 %v519, 4
      %v597 = vpop.permute.xlu0 %596
      %598 = vrot.lane.b32.xlu0 %v520, 4
      %v599 = vpop.permute.xlu0 %598
      %600 = vrot.lane.b32.xlu0 %v521, 4
      %v601 = vpop.permute.xlu0 %600
      %602 = vrot.lane.b32.xlu0 %v522, 4
      %v603 = vpop.permute.xlu0 %602
      %604 = vrot.lane.b32.xlu0 %v523, 4
      %v605 = vpop.permute.xlu0 %604
      %606 = vrot.lane.b32.xlu0 %v524, 4
      %v607 = vpop.permute.xlu0 %606
      %608 = vrot.lane.b32.xlu0 %v525, 4
      %v609 = vpop.permute.xlu0 %608
      %610 = vrot.lane.b32.xlu0 %v526, 4
      %v611 = vpop.permute.xlu0 %610
      %612 = vrot.lane.b32.xlu0 %v527, 4
      %v613 = vpop.permute.xlu0 %612
      %614 = vrot.lane.b32.xlu0 %v528, 4
      %v615 = vpop.permute.xlu0 %614
      %616 = vrot.lane.b32.xlu0 %v529, 4
      %v617 = vpop.permute.xlu0 %616
      %618 = vrot.lane.b32.xlu0 %v530, 4
      %v619 = vpop.permute.xlu0 %618
      %620 = vrot.lane.b32.xlu0 %v531, 4
      %v621 = vpop.permute.xlu0 %620
      %622 = vrot.lane.b32.xlu0 %v532, 4
      %v623 = vpop.permute.xlu0 %622
      %624 = vrot.lane.b32.xlu0 %v533, 4
      %v625 = vpop.permute.xlu0 %624
      %626 = vrot.lane.b32.xlu0 %v534, 4
      %v627 = vpop.permute.xlu0 %626
      %628 = vrot.lane.b32.xlu0 %v535, 4
      %v629 = vpop.permute.xlu0 %628
      %630 = vrot.lane.b32.xlu0 %v536, 4
      %v631 = vpop.permute.xlu0 %630
      %632 = vrot.lane.b32.xlu0 %v537, 4
      %v633 = vpop.permute.xlu0 %632
      %vm666 = vcmask 64544
      %667 = vst.msk [vmem:[#allocation3] sm:$0xff] %vm666, %v571
      %668 = vst.msk [vmem:[#allocation3 + $0x8] sm:$0xff] %vm666, %v573
      %669 = vst.msk [vmem:[#allocation3 + $0x10] sm:$0xff] %vm666, %v575
      %670 = vst.msk [vmem:[#allocation3 + $0x18] sm:$0xff] %vm666, %v577
      %671 = vst.msk [vmem:[#allocation3 + $0x20] sm:$0xff] %vm666, %v579
      %672 = vst.msk [vmem:[#allocation3 + $0x28] sm:$0xff] %vm666, %v581
      %673 = vst.msk [vmem:[#allocation3 + $0x30] sm:$0xff] %vm666, %v583
      %674 = vst.msk [vmem:[#allocation3 + $0x38] sm:$0xff] %vm666, %v585
      %675 = vst.msk [vmem:[#allocation3 + $0x40] sm:$0xff] %vm666, %v587
      %676 = vst.msk [vmem:[#allocation3 + $0x48] sm:$0xff] %vm666, %v589
      %677 = vst.msk [vmem:[#allocation3 + $0x50] sm:$0xff] %vm666, %v591
      %678 = vst.msk [vmem:[#allocation3 + $0x58] sm:$0xff] %vm666, %v593
      %679 = vst.msk [vmem:[#allocation3 + $0x60] sm:$0xff] %vm666, %v595
      %680 = vst.msk [vmem:[#allocation3 + $0x68] sm:$0xff] %vm666, %v597
      %681 = vst.msk [vmem:[#allocation3 + $0x70] sm:$0xff] %vm666, %v599
      %682 = vst.msk [vmem:[#allocation3 + $0x78] sm:$0xff] %vm666, %v601
      %683 = vst.msk [vmem:[#allocation3 + $0x80] sm:$0xff] %vm666, %v603
      %684 = vst.msk [vmem:[#allocation3 + $0x88] sm:$0xff] %vm666, %v605
      %685 = vst.msk [vmem:[#allocation3 + $0x90] sm:$0xff] %vm666, %v607
      %686 = vst.msk [vmem:[#allocation3 + $0x98] sm:$0xff] %vm666, %v609
      %687 = vst.msk [vmem:[#allocation3 + $0xa0] sm:$0xff] %vm666, %v611
      %688 = vst.msk [vmem:[#allocation3 + $0xa8] sm:$0xff] %vm666, %v613
      %689 = vst.msk [vmem:[#allocation3 + $0xb0] sm:$0xff] %vm666, %v615
      %690 = vst.msk [vmem:[#allocation3 + $0xb8] sm:$0xff] %vm666, %v617
      %691 = vst.msk [vmem:[#allocation3 + $0xc0] sm:$0xff] %vm666, %v619
      %692 = vst.msk [vmem:[#allocation3 + $0xc8] sm:$0xff] %vm666, %v621
      %693 = vst.msk [vmem:[#allocation3 + $0xd0] sm:$0xff] %vm666, %v623
      %694 = vst.msk [vmem:[#allocation3 + $0xd8] sm:$0xff] %vm666, %v625
      %695 = vst.msk [vmem:[#allocation3 + $0xe0] sm:$0xff] %vm666, %v627
      %696 = vst.msk [vmem:[#allocation3 + $0xe8] sm:$0xff] %vm666, %v629
      %697 = vst.msk [vmem:[#allocation3 + $0xf0] sm:$0xff] %vm666, %v631
      %698 = vst.msk [vmem:[#allocation3 + $0xf8] sm:$0xff] %vm666, %v633
      %v699 = vld [vmem:[#allocation2 + $0x2] sm:$0xff]
      %v700 = vld [vmem:[#allocation2 + $0xa] sm:$0xff]
      %v701 = vld [vmem:[#allocation2 + $0x1a] sm:$0xff]
      %v702 = vld [vmem:[#allocation2 + $0x22] sm:$0xff]
      %v703 = vld [vmem:[#allocation2 + $0x32] sm:$0xff]
      %v704 = vld [vmem:[#allocation2 + $0x3a] sm:$0xff]
      %v705 = vld [vmem:[#allocation2 + $0x4a] sm:$0xff]
      %v706 = vld [vmem:[#allocation2 + $0x52] sm:$0xff]
      %v707 = vld [vmem:[#allocation2 + $0x62] sm:$0xff]
      %v708 = vld [vmem:[#allocation2 + $0x6a] sm:$0xff]
      %v709 = vld [vmem:[#allocation2 + $0x7a] sm:$0xff]
      %v710 = vld [vmem:[#allocation2 + $0x82] sm:$0xff]
      %v711 = vld [vmem:[#allocation2 + $0x92] sm:$0xff]
      %v712 = vld [vmem:[#allocation2 + $0x9a] sm:$0xff]
      %v713 = vld [vmem:[#allocation2 + $0xaa] sm:$0xff]
      %v714 = vld [vmem:[#allocation2 + $0xb2] sm:$0xff]
      %v715 = vld [vmem:[#allocation2 + $0xc2] sm:$0xff]
      %v716 = vld [vmem:[#allocation2 + $0xca] sm:$0xff]
      %v717 = vld [vmem:[#allocation2 + $0xda] sm:$0xff]
      %v718 = vld [vmem:[#allocation2 + $0xe2] sm:$0xff]
      %v719 = vld [vmem:[#allocation2 + $0xf2] sm:$0xff]
      %v720 = vld [vmem:[#allocation2 + $0xfa] sm:$0xff]
      %v721 = vld [vmem:[#allocation2 + $0x10a] sm:$0xff]
      %v722 = vld [vmem:[#allocation2 + $0x112] sm:$0xff]
      %v723 = vld [vmem:[#allocation2 + $0x122] sm:$0xff]
      %v724 = vld [vmem:[#allocation2 + $0x12a] sm:$0xff]
      %v725 = vld [vmem:[#allocation2 + $0x13a] sm:$0xff]
      %v726 = vld [vmem:[#allocation2 + $0x142] sm:$0xff]
      %v727 = vld [vmem:[#allocation2 + $0x152] sm:$0xff]
      %v728 = vld [vmem:[#allocation2 + $0x15a] sm:$0xff]
      %v729 = vld [vmem:[#allocation2 + $0x16a] sm:$0xff]
      %v730 = vld [vmem:[#allocation2 + $0x172] sm:$0xff]
      %763 = vrot.lane.b32.xlu0 %v699, 8
      %v764 = vpop.permute.xlu0 %763
      %765 = vrot.lane.b32.xlu0 %v700, 8
      %v766 = vpop.permute.xlu0 %765
      %767 = vrot.lane.b32.xlu0 %v701, 8
      %v768 = vpop.permute.xlu0 %767
      %769 = vrot.lane.b32.xlu0 %v702, 8
      %v770 = vpop.permute.xlu0 %769
      %771 = vrot.lane.b32.xlu0 %v703, 8
      %v772 = vpop.permute.xlu0 %771
      %773 = vrot.lane.b32.xlu0 %v704, 8
      %v774 = vpop.permute.xlu0 %773
      %775 = vrot.lane.b32.xlu0 %v705, 8
      %v776 = vpop.permute.xlu0 %775
      %777 = vrot.lane.b32.xlu0 %v706, 8
      %v778 = vpop.permute.xlu0 %777
      %779 = vrot.lane.b32.xlu0 %v707, 8
      %v780 = vpop.permute.xlu0 %779
      %781 = vrot.lane.b32.xlu0 %v708, 8
      %v782 = vpop.permute.xlu0 %781
      %783 = vrot.lane.b32.xlu0 %v709, 8
      %v784 = vpop.permute.xlu0 %783
      %785 = vrot.lane.b32.xlu0 %v710, 8
      %v786 = vpop.permute.xlu0 %785
      %787 = vrot.lane.b32.xlu0 %v711, 8
      %v788 = vpop.permute.xlu0 %787
      %789 = vrot.lane.b32.xlu0 %v712, 8
      %v790 = vpop.permute.xlu0 %789
      %791 = vrot.lane.b32.xlu0 %v713, 8
      %v792 = vpop.permute.xlu0 %791
      %793 = vrot.lane.b32.xlu0 %v714, 8
      %v794 = vpop.permute.xlu0 %793
      %795 = vrot.lane.b32.xlu0 %v715, 8
      %v796 = vpop.permute.xlu0 %795
      %797 = vrot.lane.b32.xlu0 %v716, 8
      %v798 = vpop.permute.xlu0 %797
      %799 = vrot.lane.b32.xlu0 %v717, 8
      %v800 = vpop.permute.xlu0 %799
      %801 = vrot.lane.b32.xlu0 %v718, 8
      %v802 = vpop.permute.xlu0 %801
      %803 = vrot.lane.b32.xlu0 %v719, 8
      %v804 = vpop.permute.xlu0 %803
      %805 = vrot.lane.b32.xlu0 %v720, 8
      %v806 = vpop.permute.xlu0 %805
      %807 = vrot.lane.b32.xlu0 %v721, 8
      %v808 = vpop.permute.xlu0 %807
      %809 = vrot.lane.b32.xlu0 %v722, 8
      %v810 = vpop.permute.xlu0 %809
      %811 = vrot.lane.b32.xlu0 %v723, 8
      %v812 = vpop.permute.xlu0 %811
      %813 = vrot.lane.b32.xlu0 %v724, 8
      %v814 = vpop.permute.xlu0 %813
      %815 = vrot.lane.b32.xlu0 %v725, 8
      %v816 = vpop.permute.xlu0 %815
      %817 = vrot.lane.b32.xlu0 %v726, 8
      %v818 = vpop.permute.xlu0 %817
      %819 = vrot.lane.b32.xlu0 %v727, 8
      %v820 = vpop.permute.xlu0 %819
      %821 = vrot.lane.b32.xlu0 %v728, 8
      %v822 = vpop.permute.xlu0 %821
      %823 = vrot.lane.b32.xlu0 %v729, 8
      %v824 = vpop.permute.xlu0 %823
      %825 = vrot.lane.b32.xlu0 %v730, 8
      %v826 = vpop.permute.xlu0 %825
      %vm859 = vcmask 97344
      %860 = vst.msk [vmem:[#allocation3] sm:$0xff] %vm859, %v764
      %861 = vst.msk [vmem:[#allocation3 + $0x8] sm:$0xff] %vm859, %v766
      %862 = vst.msk [vmem:[#allocation3 + $0x10] sm:$0xff] %vm859, %v768
      %863 = vst.msk [vmem:[#allocation3 + $0x18] sm:$0xff] %vm859, %v770
      %864 = vst.msk [vmem:[#allocation3 + $0x20] sm:$0xff] %vm859, %v772
      %865 = vst.msk [vmem:[#allocation3 + $0x28] sm:$0xff] %vm859, %v774
      %866 = vst.msk [vmem:[#allocation3 + $0x30] sm:$0xff] %vm859, %v776
      %867 = vst.msk [vmem:[#allocation3 + $0x38] sm:$0xff] %vm859, %v778
      %868 = vst.msk [vmem:[#allocation3 + $0x40] sm:$0xff] %vm859, %v780
      %869 = vst.msk [vmem:[#allocation3 + $0x48] sm:$0xff] %vm859, %v782
      %870 = vst.msk [vmem:[#allocation3 + $0x50] sm:$0xff] %vm859, %v784
      %871 = vst.msk [vmem:[#allocation3 + $0x58] sm:$0xff] %vm859, %v786
      %872 = vst.msk [vmem:[#allocation3 + $0x60] sm:$0xff] %vm859, %v788
      %873 = vst.msk [vmem:[#allocation3 + $0x68] sm:$0xff] %vm859, %v790
      %874 = vst.msk [vmem:[#allocation3 + $0x70] sm:$0xff] %vm859, %v792
      %875 = vst.msk [vmem:[#allocation3 + $0x78] sm:$0xff] %vm859, %v794
      %876 = vst.msk [vmem:[#allocation3 + $0x80] sm:$0xff] %vm859, %v796
      %877 = vst.msk [vmem:[#allocation3 + $0x88] sm:$0xff] %vm859, %v798
      %878 = vst.msk [vmem:[#allocation3 + $0x90] sm:$0xff] %vm859, %v800
      %879 = vst.msk [vmem:[#allocation3 + $0x98] sm:$0xff] %vm859, %v802
      %880 = vst.msk [vmem:[#allocation3 + $0xa0] sm:$0xff] %vm859, %v804
      %881 = vst.msk [vmem:[#allocation3 + $0xa8] sm:$0xff] %vm859, %v806
      %882 = vst.msk [vmem:[#allocation3 + $0xb0] sm:$0xff] %vm859, %v808
      %883 = vst.msk [vmem:[#allocation3 + $0xb8] sm:$0xff] %vm859, %v810
      %884 = vst.msk [vmem:[#allocation3 + $0xc0] sm:$0xff] %vm859, %v812
      %885 = vst.msk [vmem:[#allocation3 + $0xc8] sm:$0xff] %vm859, %v814
      %886 = vst.msk [vmem:[#allocation3 + $0xd0] sm:$0xff] %vm859, %v816
      %887 = vst.msk [vmem:[#allocation3 + $0xd8] sm:$0xff] %vm859, %v818
      %888 = vst.msk [vmem:[#allocation3 + $0xe0] sm:$0xff] %vm859, %v820
      %889 = vst.msk [vmem:[#allocation3 + $0xe8] sm:$0xff] %vm859, %v822
      %890 = vst.msk [vmem:[#allocation3 + $0xf0] sm:$0xff] %vm859, %v824
      %891 = vst.msk [vmem:[#allocation3 + $0xf8] sm:$0xff] %vm859, %v826
      %v892 = vld [vmem:[%s376] sm:$0xff]
      %v893 = vld [vmem:[%s376 + $0x8] sm:$0xff]
      %v894 = vld [vmem:[%s376 + $0x18] sm:$0xff]
      %v895 = vld [vmem:[%s376 + $0x20] sm:$0xff]
      %v896 = vld [vmem:[%s376 + $0x30] sm:$0xff]
      %v897 = vld [vmem:[%s376 + $0x38] sm:$0xff]
      %v898 = vld [vmem:[%s376 + $0x48] sm:$0xff]
      %v899 = vld [vmem:[%s376 + $0x50] sm:$0xff]
      %v900 = vld [vmem:[%s376 + $0x60] sm:$0xff]
      %v901 = vld [vmem:[%s376 + $0x68] sm:$0xff]
      %v902 = vld [vmem:[%s376 + $0x78] sm:$0xff]
      %v903 = vld [vmem:[%s376 + $0x80] sm:$0xff]
      %v904 = vld [vmem:[%s376 + $0x90] sm:$0xff]
      %v905 = vld [vmem:[%s376 + $0x98] sm:$0xff]
      %v906 = vld [vmem:[%s376 + $0xa8] sm:$0xff]
      %v907 = vld [vmem:[%s376 + $0xb0] sm:$0xff]
      %v908 = vld [vmem:[%s376 + $0xc0] sm:$0xff]
      %v909 = vld [vmem:[%s376 + $0xc8] sm:$0xff]
      %v910 = vld [vmem:[%s376 + $0xd8] sm:$0xff]
      %v911 = vld [vmem:[%s376 + $0xe0] sm:$0xff]
      %v912 = vld [vmem:[%s376 + $0xf0] sm:$0xff]
      %v913 = vld [vmem:[%s376 + $0xf8] sm:$0xff]
      %v914 = vld [vmem:[%s376 + $0x108] sm:$0xff]
      %v915 = vld [vmem:[%s376 + $0x110] sm:$0xff]
      %v916 = vld [vmem:[%s376 + $0x120] sm:$0xff]
      %v917 = vld [vmem:[%s376 + $0x128] sm:$0xff]
      %v918 = vld [vmem:[%s376 + $0x138] sm:$0xff]
      %v919 = vld [vmem:[%s376 + $0x140] sm:$0xff]
      %v920 = vld [vmem:[%s376 + $0x150] sm:$0xff]
      %v921 = vld [vmem:[%s376 + $0x158] sm:$0xff]
      %v922 = vld [vmem:[%s376 + $0x168] sm:$0xff]
      %v923 = vld [vmem:[%s376 + $0x170] sm:$0xff]
      %956 = vrot.lane.b32.xlu0 %v892, 12
      %v957 = vpop.permute.xlu0 %956
      %958 = vrot.lane.b32.xlu0 %v893, 12
      %v959 = vpop.permute.xlu0 %958
      %960 = vrot.lane.b32.xlu0 %v894, 12
      %v961 = vpop.permute.xlu0 %960
      %962 = vrot.lane.b32.xlu0 %v895, 12
      %v963 = vpop.permute.xlu0 %962
      %964 = vrot.lane.b32.xlu0 %v896, 12
      %v965 = vpop.permute.xlu0 %964
      %966 = vrot.lane.b32.xlu0 %v897, 12
      %v967 = vpop.permute.xlu0 %966
      %968 = vrot.lane.b32.xlu0 %v898, 12
      %v969 = vpop.permute.xlu0 %968
      %970 = vrot.lane.b32.xlu0 %v899, 12
      %v971 = vpop.permute.xlu0 %970
      %972 = vrot.lane.b32.xlu0 %v900, 12
      %v973 = vpop.permute.xlu0 %972
      %974 = vrot.lane.b32.xlu0 %v901, 12
      %v975 = vpop.permute.xlu0 %974
      %976 = vrot.lane.b32.xlu0 %v902, 12
      %v977 = vpop.permute.xlu0 %976
      %978 = vrot.lane.b32.xlu0 %v903, 12
      %v979 = vpop.permute.xlu0 %978
      %980 = vrot.lane.b32.xlu0 %v904, 12
      %v981 = vpop.permute.xlu0 %980
      %982 = vrot.lane.b32.xlu0 %v905, 12
      %v983 = vpop.permute.xlu0 %982
      %984 = vrot.lane.b32.xlu0 %v906, 12
      %v985 = vpop.permute.xlu0 %984
      %986 = vrot.lane.b32.xlu0 %v907, 12
      %v987 = vpop.permute.xlu0 %986
      %988 = vrot.lane.b32.xlu0 %v908, 12
      %v989 = vpop.permute.xlu0 %988
      %990 = vrot.lane.b32.xlu0 %v909, 12
      %v991 = vpop.permute.xlu0 %990
      %992 = vrot.lane.b32.xlu0 %v910, 12
      %v993 = vpop.permute.xlu0 %992
      %994 = vrot.lane.b32.xlu0 %v911, 12
      %v995 = vpop.permute.xlu0 %994
      %996 = vrot.lane.b32.xlu0 %v912, 12
      %v997 = vpop.permute.xlu0 %996
      %998 = vrot.lane.b32.xlu0 %v913, 12
      %v999 = vpop.permute.xlu0 %998
      %1000 = vrot.lane.b32.xlu0 %v914, 12
      %v1001 = vpop.permute.xlu0 %1000
      %1002 = vrot.lane.b32.xlu0 %v915, 12
      %v1003 = vpop.permute.xlu0 %1002
      %1004 = vrot.lane.b32.xlu0 %v916, 12
      %v1005 = vpop.permute.xlu0 %1004
      %1006 = vrot.lane.b32.xlu0 %v917, 12
      %v1007 = vpop.permute.xlu0 %1006
      %1008 = vrot.lane.b32.xlu0 %v918, 12
      %v1009 = vpop.permute.xlu0 %1008
      %1010 = vrot.lane.b32.xlu0 %v919, 12
      %v1011 = vpop.permute.xlu0 %1010
      %1012 = vrot.lane.b32.xlu0 %v920, 12
      %v1013 = vpop.permute.xlu0 %1012
      %1014 = vrot.lane.b32.xlu0 %v921, 12
      %v1015 = vpop.permute.xlu0 %1014
      %1016 = vrot.lane.b32.xlu0 %v922, 12
      %v1017 = vpop.permute.xlu0 %1016
      %1018 = vrot.lane.b32.xlu0 %v923, 12
      %v1019 = vpop.permute.xlu0 %1018
      %vm1052 = vcmask 130144
      %1053 = vst.msk [vmem:[#allocation3] sm:$0xff] %vm1052, %v957
      %1054 = vst.msk [vmem:[#allocation3 + $0x8] sm:$0xff] %vm1052, %v959
      %1055 = vst.msk [vmem:[#allocation3 + $0x10] sm:$0xff] %vm1052, %v961
      %1056 = vst.msk [vmem:[#allocation3 + $0x18] sm:$0xff] %vm1052, %v963
      %1057 = vst.msk [vmem:[#allocation3 + $0x20] sm:$0xff] %vm1052, %v965
      %1058 = vst.msk [vmem:[#allocation3 + $0x28] sm:$0xff] %vm1052, %v967
      %1059 = vst.msk [vmem:[#allocation3 + $0x30] sm:$0xff] %vm1052, %v969
      %1060 = vst.msk [vmem:[#allocation3 + $0x38] sm:$0xff] %vm1052, %v971
      %1061 = vst.msk [vmem:[#allocation3 + $0x40] sm:$0xff] %vm1052, %v973
      %1062 = vst.msk [vmem:[#allocation3 + $0x48] sm:$0xff] %vm1052, %v975
      %1063 = vst.msk [vmem:[#allocation3 + $0x50] sm:$0xff] %vm1052, %v977
      %1064 = vst.msk [vmem:[#allocation3 + $0x58] sm:$0xff] %vm1052, %v979
      %1065 = vst.msk [vmem:[#allocation3 + $0x60] sm:$0xff] %vm1052, %v981
      %1066 = vst.msk [vmem:[#allocation3 + $0x68] sm:$0xff] %vm1052, %v983
      %1067 = vst.msk [vmem:[#allocation3 + $0x70] sm:$0xff] %vm1052, %v985
      %1068 = vst.msk [vmem:[#allocation3 + $0x78] sm:$0xff] %vm1052, %v987
      %1069 = vst.msk [vmem:[#allocation3 + $0x80] sm:$0xff] %vm1052, %v989
      %1070 = vst.msk [vmem:[#allocation3 + $0x88] sm:$0xff] %vm1052, %v991
      %1071 = vst.msk [vmem:[#allocation3 + $0x90] sm:$0xff] %vm1052, %v993
      %1072 = vst.msk [vmem:[#allocation3 + $0x98] sm:$0xff] %vm1052, %v995
      %1073 = vst.msk [vmem:[#allocation3 + $0xa0] sm:$0xff] %vm1052, %v997
      %1074 = vst.msk [vmem:[#allocation3 + $0xa8] sm:$0xff] %vm1052, %v999
      %1075 = vst.msk [vmem:[#allocation3 + $0xb0] sm:$0xff] %vm1052, %v1001
      %1076 = vst.msk [vmem:[#allocation3 + $0xb8] sm:$0xff] %vm1052, %v1003
      %1077 = vst.msk [vmem:[#allocation3 + $0xc0] sm:$0xff] %vm1052, %v1005
      %1078 = vst.msk [vmem:[#allocation3 + $0xc8] sm:$0xff] %vm1052, %v1007
      %1079 = vst.msk [vmem:[#allocation3 + $0xd0] sm:$0xff] %vm1052, %v1009
      %1080 = vst.msk [vmem:[#allocation3 + $0xd8] sm:$0xff] %vm1052, %v1011
      %1081 = vst.msk [vmem:[#allocation3 + $0xe0] sm:$0xff] %vm1052, %v1013
      %1082 = vst.msk [vmem:[#allocation3 + $0xe8] sm:$0xff] %vm1052, %v1015
      %1083 = vst.msk [vmem:[#allocation3 + $0xf0] sm:$0xff] %vm1052, %v1017
      %1084 = vst.msk [vmem:[#allocation3 + $0xf8] sm:$0xff] %vm1052, %v1019
      %v1085 = vld [vmem:[%s376 + $0x1] sm:$0xff]
      %v1086 = vld [vmem:[%s376 + $0x9] sm:$0xff]
      %v1087 = vld [vmem:[%s376 + $0x19] sm:$0xff]
      %v1088 = vld [vmem:[%s376 + $0x21] sm:$0xff]
      %v1089 = vld [vmem:[%s376 + $0x31] sm:$0xff]
      %v1090 = vld [vmem:[%s376 + $0x39] sm:$0xff]
      %v1091 = vld [vmem:[%s376 + $0x49] sm:$0xff]
      %v1092 = vld [vmem:[%s376 + $0x51] sm:$0xff]
      %v1093 = vld [vmem:[%s376 + $0x61] sm:$0xff]
      %v1094 = vld [vmem:[%s376 + $0x69] sm:$0xff]
      %v1095 = vld [vmem:[%s376 + $0x79] sm:$0xff]
      %v1096 = vld [vmem:[%s376 + $0x81] sm:$0xff]
      %v1097 = vld [vmem:[%s376 + $0x91] sm:$0xff]
      %v1098 = vld [vmem:[%s376 + $0x99] sm:$0xff]
      %v1099 = vld [vmem:[%s376 + $0xa9] sm:$0xff]
      %v1100 = vld [vmem:[%s376 + $0xb1] sm:$0xff]
      %v1101 = vld [vmem:[%s376 + $0xc1] sm:$0xff]
      %v1102 = vld [vmem:[%s376 + $0xc9] sm:$0xff]
      %v1103 = vld [vmem:[%s376 + $0xd9] sm:$0xff]
      %v1104 = vld [vmem:[%s376 + $0xe1] sm:$0xff]
      %v1105 = vld [vmem:[%s376 + $0xf1] sm:$0xff]
      %v1106 = vld [vmem:[%s376 + $0xf9] sm:$0xff]
      %v1107 = vld [vmem:[%s376 + $0x109] sm:$0xff]
      %v1108 = vld [vmem:[%s376 + $0x111] sm:$0xff]
      %v1109 = vld [vmem:[%s376 + $0x121] sm:$0xff]
      %v1110 = vld [vmem:[%s376 + $0x129] sm:$0xff]
      %v1111 = vld [vmem:[%s376 + $0x139] sm:$0xff]
      %v1112 = vld [vmem:[%s376 + $0x141] sm:$0xff]
      %v1113 = vld [vmem:[%s376 + $0x151] sm:$0xff]
      %v1114 = vld [vmem:[%s376 + $0x159] sm:$0xff]
      %v1115 = vld [vmem:[%s376 + $0x169] sm:$0xff]
      %v1116 = vld [vmem:[%s376 + $0x171] sm:$0xff]
      %1149 = vrot.lane.b32.xlu0 %v1085, 16
      %v1150 = vpop.permute.xlu0 %1149
      %1151 = vrot.lane.b32.xlu0 %v1086, 16
      %v1152 = vpop.permute.xlu0 %1151
      %1153 = vrot.lane.b32.xlu0 %v1087, 16
      %v1154 = vpop.permute.xlu0 %1153
      %1155 = vrot.lane.b32.xlu0 %v1088, 16
      %v1156 = vpop.permute.xlu0 %1155
      %1157 = vrot.lane.b32.xlu0 %v1089, 16
      %v1158 = vpop.permute.xlu0 %1157
      %1159 = vrot.lane.b32.xlu0 %v1090, 16
      %v1160 = vpop.permute.xlu0 %1159
      %1161 = vrot.lane.b32.xlu0 %v1091, 16
      %v1162 = vpop.permute.xlu0 %1161
      %1163 = vrot.lane.b32.xlu0 %v1092, 16
      %v1164 = vpop.permute.xlu0 %1163
      %1165 = vrot.lane.b32.xlu0 %v1093, 16
      %v1166 = vpop.permute.xlu0 %1165
      %1167 = vrot.lane.b32.xlu0 %v1094, 16
      %v1168 = vpop.permute.xlu0 %1167
      %1169 = vrot.lane.b32.xlu0 %v1095, 16
      %v1170 = vpop.permute.xlu0 %1169
      %1171 = vrot.lane.b32.xlu0 %v1096, 16
      %v1172 = vpop.permute.xlu0 %1171
      %1173 = vrot.lane.b32.xlu0 %v1097, 16
      %v1174 = vpop.permute.xlu0 %1173
      %1175 = vrot.lane.b32.xlu0 %v1098, 16
      %v1176 = vpop.permute.xlu0 %1175
      %1177 = vrot.lane.b32.xlu0 %v1099, 16
      %v1178 = vpop.permute.xlu0 %1177
      %1179 = vrot.lane.b32.xlu0 %v1100, 16
      %v1180 = vpop.permute.xlu0 %1179
      %1181 = vrot.lane.b32.xlu0 %v1101, 16
      %v1182 = vpop.permute.xlu0 %1181
      %1183 = vrot.lane.b32.xlu0 %v1102, 16
      %v1184 = vpop.permute.xlu0 %1183
      %1185 = vrot.lane.b32.xlu0 %v1103, 16
      %v1186 = vpop.permute.xlu0 %1185
      %1187 = vrot.lane.b32.xlu0 %v1104, 16
      %v1188 = vpop.permute.xlu0 %1187
      %1189 = vrot.lane.b32.xlu0 %v1105, 16
      %v1190 = vpop.permute.xlu0 %1189
      %1191 = vrot.lane.b32.xlu0 %v1106, 16
      %v1192 = vpop.permute.xlu0 %1191
      %1193 = vrot.lane.b32.xlu0 %v1107, 16
      %v1194 = vpop.permute.xlu0 %1193
      %1195 = vrot.lane.b32.xlu0 %v1108, 16
      %v1196 = vpop.permute.xlu0 %1195
      %1197 = vrot.lane.b32.xlu0 %v1109, 16
      %v1198 = vpop.permute.xlu0 %1197
      %1199 = vrot.lane.b32.xlu0 %v1110, 16
      %v1200 = vpop.permute.xlu0 %1199
      %1201 = vrot.lane.b32.xlu0 %v1111, 16
      %v1202 = vpop.permute.xlu0 %1201
      %1203 = vrot.lane.b32.xlu0 %v1112, 16
      %v1204 = vpop.permute.xlu0 %1203
      %1205 = vrot.lane.b32.xlu0 %v1113, 16
      %v1206 = vpop.permute.xlu0 %1205
      %1207 = vrot.lane.b32.xlu0 %v1114, 16
      %v1208 = vpop.permute.xlu0 %1207
      %1209 = vrot.lane.b32.xlu0 %v1115, 16
      %v1210 = vpop.permute.xlu0 %1209
      %1211 = vrot.lane.b32.xlu0 %v1116, 16
      %v1212 = vpop.permute.xlu0 %1211
      %vm1245 = vcmask 162944
      %1246 = vst.msk [vmem:[#allocation3] sm:$0xff] %vm1245, %v1150
      %1247 = vst.msk [vmem:[#allocation3 + $0x8] sm:$0xff] %vm1245, %v1152
      %1248 = vst.msk [vmem:[#allocation3 + $0x10] sm:$0xff] %vm1245, %v1154
      %1249 = vst.msk [vmem:[#allocation3 + $0x18] sm:$0xff] %vm1245, %v1156
      %1250 = vst.msk [vmem:[#allocation3 + $0x20] sm:$0xff] %vm1245, %v1158
      %1251 = vst.msk [vmem:[#allocation3 + $0x28] sm:$0xff] %vm1245, %v1160
      %1252 = vst.msk [vmem:[#allocation3 + $0x30] sm:$0xff] %vm1245, %v1162
      %1253 = vst.msk [vmem:[#allocation3 + $0x38] sm:$0xff] %vm1245, %v1164
      %1254 = vst.msk [vmem:[#allocation3 + $0x40] sm:$0xff] %vm1245, %v1166
      %1255 = vst.msk [vmem:[#allocation3 + $0x48] sm:$0xff] %vm1245, %v1168
      %1256 = vst.msk [vmem:[#allocation3 + $0x50] sm:$0xff] %vm1245, %v1170
      %1257 = vst.msk [vmem:[#allocation3 + $0x58] sm:$0xff] %vm1245, %v1172
      %1258 = vst.msk [vmem:[#allocation3 + $0x60] sm:$0xff] %vm1245, %v1174
      %1259 = vst.msk [vmem:[#allocation3 + $0x68] sm:$0xff] %vm1245, %v1176
      %1260 = vst.msk [vmem:[#allocation3 + $0x70] sm:$0xff] %vm1245, %v1178
      %1261 = vst.msk [vmem:[#allocation3 + $0x78] sm:$0xff] %vm1245, %v1180
      %1262 = vst.msk [vmem:[#allocation3 + $0x80] sm:$0xff] %vm1245, %v1182
      %1263 = vst.msk [vmem:[#allocation3 + $0x88] sm:$0xff] %vm1245, %v1184
      %1264 = vst.msk [vmem:[#allocation3 + $0x90] sm:$0xff] %vm1245, %v1186
      %1265 = vst.msk [vmem:[#allocation3 + $0x98] sm:$0xff] %vm1245, %v1188
      %1266 = vst.msk [vmem:[#allocation3 + $0xa0] sm:$0xff] %vm1245, %v1190
      %1267 = vst.msk [vmem:[#allocation3 + $0xa8] sm:$0xff] %vm1245, %v1192
      %1268 = vst.msk [vmem:[#allocation3 + $0xb0] sm:$0xff] %vm1245, %v1194
      %1269 = vst.msk [vmem:[#allocation3 + $0xb8] sm:$0xff] %vm1245, %v1196
      %1270 = vst.msk [vmem:[#allocation3 + $0xc0] sm:$0xff] %vm1245, %v1198
      %1271 = vst.msk [vmem:[#allocation3 + $0xc8] sm:$0xff] %vm1245, %v1200
      %1272 = vst.msk [vmem:[#allocation3 + $0xd0] sm:$0xff] %vm1245, %v1202
      %1273 = vst.msk [vmem:[#allocation3 + $0xd8] sm:$0xff] %vm1245, %v1204
      %1274 = vst.msk [vmem:[#allocation3 + $0xe0] sm:$0xff] %vm1245, %v1206
      %1275 = vst.msk [vmem:[#allocation3 + $0xe8] sm:$0xff] %vm1245, %v1208
      %1276 = vst.msk [vmem:[#allocation3 + $0xf0] sm:$0xff] %vm1245, %v1210
      %1277 = vst.msk [vmem:[#allocation3 + $0xf8] sm:$0xff] %vm1245, %v1212
      %v1278 = vld [vmem:[%s376 + $0x2] sm:$0xff]
      %v1279 = vld [vmem:[%s376 + $0xa] sm:$0xff]
      %v1280 = vld [vmem:[%s376 + $0x1a] sm:$0xff]
      %v1281 = vld [vmem:[%s376 + $0x22] sm:$0xff]
      %v1282 = vld [vmem:[%s376 + $0x32] sm:$0xff]
      %v1283 = vld [vmem:[%s376 + $0x3a] sm:$0xff]
      %v1284 = vld [vmem:[%s376 + $0x4a] sm:$0xff]
      %v1285 = vld [vmem:[%s376 + $0x52] sm:$0xff]
      %v1286 = vld [vmem:[%s376 + $0x62] sm:$0xff]
      %v1287 = vld [vmem:[%s376 + $0x6a] sm:$0xff]
      %v1288 = vld [vmem:[%s376 + $0x7a] sm:$0xff]
      %v1289 = vld [vmem:[%s376 + $0x82] sm:$0xff]
      %v1290 = vld [vmem:[%s376 + $0x92] sm:$0xff]
      %v1291 = vld [vmem:[%s376 + $0x9a] sm:$0xff]
      %v1292 = vld [vmem:[%s376 + $0xaa] sm:$0xff]
      %v1293 = vld [vmem:[%s376 + $0xb2] sm:$0xff]
      %v1294 = vld [vmem:[%s376 + $0xc2] sm:$0xff]
      %v1295 = vld [vmem:[%s376 + $0xca] sm:$0xff]
      %v1296 = vld [vmem:[%s376 + $0xda] sm:$0xff]
      %v1297 = vld [vmem:[%s376 + $0xe2] sm:$0xff]
      %v1298 = vld [vmem:[%s376 + $0xf2] sm:$0xff]
      %v1299 = vld [vmem:[%s376 + $0xfa] sm:$0xff]
      %v1300 = vld [vmem:[%s376 + $0x10a] sm:$0xff]
      %v1301 = vld [vmem:[%s376 + $0x112] sm:$0xff]
      %v1302 = vld [vmem:[%s376 + $0x122] sm:$0xff]
      %v1303 = vld [vmem:[%s376 + $0x12a] sm:$0xff]
      %v1304 = vld [vmem:[%s376 + $0x13a] sm:$0xff]
      %v1305 = vld [vmem:[%s376 + $0x142] sm:$0xff]
      %v1306 = vld [vmem:[%s376 + $0x152] sm:$0xff]
      %v1307 = vld [vmem:[%s376 + $0x15a] sm:$0xff]
      %v1308 = vld [vmem:[%s376 + $0x16a] sm:$0xff]
      %v1309 = vld [vmem:[%s376 + $0x172] sm:$0xff]
      %1342 = vrot.lane.b32.xlu0 %v1278, 20
      %v1343 = vpop.permute.xlu0 %1342
      %1344 = vrot.lane.b32.xlu0 %v1279, 20
      %v1345 = vpop.permute.xlu0 %1344
      %1346 = vrot.lane.b32.xlu0 %v1280, 20
      %v1347 = vpop.permute.xlu0 %1346
      %1348 = vrot.lane.b32.xlu0 %v1281, 20
      %v1349 = vpop.permute.xlu0 %1348
      %1350 = vrot.lane.b32.xlu0 %v1282, 20
      %v1351 = vpop.permute.xlu0 %1350
      %1352 = vrot.lane.b32.xlu0 %v1283, 20
      %v1353 = vpop.permute.xlu0 %1352
      %1354 = vrot.lane.b32.xlu0 %v1284, 20
      %v1355 = vpop.permute.xlu0 %1354
      %1356 = vrot.lane.b32.xlu0 %v1285, 20
      %v1357 = vpop.permute.xlu0 %1356
      %1358 = vrot.lane.b32.xlu0 %v1286, 20
      %v1359 = vpop.permute.xlu0 %1358
      %1360 = vrot.lane.b32.xlu0 %v1287, 20
      %v1361 = vpop.permute.xlu0 %1360
      %1362 = vrot.lane.b32.xlu0 %v1288, 20
      %v1363 = vpop.permute.xlu0 %1362
      %1364 = vrot.lane.b32.xlu0 %v1289, 20
      %v1365 = vpop.permute.xlu0 %1364
      %1366 = vrot.lane.b32.xlu0 %v1290, 20
      %v1367 = vpop.permute.xlu0 %1366
      %1368 = vrot.lane.b32.xlu0 %v1291, 20
      %v1369 = vpop.permute.xlu0 %1368
      %1370 = vrot.lane.b32.xlu0 %v1292, 20
      %v1371 = vpop.permute.xlu0 %1370
      %1372 = vrot.lane.b32.xlu0 %v1293, 20
      %v1373 = vpop.permute.xlu0 %1372
      %1374 = vrot.lane.b32.xlu0 %v1294, 20
      %v1375 = vpop.permute.xlu0 %1374
      %1376 = vrot.lane.b32.xlu0 %v1295, 20
      %v1377 = vpop.permute.xlu0 %1376
      %1378 = vrot.lane.b32.xlu0 %v1296, 20
      %v1379 = vpop.permute.xlu0 %1378
      %1380 = vrot.lane.b32.xlu0 %v1297, 20
      %v1381 = vpop.permute.xlu0 %1380
      %1382 = vrot.lane.b32.xlu0 %v1298, 20
      %v1383 = vpop.permute.xlu0 %1382
      %1384 = vrot.lane.b32.xlu0 %v1299, 20
      %v1385 = vpop.permute.xlu0 %1384
      %1386 = vrot.lane.b32.xlu0 %v1300, 20
      %v1387 = vpop.permute.xlu0 %1386
      %1388 = vrot.lane.b32.xlu0 %v1301, 20
      %v1389 = vpop.permute.xlu0 %1388
      %1390 = vrot.lane.b32.xlu0 %v1302, 20
      %v1391 = vpop.permute.xlu0 %1390
      %1392 = vrot.lane.b32.xlu0 %v1303, 20
      %v1393 = vpop.permute.xlu0 %1392
      %1394 = vrot.lane.b32.xlu0 %v1304, 20
      %v1395 = vpop.permute.xlu0 %1394
      %1396 = vrot.lane.b32.xlu0 %v1305, 20
      %v1397 = vpop.permute.xlu0 %1396
      %1398 = vrot.lane.b32.xlu0 %v1306, 20
      %v1399 = vpop.permute.xlu0 %1398
      %1400 = vrot.lane.b32.xlu0 %v1307, 20
      %v1401 = vpop.permute.xlu0 %1400
      %1402 = vrot.lane.b32.xlu0 %v1308, 20
      %v1403 = vpop.permute.xlu0 %1402
      %1404 = vrot.lane.b32.xlu0 %v1309, 20
      %v1405 = vpop.permute.xlu0 %1404
      %vm1438 = vcmask 195744
      %1439 = vst.msk [vmem:[#allocation3] sm:$0xff] %vm1438, %v1343
      %1440 = vst.msk [vmem:[#allocation3 + $0x8] sm:$0xff] %vm1438, %v1345
      %1441 = vst.msk [vmem:[#allocation3 + $0x10] sm:$0xff] %vm1438, %v1347
      %1442 = vst.msk [vmem:[#allocation3 + $0x18] sm:$0xff] %vm1438, %v1349
      %1443 = vst.msk [vmem:[#allocation3 + $0x20] sm:$0xff] %vm1438, %v1351
      %1444 = vst.msk [vmem:[#allocation3 + $0x28] sm:$0xff] %vm1438, %v1353
      %1445 = vst.msk [vmem:[#allocation3 + $0x30] sm:$0xff] %vm1438, %v1355
      %1446 = vst.msk [vmem:[#allocation3 + $0x38] sm:$0xff] %vm1438, %v1357
      %1447 = vst.msk [vmem:[#allocation3 + $0x40] sm:$0xff] %vm1438, %v1359
      %1448 = vst.msk [vmem:[#allocation3 + $0x48] sm:$0xff] %vm1438, %v1361
      %1449 = vst.msk [vmem:[#allocation3 + $0x50] sm:$0xff] %vm1438, %v1363
      %1450 = vst.msk [vmem:[#allocation3 + $0x58] sm:$0xff] %vm1438, %v1365
      %1451 = vst.msk [vmem:[#allocation3 + $0x60] sm:$0xff] %vm1438, %v1367
      %1452 = vst.msk [vmem:[#allocation3 + $0x68] sm:$0xff] %vm1438, %v1369
      %1453 = vst.msk [vmem:[#allocation3 + $0x70] sm:$0xff] %vm1438, %v1371
      %1454 = vst.msk [vmem:[#allocation3 + $0x78] sm:$0xff] %vm1438, %v1373
      %1455 = vst.msk [vmem:[#allocation3 + $0x80] sm:$0xff] %vm1438, %v1375
      %1456 = vst.msk [vmem:[#allocation3 + $0x88] sm:$0xff] %vm1438, %v1377
      %1457 = vst.msk [vmem:[#allocation3 + $0x90] sm:$0xff] %vm1438, %v1379
      %1458 = vst.msk [vmem:[#allocation3 + $0x98] sm:$0xff] %vm1438, %v1381
      %1459 = vst.msk [vmem:[#allocation3 + $0xa0] sm:$0xff] %vm1438, %v1383
      %1460 = vst.msk [vmem:[#allocation3 + $0xa8] sm:$0xff] %vm1438, %v1385
      %1461 = vst.msk [vmem:[#allocation3 + $0xb0] sm:$0xff] %vm1438, %v1387
      %1462 = vst.msk [vmem:[#allocation3 + $0xb8] sm:$0xff] %vm1438, %v1389
      %1463 = vst.msk [vmem:[#allocation3 + $0xc0] sm:$0xff] %vm1438, %v1391
      %1464 = vst.msk [vmem:[#allocation3 + $0xc8] sm:$0xff] %vm1438, %v1393
      %1465 = vst.msk [vmem:[#allocation3 + $0xd0] sm:$0xff] %vm1438, %v1395
      %1466 = vst.msk [vmem:[#allocation3 + $0xd8] sm:$0xff] %vm1438, %v1397
      %1467 = vst.msk [vmem:[#allocation3 + $0xe0] sm:$0xff] %vm1438, %v1399
      %1468 = vst.msk [vmem:[#allocation3 + $0xe8] sm:$0xff] %vm1438, %v1401
      %1469 = vst.msk [vmem:[#allocation3 + $0xf0] sm:$0xff] %vm1438, %v1403
      %1470 = vst.msk [vmem:[#allocation3 + $0xf8] sm:$0xff] %vm1438, %v1405
      %s1471 = scalar_lea.vmem [#allocation2], 48
      %v1472 = vld [vmem:[%s1471] sm:$0xff]
      %v1473 = vld [vmem:[%s1471 + $0x8] sm:$0xff]
      %v1474 = vld [vmem:[%s1471 + $0x18] sm:$0xff]
      %v1475 = vld [vmem:[%s1471 + $0x20] sm:$0xff]
      %v1476 = vld [vmem:[%s1471 + $0x30] sm:$0xff]
      %v1477 = vld [vmem:[%s1471 + $0x38] sm:$0xff]
      %v1478 = vld [vmem:[%s1471 + $0x48] sm:$0xff]
      %v1479 = vld [vmem:[%s1471 + $0x50] sm:$0xff]
      %v1480 = vld [vmem:[%s1471 + $0x60] sm:$0xff]
      %v1481 = vld [vmem:[%s1471 + $0x68] sm:$0xff]
      %v1482 = vld [vmem:[%s1471 + $0x78] sm:$0xff]
      %v1483 = vld [vmem:[%s1471 + $0x80] sm:$0xff]
      %v1484 = vld [vmem:[%s1471 + $0x90] sm:$0xff]
      %v1485 = vld [vmem:[%s1471 + $0x98] sm:$0xff]
      %v1486 = vld [vmem:[%s1471 + $0xa8] sm:$0xff]
      %v1487 = vld [vmem:[%s1471 + $0xb0] sm:$0xff]
      %v1488 = vld [vmem:[%s1471 + $0xc0] sm:$0xff]
      %v1489 = vld [vmem:[%s1471 + $0xc8] sm:$0xff]
      %v1490 = vld [vmem:[%s1471 + $0xd8] sm:$0xff]
      %v1491 = vld [vmem:[%s1471 + $0xe0] sm:$0xff]
      %v1492 = vld [vmem:[%s1471 + $0xf0] sm:$0xff]
      %v1493 = vld [vmem:[%s1471 + $0xf8] sm:$0xff]
      %v1494 = vld [vmem:[%s1471 + $0x108] sm:$0xff]
      %v1495 = vld [vmem:[%s1471 + $0x110] sm:$0xff]
      %v1496 = vld [vmem:[%s1471 + $0x120] sm:$0xff]
      %v1497 = vld [vmem:[%s1471 + $0x128] sm:$0xff]
      %v1498 = vld [vmem:[%s1471 + $0x138] sm:$0xff]
      %v1499 = vld [vmem:[%s1471 + $0x140] sm:$0xff]
      %v1500 = vld [vmem:[%s1471 + $0x150] sm:$0xff]
      %v1501 = vld [vmem:[%s1471 + $0x158] sm:$0xff]
      %v1502 = vld [vmem:[%s1471 + $0x168] sm:$0xff]
      %v1503 = vld [vmem:[%s1471 + $0x170] sm:$0xff]
      %1536 = vrot.lane.b32.xlu0 %v1472, 24
      %v1537 = vpop.permute.xlu0 %1536
      %1538 = vrot.lane.b32.xlu0 %v1473, 24
      %v1539 = vpop.permute.xlu0 %1538
      %1540 = vrot.lane.b32.xlu0 %v1474, 24
      %v1541 = vpop.permute.xlu0 %1540
      %1542 = vrot.lane.b32.xlu0 %v1475, 24
      %v1543 = vpop.permute.xlu0 %1542
      %1544 = vrot.lane.b32.xlu0 %v1476, 24
      %v1545 = vpop.permute.xlu0 %1544
      %1546 = vrot.lane.b32.xlu0 %v1477, 24
      %v1547 = vpop.permute.xlu0 %1546
      %1548 = vrot.lane.b32.xlu0 %v1478, 24
      %v1549 = vpop.permute.xlu0 %1548
      %1550 = vrot.lane.b32.xlu0 %v1479, 24
      %v1551 = vpop.permute.xlu0 %1550
      %1552 = vrot.lane.b32.xlu0 %v1480, 24
      %v1553 = vpop.permute.xlu0 %1552
      %1554 = vrot.lane.b32.xlu0 %v1481, 24
      %v1555 = vpop.permute.xlu0 %1554
      %1556 = vrot.lane.b32.xlu0 %v1482, 24
      %v1557 = vpop.permute.xlu0 %1556
      %1558 = vrot.lane.b32.xlu0 %v1483, 24
      %v1559 = vpop.permute.xlu0 %1558
      %1560 = vrot.lane.b32.xlu0 %v1484, 24
      %v1561 = vpop.permute.xlu0 %1560
      %1562 = vrot.lane.b32.xlu0 %v1485, 24
      %v1563 = vpop.permute.xlu0 %1562
      %1564 = vrot.lane.b32.xlu0 %v1486, 24
      %v1565 = vpop.permute.xlu0 %1564
      %1566 = vrot.lane.b32.xlu0 %v1487, 24
      %v1567 = vpop.permute.xlu0 %1566
      %1568 = vrot.lane.b32.xlu0 %v1488, 24
      %v1569 = vpop.permute.xlu0 %1568
      %1570 = vrot.lane.b32.xlu0 %v1489, 24
      %v1571 = vpop.permute.xlu0 %1570
      %1572 = vrot.lane.b32.xlu0 %v1490, 24
      %v1573 = vpop.permute.xlu0 %1572
      %1574 = vrot.lane.b32.xlu0 %v1491, 24
      %v1575 = vpop.permute.xlu0 %1574
      %1576 = vrot.lane.b32.xlu0 %v1492, 24
      %v1577 = vpop.permute.xlu0 %1576
      %1578 = vrot.lane.b32.xlu0 %v1493, 24
      %v1579 = vpop.permute.xlu0 %1578
      %1580 = vrot.lane.b32.xlu0 %v1494, 24
      %v1581 = vpop.permute.xlu0 %1580
      %1582 = vrot.lane.b32.xlu0 %v1495, 24
      %v1583 = vpop.permute.xlu0 %1582
      %1584 = vrot.lane.b32.xlu0 %v1496, 24
      %v1585 = vpop.permute.xlu0 %1584
      %1586 = vrot.lane.b32.xlu0 %v1497, 24
      %v1587 = vpop.permute.xlu0 %1586
      %1588 = vrot.lane.b32.xlu0 %v1498, 24
      %v1589 = vpop.permute.xlu0 %1588
      %1590 = vrot.lane.b32.xlu0 %v1499, 24
      %v1591 = vpop.permute.xlu0 %1590
      %1592 = vrot.lane.b32.xlu0 %v1500, 24
      %v1593 = vpop.permute.xlu0 %1592
      %1594 = vrot.lane.b32.xlu0 %v1501, 24
      %v1595 = vpop.permute.xlu0 %1594
      %1596 = vrot.lane.b32.xlu0 %v1502, 24
      %v1597 = vpop.permute.xlu0 %1596
      %1598 = vrot.lane.b32.xlu0 %v1503, 24
      %v1599 = vpop.permute.xlu0 %1598
      %vm1632 = vcmask 228544
      %1633 = vst.msk [vmem:[#allocation3] sm:$0xff] %vm1632, %v1537
      %1634 = vst.msk [vmem:[#allocation3 + $0x8] sm:$0xff] %vm1632, %v1539
      %1635 = vst.msk [vmem:[#allocation3 + $0x10] sm:$0xff] %vm1632, %v1541
      %1636 = vst.msk [vmem:[#allocation3 + $0x18] sm:$0xff] %vm1632, %v1543
      %1637 = vst.msk [vmem:[#allocation3 + $0x20] sm:$0xff] %vm1632, %v1545
      %1638 = vst.msk [vmem:[#allocation3 + $0x28] sm:$0xff] %vm1632, %v1547
      %1639 = vst.msk [vmem:[#allocation3 + $0x30] sm:$0xff] %vm1632, %v1549
      %1640 = vst.msk [vmem:[#allocation3 + $0x38] sm:$0xff] %vm1632, %v1551
      %1641 = vst.msk [vmem:[#allocation3 + $0x40] sm:$0xff] %vm1632, %v1553
      %1642 = vst.msk [vmem:[#allocation3 + $0x48] sm:$0xff] %vm1632, %v1555
      %1643 = vst.msk [vmem:[#allocation3 + $0x50] sm:$0xff] %vm1632, %v1557
      %1644 = vst.msk [vmem:[#allocation3 + $0x58] sm:$0xff] %vm1632, %v1559
      %1645 = vst.msk [vmem:[#allocation3 + $0x60] sm:$0xff] %vm1632, %v1561
      %1646 = vst.msk [vmem:[#allocation3 + $0x68] sm:$0xff] %vm1632, %v1563
      %1647 = vst.msk [vmem:[#allocation3 + $0x70] sm:$0xff] %vm1632, %v1565
      %1648 = vst.msk [vmem:[#allocation3 + $0x78] sm:$0xff] %vm1632, %v1567
      %1649 = vst.msk [vmem:[#allocation3 + $0x80] sm:$0xff] %vm1632, %v1569
      %1650 = vst.msk [vmem:[#allocation3 + $0x88] sm:$0xff] %vm1632, %v1571
      %1651 = vst.msk [vmem:[#allocation3 + $0x90] sm:$0xff] %vm1632, %v1573
      %1652 = vst.msk [vmem:[#allocation3 + $0x98] sm:$0xff] %vm1632, %v1575
      %1653 = vst.msk [vmem:[#allocation3 + $0xa0] sm:$0xff] %vm1632, %v1577
      %1654 = vst.msk [vmem:[#allocation3 + $0xa8] sm:$0xff] %vm1632, %v1579
      %1655 = vst.msk [vmem:[#allocation3 + $0xb0] sm:$0xff] %vm1632, %v1581
      %1656 = vst.msk [vmem:[#allocation3 + $0xb8] sm:$0xff] %vm1632, %v1583
      %1657 = vst.msk [vmem:[#allocation3 + $0xc0] sm:$0xff] %vm1632, %v1585
      %1658 = vst.msk [vmem:[#allocation3 + $0xc8] sm:$0xff] %vm1632, %v1587
      %1659 = vst.msk [vmem:[#allocation3 + $0xd0] sm:$0xff] %vm1632, %v1589
      %1660 = vst.msk [vmem:[#allocation3 + $0xd8] sm:$0xff] %vm1632, %v1591
      %1661 = vst.msk [vmem:[#allocation3 + $0xe0] sm:$0xff] %vm1632, %v1593
      %1662 = vst.msk [vmem:[#allocation3 + $0xe8] sm:$0xff] %vm1632, %v1595
      %1663 = vst.msk [vmem:[#allocation3 + $0xf0] sm:$0xff] %vm1632, %v1597
      %1664 = vst.msk [vmem:[#allocation3 + $0xf8] sm:$0xff] %vm1632, %v1599
      %v1665 = vld [vmem:[%s1471 + $0x1] sm:$0xff]
      %v1666 = vld [vmem:[%s1471 + $0x9] sm:$0xff]
      %v1667 = vld [vmem:[%s1471 + $0x19] sm:$0xff]
      %v1668 = vld [vmem:[%s1471 + $0x21] sm:$0xff]
      %v1669 = vld [vmem:[%s1471 + $0x31] sm:$0xff]
      %v1670 = vld [vmem:[%s1471 + $0x39] sm:$0xff]
      %v1671 = vld [vmem:[%s1471 + $0x49] sm:$0xff]
      %v1672 = vld [vmem:[%s1471 + $0x51] sm:$0xff]
      %v1673 = vld [vmem:[%s1471 + $0x61] sm:$0xff]
      %v1674 = vld [vmem:[%s1471 + $0x69] sm:$0xff]
      %v1675 = vld [vmem:[%s1471 + $0x79] sm:$0xff]
      %v1676 = vld [vmem:[%s1471 + $0x81] sm:$0xff]
      %v1677 = vld [vmem:[%s1471 + $0x91] sm:$0xff]
      %v1678 = vld [vmem:[%s1471 + $0x99] sm:$0xff]
      %v1679 = vld [vmem:[%s1471 + $0xa9] sm:$0xff]
      %v1680 = vld [vmem:[%s1471 + $0xb1] sm:$0xff]
      %v1681 = vld [vmem:[%s1471 + $0xc1] sm:$0xff]
      %v1682 = vld [vmem:[%s1471 + $0xc9] sm:$0xff]
      %v1683 = vld [vmem:[%s1471 + $0xd9] sm:$0xff]
      %v1684 = vld [vmem:[%s1471 + $0xe1] sm:$0xff]
      %v1685 = vld [vmem:[%s1471 + $0xf1] sm:$0xff]
      %v1686 = vld [vmem:[%s1471 + $0xf9] sm:$0xff]
      %v1687 = vld [vmem:[%s1471 + $0x109] sm:$0xff]
      %v1688 = vld [vmem:[%s1471 + $0x111] sm:$0xff]
      %v1689 = vld [vmem:[%s1471 + $0x121] sm:$0xff]
      %v1690 = vld [vmem:[%s1471 + $0x129] sm:$0xff]
      %v1691 = vld [vmem:[%s1471 + $0x139] sm:$0xff]
      %v1692 = vld [vmem:[%s1471 + $0x141] sm:$0xff]
      %v1693 = vld [vmem:[%s1471 + $0x151] sm:$0xff]
      %v1694 = vld [vmem:[%s1471 + $0x159] sm:$0xff]
      %v1695 = vld [vmem:[%s1471 + $0x169] sm:$0xff]
      %v1696 = vld [vmem:[%s1471 + $0x171] sm:$0xff]
      %1729 = vrot.lane.b32.xlu0 %v1665, 28
      %v1730 = vpop.permute.xlu0 %1729
      %1731 = vrot.lane.b32.xlu0 %v1666, 28
      %v1732 = vpop.permute.xlu0 %1731
      %1733 = vrot.lane.b32.xlu0 %v1667, 28
      %v1734 = vpop.permute.xlu0 %1733
      %1735 = vrot.lane.b32.xlu0 %v1668, 28
      %v1736 = vpop.permute.xlu0 %1735
      %1737 = vrot.lane.b32.xlu0 %v1669, 28
      %v1738 = vpop.permute.xlu0 %1737
      %1739 = vrot.lane.b32.xlu0 %v1670, 28
      %v1740 = vpop.permute.xlu0 %1739
      %1741 = vrot.lane.b32.xlu0 %v1671, 28
      %v1742 = vpop.permute.xlu0 %1741
      %1743 = vrot.lane.b32.xlu0 %v1672, 28
      %v1744 = vpop.permute.xlu0 %1743
      %1745 = vrot.lane.b32.xlu0 %v1673, 28
      %v1746 = vpop.permute.xlu0 %1745
      %1747 = vrot.lane.b32.xlu0 %v1674, 28
      %v1748 = vpop.permute.xlu0 %1747
      %1749 = vrot.lane.b32.xlu0 %v1675, 28
      %v1750 = vpop.permute.xlu0 %1749
      %1751 = vrot.lane.b32.xlu0 %v1676, 28
      %v1752 = vpop.permute.xlu0 %1751
      %1753 = vrot.lane.b32.xlu0 %v1677, 28
      %v1754 = vpop.permute.xlu0 %1753
      %1755 = vrot.lane.b32.xlu0 %v1678, 28
      %v1756 = vpop.permute.xlu0 %1755
      %1757 = vrot.lane.b32.xlu0 %v1679, 28
      %v1758 = vpop.permute.xlu0 %1757
      %1759 = vrot.lane.b32.xlu0 %v1680, 28
      %v1760 = vpop.permute.xlu0 %1759
      %1761 = vrot.lane.b32.xlu0 %v1681, 28
      %v1762 = vpop.permute.xlu0 %1761
      %1763 = vrot.lane.b32.xlu0 %v1682, 28
      %v1764 = vpop.permute.xlu0 %1763
      %1765 = vrot.lane.b32.xlu0 %v1683, 28
      %v1766 = vpop.permute.xlu0 %1765
      %1767 = vrot.lane.b32.xlu0 %v1684, 28
      %v1768 = vpop.permute.xlu0 %1767
      %1769 = vrot.lane.b32.xlu0 %v1685, 28
      %v1770 = vpop.permute.xlu0 %1769
      %1771 = vrot.lane.b32.xlu0 %v1686, 28
      %v1772 = vpop.permute.xlu0 %1771
      %1773 = vrot.lane.b32.xlu0 %v1687, 28
      %v1774 = vpop.permute.xlu0 %1773
      %1775 = vrot.lane.b32.xlu0 %v1688, 28
      %v1776 = vpop.permute.xlu0 %1775
      %1777 = vrot.lane.b32.xlu0 %v1689, 28
      %v1778 = vpop.permute.xlu0 %1777
      %1779 = vrot.lane.b32.xlu0 %v1690, 28
      %v1780 = vpop.permute.xlu0 %1779
      %1781 = vrot.lane.b32.xlu0 %v1691, 28
      %v1782 = vpop.permute.xlu0 %1781
      %1783 = vrot.lane.b32.xlu0 %v1692, 28
      %v1784 = vpop.permute.xlu0 %1783
      %1785 = vrot.lane.b32.xlu0 %v1693, 28
      %v1786 = vpop.permute.xlu0 %1785
      %1787 = vrot.lane.b32.xlu0 %v1694, 28
      %v1788 = vpop.permute.xlu0 %1787
      %1789 = vrot.lane.b32.xlu0 %v1695, 28
      %v1790 = vpop.permute.xlu0 %1789
      %1791 = vrot.lane.b32.xlu0 %v1696, 28
      %v1792 = vpop.permute.xlu0 %1791
      %vm1825 = vcmask 261344
      %1826 = vst.msk [vmem:[#allocation3] sm:$0xff] %vm1825, %v1730
      %1827 = vst.msk [vmem:[#allocation3 + $0x8] sm:$0xff] %vm1825, %v1732
      %1828 = vst.msk [vmem:[#allocation3 + $0x10] sm:$0xff] %vm1825, %v1734
      %1829 = vst.msk [vmem:[#allocation3 + $0x18] sm:$0xff] %vm1825, %v1736
      %1830 = vst.msk [vmem:[#allocation3 + $0x20] sm:$0xff] %vm1825, %v1738
      %1831 = vst.msk [vmem:[#allocation3 + $0x28] sm:$0xff] %vm1825, %v1740
      %1832 = vst.msk [vmem:[#allocation3 + $0x30] sm:$0xff] %vm1825, %v1742
      %1833 = vst.msk [vmem:[#allocation3 + $0x38] sm:$0xff] %vm1825, %v1744
      %1834 = vst.msk [vmem:[#allocation3 + $0x40] sm:$0xff] %vm1825, %v1746
      %1835 = vst.msk [vmem:[#allocation3 + $0x48] sm:$0xff] %vm1825, %v1748
      %1836 = vst.msk [vmem:[#allocation3 + $0x50] sm:$0xff] %vm1825, %v1750
      %1837 = vst.msk [vmem:[#allocation3 + $0x58] sm:$0xff] %vm1825, %v1752
      %1838 = vst.msk [vmem:[#allocation3 + $0x60] sm:$0xff] %vm1825, %v1754
      %1839 = vst.msk [vmem:[#allocation3 + $0x68] sm:$0xff] %vm1825, %v1756
      %1840 = vst.msk [vmem:[#allocation3 + $0x70] sm:$0xff] %vm1825, %v1758
      %1841 = vst.msk [vmem:[#allocation3 + $0x78] sm:$0xff] %vm1825, %v1760
      %1842 = vst.msk [vmem:[#allocation3 + $0x80] sm:$0xff] %vm1825, %v1762
      %1843 = vst.msk [vmem:[#allocation3 + $0x88] sm:$0xff] %vm1825, %v1764
      %1844 = vst.msk [vmem:[#allocation3 + $0x90] sm:$0xff] %vm1825, %v1766
      %1845 = vst.msk [vmem:[#allocation3 + $0x98] sm:$0xff] %vm1825, %v1768
      %1846 = vst.msk [vmem:[#allocation3 + $0xa0] sm:$0xff] %vm1825, %v1770
      %1847 = vst.msk [vmem:[#allocation3 + $0xa8] sm:$0xff] %vm1825, %v1772
      %1848 = vst.msk [vmem:[#allocation3 + $0xb0] sm:$0xff] %vm1825, %v1774
      %1849 = vst.msk [vmem:[#allocation3 + $0xb8] sm:$0xff] %vm1825, %v1776
      %1850 = vst.msk [vmem:[#allocation3 + $0xc0] sm:$0xff] %vm1825, %v1778
      %1851 = vst.msk [vmem:[#allocation3 + $0xc8] sm:$0xff] %vm1825, %v1780
      %1852 = vst.msk [vmem:[#allocation3 + $0xd0] sm:$0xff] %vm1825, %v1782
      %1853 = vst.msk [vmem:[#allocation3 + $0xd8] sm:$0xff] %vm1825, %v1784
      %1854 = vst.msk [vmem:[#allocation3 + $0xe0] sm:$0xff] %vm1825, %v1786
      %1855 = vst.msk [vmem:[#allocation3 + $0xe8] sm:$0xff] %vm1825, %v1788
      %1856 = vst.msk [vmem:[#allocation3 + $0xf0] sm:$0xff] %vm1825, %v1790
      %1857 = vst.msk [vmem:[#allocation3 + $0xf8] sm:$0xff] %vm1825, %v1792
      %v1858 = vld [vmem:[%s1471 + $0x2] sm:$0xff]
      %v1859 = vld [vmem:[%s1471 + $0xa] sm:$0xff]
      %v1860 = vld [vmem:[%s1471 + $0x1a] sm:$0xff]
      %v1861 = vld [vmem:[%s1471 + $0x22] sm:$0xff]
      %v1862 = vld [vmem:[%s1471 + $0x32] sm:$0xff]
      %v1863 = vld [vmem:[%s1471 + $0x3a] sm:$0xff]
      %v1864 = vld [vmem:[%s1471 + $0x4a] sm:$0xff]
      %v1865 = vld [vmem:[%s1471 + $0x52] sm:$0xff]
      %v1866 = vld [vmem:[%s1471 + $0x62] sm:$0xff]
      %v1867 = vld [vmem:[%s1471 + $0x6a] sm:$0xff]
      %v1868 = vld [vmem:[%s1471 + $0x7a] sm:$0xff]
      %v1869 = vld [vmem:[%s1471 + $0x82] sm:$0xff]
      %v1870 = vld [vmem:[%s1471 + $0x92] sm:$0xff]
      %v1871 = vld [vmem:[%s1471 + $0x9a] sm:$0xff]
      %v1872 = vld [vmem:[%s1471 + $0xaa] sm:$0xff]
      %v1873 = vld [vmem:[%s1471 + $0xb2] sm:$0xff]
      %v1874 = vld [vmem:[%s1471 + $0xc2] sm:$0xff]
      %v1875 = vld [vmem:[%s1471 + $0xca] sm:$0xff]
      %v1876 = vld [vmem:[%s1471 + $0xda] sm:$0xff]
      %v1877 = vld [vmem:[%s1471 + $0xe2] sm:$0xff]
      %v1878 = vld [vmem:[%s1471 + $0xf2] sm:$0xff]
      %v1879 = vld [vmem:[%s1471 + $0xfa] sm:$0xff]
      %v1880 = vld [vmem:[%s1471 + $0x10a] sm:$0xff]
      %v1881 = vld [vmem:[%s1471 + $0x112] sm:$0xff]
      %v1882 = vld [vmem:[%s1471 + $0x122] sm:$0xff]
      %v1883 = vld [vmem:[%s1471 + $0x12a] sm:$0xff]
      %v1884 = vld [vmem:[%s1471 + $0x13a] sm:$0xff]
      %v1885 = vld [vmem:[%s1471 + $0x142] sm:$0xff]
      %v1886 = vld [vmem:[%s1471 + $0x152] sm:$0xff]
      %v1887 = vld [vmem:[%s1471 + $0x15a] sm:$0xff]
      %v1888 = vld [vmem:[%s1471 + $0x16a] sm:$0xff]
      %v1889 = vld [vmem:[%s1471 + $0x172] sm:$0xff]
      %1922 = vrot.lane.b32.xlu0 %v1858, 32
      %v1923 = vpop.permute.xlu0 %1922
      %1924 = vrot.lane.b32.xlu0 %v1859, 32
      %v1925 = vpop.permute.xlu0 %1924
      %1926 = vrot.lane.b32.xlu0 %v1860, 32
      %v1927 = vpop.permute.xlu0 %1926
      %1928 = vrot.lane.b32.xlu0 %v1861, 32
      %v1929 = vpop.permute.xlu0 %1928
      %1930 = vrot.lane.b32.xlu0 %v1862, 32
      %v1931 = vpop.permute.xlu0 %1930
      %1932 = vrot.lane.b32.xlu0 %v1863, 32
      %v1933 = vpop.permute.xlu0 %1932
      %1934 = vrot.lane.b32.xlu0 %v1864, 32
      %v1935 = vpop.permute.xlu0 %1934
      %1936 = vrot.lane.b32.xlu0 %v1865, 32
      %v1937 = vpop.permute.xlu0 %1936
      %1938 = vrot.lane.b32.xlu0 %v1866, 32
      %v1939 = vpop.permute.xlu0 %1938
      %1940 = vrot.lane.b32.xlu0 %v1867, 32
      %v1941 = vpop.permute.xlu0 %1940
      %1942 = vrot.lane.b32.xlu0 %v1868, 32
      %v1943 = vpop.permute.xlu0 %1942
      %1944 = vrot.lane.b32.xlu0 %v1869, 32
      %v1945 = vpop.permute.xlu0 %1944
      %1946 = vrot.lane.b32.xlu0 %v1870, 32
      %v1947 = vpop.permute.xlu0 %1946
      %1948 = vrot.lane.b32.xlu0 %v1871, 32
      %v1949 = vpop.permute.xlu0 %1948
      %1950 = vrot.lane.b32.xlu0 %v1872, 32
      %v1951 = vpop.permute.xlu0 %1950
      %1952 = vrot.lane.b32.xlu0 %v1873, 32
      %v1953 = vpop.permute.xlu0 %1952
      %1954 = vrot.lane.b32.xlu0 %v1874, 32
      %v1955 = vpop.permute.xlu0 %1954
      %1956 = vrot.lane.b32.xlu0 %v1875, 32
      %v1957 = vpop.permute.xlu0 %1956
      %1958 = vrot.lane.b32.xlu0 %v1876, 32
      %v1959 = vpop.permute.xlu0 %1958
      %1960 = vrot.lane.b32.xlu0 %v1877, 32
      %v1961 = vpop.permute.xlu0 %1960
      %1962 = vrot.lane.b32.xlu0 %v1878, 32
      %v1963 = vpop.permute.xlu0 %1962
      %1964 = vrot.lane.b32.xlu0 %v1879, 32
      %v1965 = vpop.permute.xlu0 %1964
      %1966 = vrot.lane.b32.xlu0 %v1880, 32
      %v1967 = vpop.permute.xlu0 %1966
      %1968 = vrot.lane.b32.xlu0 %v1881, 32
      %v1969 = vpop.permute.xlu0 %1968
      %1970 = vrot.lane.b32.xlu0 %v1882, 32
      %v1971 = vpop.permute.xlu0 %1970
      %1972 = vrot.lane.b32.xlu0 %v1883, 32
      %v1973 = vpop.permute.xlu0 %1972
      %1974 = vrot.lane.b32.xlu0 %v1884, 32
      %v1975 = vpop.permute.xlu0 %1974
      %1976 = vrot.lane.b32.xlu0 %v1885, 32
      %v1977 = vpop.permute.xlu0 %1976
      %1978 = vrot.lane.b32.xlu0 %v1886, 32
      %v1979 = vpop.permute.xlu0 %1978
      %1980 = vrot.lane.b32.xlu0 %v1887, 32
      %v1981 = vpop.permute.xlu0 %1980
      %1982 = vrot.lane.b32.xlu0 %v1888, 32
      %v1983 = vpop.permute.xlu0 %1982
      %1984 = vrot.lane.b32.xlu0 %v1889, 32
      %v1985 = vpop.permute.xlu0 %1984
      %vm2018 = vcmask 294144
      %2019 = vst.msk [vmem:[#allocation3] sm:$0xff] %vm2018, %v1923
      %2020 = vst.msk [vmem:[#allocation3 + $0x8] sm:$0xff] %vm2018, %v1925
      %2021 = vst.msk [vmem:[#allocation3 + $0x10] sm:$0xff] %vm2018, %v1927
      %2022 = vst.msk [vmem:[#allocation3 + $0x18] sm:$0xff] %vm2018, %v1929
      %2023 = vst.msk [vmem:[#allocation3 + $0x20] sm:$0xff] %vm2018, %v1931
      %2024 = vst.msk [vmem:[#allocation3 + $0x28] sm:$0xff] %vm2018, %v1933
      %2025 = vst.msk [vmem:[#allocation3 + $0x30] sm:$0xff] %vm2018, %v1935
      %2026 = vst.msk [vmem:[#allocation3 + $0x38] sm:$0xff] %vm2018, %v1937
      %2027 = vst.msk [vmem:[#allocation3 + $0x40] sm:$0xff] %vm2018, %v1939
      %2028 = vst.msk [vmem:[#allocation3 + $0x48] sm:$0xff] %vm2018, %v1941
      %2029 = vst.msk [vmem:[#allocation3 + $0x50] sm:$0xff] %vm2018, %v1943
      %2030 = vst.msk [vmem:[#allocation3 + $0x58] sm:$0xff] %vm2018, %v1945
      %2031 = vst.msk [vmem:[#allocation3 + $0x60] sm:$0xff] %vm2018, %v1947
      %2032 = vst.msk [vmem:[#allocation3 + $0x68] sm:$0xff] %vm2018, %v1949
      %2033 = vst.msk [vmem:[#allocation3 + $0x70] sm:$0xff] %vm2018, %v1951
      %2034 = vst.msk [vmem:[#allocation3 + $0x78] sm:$0xff] %vm2018, %v1953
      %2035 = vst.msk [vmem:[#allocation3 + $0x80] sm:$0xff] %vm2018, %v1955
      %2036 = vst.msk [vmem:[#allocation3 + $0x88] sm:$0xff] %vm2018, %v1957
      %2037 = vst.msk [vmem:[#allocation3 + $0x90] sm:$0xff] %vm2018, %v1959
      %2038 = vst.msk [vmem:[#allocation3 + $0x98] sm:$0xff] %vm2018, %v1961
      %2039 = vst.msk [vmem:[#allocation3 + $0xa0] sm:$0xff] %vm2018, %v1963
      %2040 = vst.msk [vmem:[#allocation3 + $0xa8] sm:$0xff] %vm2018, %v1965
      %2041 = vst.msk [vmem:[#allocation3 + $0xb0] sm:$0xff] %vm2018, %v1967
      %2042 = vst.msk [vmem:[#allocation3 + $0xb8] sm:$0xff] %vm2018, %v1969
      %2043 = vst.msk [vmem:[#allocation3 + $0xc0] sm:$0xff] %vm2018, %v1971
      %2044 = vst.msk [vmem:[#allocation3 + $0xc8] sm:$0xff] %vm2018, %v1973
      %2045 = vst.msk [vmem:[#allocation3 + $0xd0] sm:$0xff] %vm2018, %v1975
      %2046 = vst.msk [vmem:[#allocation3 + $0xd8] sm:$0xff] %vm2018, %v1977
      %2047 = vst.msk [vmem:[#allocation3 + $0xe0] sm:$0xff] %vm2018, %v1979
      %2048 = vst.msk [vmem:[#allocation3 + $0xe8] sm:$0xff] %vm2018, %v1981
      %2049 = vst.msk [vmem:[#allocation3 + $0xf0] sm:$0xff] %vm2018, %v1983
      %2050 = vst.msk [vmem:[#allocation3 + $0xf8] sm:$0xff] %vm2018, %v1985
      %v2051 = vld [vmem:[#allocation3] sm:$0xff]
      %v2052 = vld [vmem:[#allocation3 + $0x8] sm:$0xff]
      %v2053 = vld [vmem:[#allocation3 + $0x10] sm:$0xff]
      %v2054 = vld [vmem:[#allocation3 + $0x18] sm:$0xff]
      %v2055 = vld [vmem:[#allocation3 + $0x20] sm:$0xff]
      %v2056 = vld [vmem:[#allocation3 + $0x28] sm:$0xff]
      %v2057 = vld [vmem:[#allocation3 + $0x30] sm:$0xff]
      %v2058 = vld [vmem:[#allocation3 + $0x38] sm:$0xff]
      %v2059 = vld [vmem:[#allocation3 + $0x40] sm:$0xff]
      %v2060 = vld [vmem:[#allocation3 + $0x48] sm:$0xff]
      %v2061 = vld [vmem:[#allocation3 + $0x50] sm:$0xff]
      %v2062 = vld [vmem:[#allocation3 + $0x58] sm:$0xff]
      %v2063 = vld [vmem:[#allocation3 + $0x60] sm:$0xff]
      %v2064 = vld [vmem:[#allocation3 + $0x68] sm:$0xff]
      %v2065 = vld [vmem:[#allocation3 + $0x70] sm:$0xff]
      %v2066 = vld [vmem:[#allocation3 + $0x78] sm:$0xff]
      %v2067 = vld [vmem:[#allocation3 + $0x80] sm:$0xff]
      %v2068 = vld [vmem:[#allocation3 + $0x88] sm:$0xff]
      %v2069 = vld [vmem:[#allocation3 + $0x90] sm:$0xff]
      %v2070 = vld [vmem:[#allocation3 + $0x98] sm:$0xff]
      %v2071 = vld [vmem:[#allocation3 + $0xa0] sm:$0xff]
      %v2072 = vld [vmem:[#allocation3 + $0xa8] sm:$0xff]
      %v2073 = vld [vmem:[#allocation3 + $0xb0] sm:$0xff]
      %v2074 = vld [vmem:[#allocation3 + $0xb8] sm:$0xff]
      %v2075 = vld [vmem:[#allocation3 + $0xc0] sm:$0xff]
      %v2076 = vld [vmem:[#allocation3 + $0xc8] sm:$0xff]
      %v2077 = vld [vmem:[#allocation3 + $0xd0] sm:$0xff]
      %v2078 = vld [vmem:[#allocation3 + $0xd8] sm:$0xff]
      %v2079 = vld [vmem:[#allocation3 + $0xe0] sm:$0xff]
      %v2080 = vld [vmem:[#allocation3 + $0xe8] sm:$0xff]
      %v2081 = vld [vmem:[#allocation3 + $0xf0] sm:$0xff]
      %v2082 = vld [vmem:[#allocation3 + $0xf8] sm:$0xff]
      %v2083 = vld [vmem:[%s3] sm:$0xff]
      %v2084 = vld [vmem:[%s3 + $0x8] sm:$0xff]
      %v2085 = vld [vmem:[%s3 + $0x10] sm:$0xff]
      %v2086 = vld [vmem:[%s3 + $0x18] sm:$0xff]
      %v2087 = vld [vmem:[%s3 + $0x20] sm:$0xf]
      %v2088 = vld [vmem:[%s4] sm:$0x1]
      %v2090 = vperm.slane %v2088, 0
      %vm2092 = vcmask 293888
      %v2094 = vsel %vm2092, %v2051, 0
      %v2097 = vsel %vm2092, %v2052, 0
      %v2100 = vsel %vm2092, %v2053, 0
      %v2103 = vsel %vm2092, %v2054, 0
      %v2106 = vsel %vm2092, %v2055, 0
      %v2109 = vsel %vm2092, %v2056, 0
      %v2112 = vsel %vm2092, %v2057, 0
      %v2115 = vsel %vm2092, %v2058, 0
      %v2118 = vsel %vm2092, %v2059, 0
      %v2121 = vsel %vm2092, %v2060, 0
      %v2124 = vsel %vm2092, %v2061, 0
      %v2127 = vsel %vm2092, %v2062, 0
      %v2130 = vsel %vm2092, %v2063, 0
      %v2133 = vsel %vm2092, %v2064, 0
      %v2136 = vsel %vm2092, %v2065, 0
      %v2139 = vsel %vm2092, %v2066, 0
      %v2142 = vsel %vm2092, %v2067, 0
      %v2145 = vsel %vm2092, %v2068, 0
      %v2148 = vsel %vm2092, %v2069, 0
      %v2151 = vsel %vm2092, %v2070, 0
      %v2154 = vsel %vm2092, %v2071, 0
      %v2157 = vsel %vm2092, %v2072, 0
      %v2160 = vsel %vm2092, %v2073, 0
      %v2163 = vsel %vm2092, %v2074, 0
      %v2166 = vsel %vm2092, %v2075, 0
      %v2169 = vsel %vm2092, %v2076, 0
      %v2172 = vsel %vm2092, %v2077, 0
      %v2175 = vsel %vm2092, %v2078, 0
      %v2178 = vsel %vm2092, %v2079, 0
      %v2181 = vsel %vm2092, %v2080, 0
      %v2184 = vsel %vm2092, %v2081, 0
      %v2187 = vsel %vm2092, %v2082, 0
      %vm2189 = vcmask 1043456
      %v2191 = vsel %vm2189, %v2087, 0
      %2193 = vmatpush.msra.mxu0 0.0
      %2194 = vmatpush.msra.mxu0 0.0
      %2195 = vmatpush.msra.mxu0 0.0
      %2196 = vmatpush.msra.mxu0 0.0
      %2197 = vmatpush.msra.mxu0 0.0
      %2198 = vmatpush.msra.mxu0 0.0
      %2199 = vmatpush.msra.mxu0 0.0
      %2200 = vmatpush.msra.mxu0 0.0
      %2201 = vmatpush.msra.mxu0 0.0
      %2202 = vmatpush.msra.mxu0 0.0
      %2203 = vmatpush.msra.mxu0 0.0
      %2204 = vmatpush.msra.mxu0 %v2191
      %2205 = vmatpush.msra.mxu0 %v2086
      %2206 = vmatpush.msra.mxu0 %v2085
      %2207 = vmatpush.msra.mxu0 %v2084
      %2208 = vmatpush.msra.mxu0 %v2083
      %2209 = vmatmul.f32.gmra.mxu0 %v2094
      %v2210 = vpop.f32.mrf.mxu0
      %v2211 = vadd.f32 %v2090, %v2210
      %2212 = vmatmul.f32.gmra.mxu0 %v2097
      %v2213 = vpop.f32.mrf.mxu0
      %v2214 = vadd.f32 %v2090, %v2213
      %2215 = vmatmul.f32.gmra.mxu0 %v2100
      %v2216 = vpop.f32.mrf.mxu0
      %v2217 = vadd.f32 %v2090, %v2216
      %2218 = vmatmul.f32.gmra.mxu0 %v2103
      %v2219 = vpop.f32.mrf.mxu0
      %v2220 = vadd.f32 %v2090, %v2219
      %2221 = vmatmul.f32.gmra.mxu0 %v2106
      %v2222 = vpop.f32.mrf.mxu0
      %v2223 = vadd.f32 %v2090, %v2222
      %2224 = vmatmul.f32.gmra.mxu0 %v2109
      %v2225 = vpop.f32.mrf.mxu0
      %v2226 = vadd.f32 %v2090, %v2225
      %2227 = vmatmul.f32.gmra.mxu0 %v2112
      %v2228 = vpop.f32.mrf.mxu0
      %v2229 = vadd.f32 %v2090, %v2228
      %2230 = vmatmul.f32.gmra.mxu0 %v2115
      %v2231 = vpop.f32.mrf.mxu0
      %v2232 = vadd.f32 %v2090, %v2231
      %2233 = vmatmul.f32.gmra.mxu0 %v2118
      %v2234 = vpop.f32.mrf.mxu0
      %v2235 = vadd.f32 %v2090, %v2234
      %2236 = vmatmul.f32.gmra.mxu0 %v2121
      %v2237 = vpop.f32.mrf.mxu0
      %v2238 = vadd.f32 %v2090, %v2237
      %2239 = vmatmul.f32.gmra.mxu0 %v2124
      %v2240 = vpop.f32.mrf.mxu0
      %v2241 = vadd.f32 %v2090, %v2240
      %2242 = vmatmul.f32.gmra.mxu0 %v2127
      %v2243 = vpop.f32.mrf.mxu0
      %v2244 = vadd.f32 %v2090, %v2243
      %2245 = vmatmul.f32.gmra.mxu0 %v2130
      %v2246 = vpop.f32.mrf.mxu0
      %v2247 = vadd.f32 %v2090, %v2246
      %2248 = vmatmul.f32.gmra.mxu0 %v2133
      %v2249 = vpop.f32.mrf.mxu0
      %v2250 = vadd.f32 %v2090, %v2249
      %2251 = vmatmul.f32.gmra.mxu0 %v2136
      %v2252 = vpop.f32.mrf.mxu0
      %v2253 = vadd.f32 %v2090, %v2252
      %2254 = vmatmul.f32.gmra.mxu0 %v2139
      %v2255 = vpop.f32.mrf.mxu0
      %v2256 = vadd.f32 %v2090, %v2255
      %2257 = vmatmul.f32.gmra.mxu0 %v2142
      %v2258 = vpop.f32.mrf.mxu0
      %v2259 = vadd.f32 %v2090, %v2258
      %2260 = vmatmul.f32.gmra.mxu0 %v2145
      %v2261 = vpop.f32.mrf.mxu0
      %v2262 = vadd.f32 %v2090, %v2261
      %2263 = vmatmul.f32.gmra.mxu0 %v2148
      %v2264 = vpop.f32.mrf.mxu0
      %v2265 = vadd.f32 %v2090, %v2264
      %2266 = vmatmul.f32.gmra.mxu0 %v2151
      %v2267 = vpop.f32.mrf.mxu0
      %v2268 = vadd.f32 %v2090, %v2267
      %2269 = vmatmul.f32.gmra.mxu0 %v2154
      %v2270 = vpop.f32.mrf.mxu0
      %v2271 = vadd.f32 %v2090, %v2270
      %2272 = vmatmul.f32.gmra.mxu0 %v2157
      %v2273 = vpop.f32.mrf.mxu0
      %v2274 = vadd.f32 %v2090, %v2273
      %2275 = vmatmul.f32.gmra.mxu0 %v2160
      %v2276 = vpop.f32.mrf.mxu0
      %v2277 = vadd.f32 %v2090, %v2276
      %2278 = vmatmul.f32.gmra.mxu0 %v2163
      %v2279 = vpop.f32.mrf.mxu0
      %v2280 = vadd.f32 %v2090, %v2279
      %2281 = vmatmul.f32.gmra.mxu0 %v2166
      %v2282 = vpop.f32.mrf.mxu0
      %v2283 = vadd.f32 %v2090, %v2282
      %2284 = vmatmul.f32.gmra.mxu0 %v2169
      %v2285 = vpop.f32.mrf.mxu0
      %v2286 = vadd.f32 %v2090, %v2285
      %2287 = vmatmul.f32.gmra.mxu0 %v2172
      %v2288 = vpop.f32.mrf.mxu0
      %v2289 = vadd.f32 %v2090, %v2288
      %2290 = vmatmul.f32.gmra.mxu0 %v2175
      %v2291 = vpop.f32.mrf.mxu0
      %v2292 = vadd.f32 %v2090, %v2291
      %2293 = vmatmul.f32.gmra.mxu0 %v2178
      %v2294 = vpop.f32.mrf.mxu0
      %v2295 = vadd.f32 %v2090, %v2294
      %2296 = vmatmul.f32.gmra.mxu0 %v2181
      %v2297 = vpop.f32.mrf.mxu0
      %v2298 = vadd.f32 %v2090, %v2297
      %2299 = vmatmul.f32.gmra.mxu0 %v2184
      %v2300 = vpop.f32.mrf.mxu0
      %v2301 = vadd.f32 %v2090, %v2300
      %2302 = vmatmul.f32.gmra.mxu0 %v2187
      %v2303 = vpop.f32.mrf.mxu0
      %v2304 = vadd.f32 %v2090, %v2303
      %2305 = vdwg.mxu0
      %2306 = vst.msk [vmem:[%s258] sm:$0xff] %vm367, %v2211
      %2307 = vst.msk [vmem:[%s258 + $0x8] sm:$0xff] %vm367, %v2214
      %2308 = vst.msk [vmem:[%s258 + $0x10] sm:$0xff] %vm367, %v2217
      %2309 = vst.msk [vmem:[%s258 + $0x18] sm:$0xff] %vm367, %v2220
      %2310 = vst.msk [vmem:[%s258 + $0x20] sm:$0xff] %vm367, %v2223
      %2311 = vst.msk [vmem:[%s258 + $0x28] sm:$0xff] %vm367, %v2226
      %2312 = vst.msk [vmem:[%s258 + $0x30] sm:$0xff] %vm367, %v2229
      %2313 = vst.msk [vmem:[%s258 + $0x38] sm:$0xff] %vm367, %v2232
      %2314 = vst.msk [vmem:[%s258 + $0x40] sm:$0xff] %vm367, %v2235
      %2315 = vst.msk [vmem:[%s258 + $0x48] sm:$0xff] %vm367, %v2238
      %2316 = vst.msk [vmem:[%s258 + $0x50] sm:$0xff] %vm367, %v2241
      %2317 = vst.msk [vmem:[%s258 + $0x58] sm:$0xff] %vm367, %v2244
      %2318 = vst.msk [vmem:[%s258 + $0x60] sm:$0xff] %vm367, %v2247
      %2319 = vst.msk [vmem:[%s258 + $0x68] sm:$0xff] %vm367, %v2250
      %2320 = vst.msk [vmem:[%s258 + $0x70] sm:$0xff] %vm367, %v2253
      %2321 = vst.msk [vmem:[%s258 + $0x78] sm:$0xff] %vm367, %v2256
      %2322 = vst.msk [vmem:[%s258 + $0x80] sm:$0xff] %vm367, %v2259
      %2323 = vst.msk [vmem:[%s258 + $0x88] sm:$0xff] %vm367, %v2262
      %2324 = vst.msk [vmem:[%s258 + $0x90] sm:$0xff] %vm367, %v2265
      %2325 = vst.msk [vmem:[%s258 + $0x98] sm:$0xff] %vm367, %v2268
      %2326 = vst.msk [vmem:[%s258 + $0xa0] sm:$0xff] %vm367, %v2271
      %2327 = vst.msk [vmem:[%s258 + $0xa8] sm:$0xff] %vm367, %v2274
      %2328 = vst.msk [vmem:[%s258 + $0xb0] sm:$0xff] %vm367, %v2277
      %2329 = vst.msk [vmem:[%s258 + $0xb8] sm:$0xff] %vm367, %v2280
      %2330 = vst.msk [vmem:[%s258 + $0xc0] sm:$0xff] %vm367, %v2283
      %2331 = vst.msk [vmem:[%s258 + $0xc8] sm:$0xff] %vm367, %v2286
      %2332 = vst.msk [vmem:[%s258 + $0xd0] sm:$0xff] %vm367, %v2289
      %2333 = vst.msk [vmem:[%s258 + $0xd8] sm:$0xff] %vm367, %v2292
      %2334 = vst.msk [vmem:[%s258 + $0xe0] sm:$0xff] %vm367, %v2295
      %2335 = vst.msk [vmem:[%s258 + $0xe8] sm:$0xff] %vm367, %v2298
      %2336 = vst.msk [vmem:[%s258 + $0xf0] sm:$0xff] %vm367, %v2301
      %2337 = vst.msk [vmem:[%s258 + $0xf8] sm:$0xff] %vm367, %v2304
      %v2338 = vsel %vm367, %v2211, 0.0
      %v2339 = vsel %vm367, %v2214, 0.0
      %v2340 = vadd.f32 %v2338, %v2339
      %v2341 = vsel %vm367, %v2217, 0.0
      %v2342 = vadd.f32 %v2340, %v2341
      %v2343 = vsel %vm367, %v2220, 0.0
      %v2344 = vadd.f32 %v2342, %v2343
      %v2345 = vsel %vm367, %v2223, 0.0
      %v2346 = vadd.f32 %v2344, %v2345
      %v2347 = vsel %vm367, %v2226, 0.0
      %v2348 = vadd.f32 %v2346, %v2347
      %v2349 = vsel %vm367, %v2229, 0.0
      %v2350 = vadd.f32 %v2348, %v2349
      %v2351 = vsel %vm367, %v2232, 0.0
      %v2352 = vadd.f32 %v2350, %v2351
      %v2353 = vsel %vm367, %v2235, 0.0
      %v2354 = vadd.f32 %v2352, %v2353
      %v2355 = vsel %vm367, %v2238, 0.0
      %v2356 = vadd.f32 %v2354, %v2355
      %v2357 = vsel %vm367, %v2241, 0.0
      %v2358 = vadd.f32 %v2356, %v2357
      %v2359 = vsel %vm367, %v2244, 0.0
      %v2360 = vadd.f32 %v2358, %v2359
      %v2361 = vsel %vm367, %v2247, 0.0
      %v2362 = vadd.f32 %v2360, %v2361
      %v2363 = vsel %vm367, %v2250, 0.0
      %v2364 = vadd.f32 %v2362, %v2363
      %v2365 = vsel %vm367, %v2253, 0.0
      %v2366 = vadd.f32 %v2364, %v2365
      %v2367 = vsel %vm367, %v2256, 0.0
      %v2368 = vadd.f32 %v2366, %v2367
      %v2369 = vsel %vm367, %v2259, 0.0
      %v2370 = vadd.f32 %v2368, %v2369
      %v2371 = vsel %vm367, %v2262, 0.0
      %v2372 = vadd.f32 %v2370, %v2371
      %v2373 = vsel %vm367, %v2265, 0.0
      %v2374 = vadd.f32 %v2372, %v2373
      %v2375 = vsel %vm367, %v2268, 0.0
      %v2376 = vadd.f32 %v2374, %v2375
      %v2377 = vsel %vm367, %v2271, 0.0
      %v2378 = vadd.f32 %v2376, %v2377
      %v2379 = vsel %vm367, %v2274, 0.0
      %v2380 = vadd.f32 %v2378, %v2379
      %v2381 = vsel %vm367, %v2277, 0.0
      %v2382 = vadd.f32 %v2380, %v2381
      %v2383 = vsel %vm367, %v2280, 0.0
      %v2384 = vadd.f32 %v2382, %v2383
      %v2385 = vsel %vm367, %v2283, 0.0
      %v2386 = vadd.f32 %v2384, %v2385
      %v2387 = vsel %vm367, %v2286, 0.0
      %v2388 = vadd.f32 %v2386, %v2387
      %v2389 = vsel %vm367, %v2289, 0.0
      %v2390 = vadd.f32 %v2388, %v2389
      %v2391 = vsel %vm367, %v2292, 0.0
      %v2392 = vadd.f32 %v2390, %v2391
      %v2393 = vsel %vm367, %v2295, 0.0
      %v2394 = vadd.f32 %v2392, %v2393
      %v2395 = vsel %vm367, %v2298, 0.0
      %v2396 = vadd.f32 %v2394, %v2395
      %v2397 = vsel %vm367, %v2301, 0.0
      %v2398 = vadd.f32 %v2396, %v2397
      %v2399 = vsel %vm367, %v2304, 0.0
      %v2400 = vadd.f32 %v2398, %v2399
      %v2401 = vrot.slane %v2400, 4
      %v2402 = vadd.f32 %v2400, %v2401
      %v2403 = vrot.slane %v2402, 2
      %v2404 = vadd.f32 %v2402, %v2403
      %v2405 = vrot.slane %v2404, 1
      %v2406 = vadd.f32 %v2404, %v2405
      %2407 = vst.msk [vmem:[%s262] sm:$0x1] %vm377, %v2406
      %v2408 = vmul.f32 %v2211, %v2211
      %v2409 = vmul.f32 %v2214, %v2214
      %v2410 = vmul.f32 %v2217, %v2217
      %v2411 = vmul.f32 %v2220, %v2220
      %v2412 = vmul.f32 %v2223, %v2223
      %v2413 = vmul.f32 %v2226, %v2226
      %v2414 = vmul.f32 %v2229, %v2229
      %v2415 = vmul.f32 %v2232, %v2232
      %v2416 = vmul.f32 %v2235, %v2235
      %v2417 = vmul.f32 %v2238, %v2238
      %v2418 = vmul.f32 %v2241, %v2241
      %v2419 = vmul.f32 %v2244, %v2244
      %v2420 = vmul.f32 %v2247, %v2247
      %v2421 = vmul.f32 %v2250, %v2250
      %v2422 = vmul.f32 %v2253, %v2253
      %v2423 = vmul.f32 %v2256, %v2256
      %v2424 = vmul.f32 %v2259, %v2259
      %v2425 = vmul.f32 %v2262, %v2262
      %v2426 = vmul.f32 %v2265, %v2265
      %v2427 = vmul.f32 %v2268, %v2268
      %v2428 = vmul.f32 %v2271, %v2271
      %v2429 = vmul.f32 %v2274, %v2274
      %v2430 = vmul.f32 %v2277, %v2277
      %v2431 = vmul.f32 %v2280, %v2280
      %v2432 = vmul.f32 %v2283, %v2283
      %v2433 = vmul.f32 %v2286, %v2286
      %v2434 = vmul.f32 %v2289, %v2289
      %v2435 = vmul.f32 %v2292, %v2292
      %v2436 = vmul.f32 %v2295, %v2295
      %v2437 = vmul.f32 %v2298, %v2298
      %v2438 = vmul.f32 %v2301, %v2301
      %v2439 = vmul.f32 %v2304, %v2304
      %v2440 = vsel %vm367, %v2408, 0.0
      %v2441 = vsel %vm367, %v2409, 0.0
      %v2442 = vadd.f32 %v2440, %v2441
      %v2443 = vsel %vm367, %v2410, 0.0
      %v2444 = vadd.f32 %v2442, %v2443
      %v2445 = vsel %vm367, %v2411, 0.0
      %v2446 = vadd.f32 %v2444, %v2445
      %v2447 = vsel %vm367, %v2412, 0.0
      %v2448 = vadd.f32 %v2446, %v2447
      %v2449 = vsel %vm367, %v2413, 0.0
      %v2450 = vadd.f32 %v2448, %v2449
      %v2451 = vsel %vm367, %v2414, 0.0
      %v2452 = vadd.f32 %v2450, %v2451
      %v2453 = vsel %vm367, %v2415, 0.0
      %v2454 = vadd.f32 %v2452, %v2453
      %v2455 = vsel %vm367, %v2416, 0.0
      %v2456 = vadd.f32 %v2454, %v2455
      %v2457 = vsel %vm367, %v2417, 0.0
      %v2458 = vadd.f32 %v2456, %v2457
      %v2459 = vsel %vm367, %v2418, 0.0
      %v2460 = vadd.f32 %v2458, %v2459
      %v2461 = vsel %vm367, %v2419, 0.0
      %v2462 = vadd.f32 %v2460, %v2461
      %v2463 = vsel %vm367, %v2420, 0.0
      %v2464 = vadd.f32 %v2462, %v2463
      %v2465 = vsel %vm367, %v2421, 0.0
      %v2466 = vadd.f32 %v2464, %v2465
      %v2467 = vsel %vm367, %v2422, 0.0
      %v2468 = vadd.f32 %v2466, %v2467
      %v2469 = vsel %vm367, %v2423, 0.0
      %v2470 = vadd.f32 %v2468, %v2469
      %v2471 = vsel %vm367, %v2424, 0.0
      %v2472 = vadd.f32 %v2470, %v2471
      %v2473 = vsel %vm367, %v2425, 0.0
      %v2474 = vadd.f32 %v2472, %v2473
      %v2475 = vsel %vm367, %v2426, 0.0
      %v2476 = vadd.f32 %v2474, %v2475
      %v2477 = vsel %vm367, %v2427, 0.0
      %v2478 = vadd.f32 %v2476, %v2477
      %v2479 = vsel %vm367, %v2428, 0.0
      %v2480 = vadd.f32 %v2478, %v2479
      %v2481 = vsel %vm367, %v2429, 0.0
      %v2482 = vadd.f32 %v2480, %v2481
      %v2483 = vsel %vm367, %v2430, 0.0
      %v2484 = vadd.f32 %v2482, %v2483
      %v2485 = vsel %vm367, %v2431, 0.0
      %v2486 = vadd.f32 %v2484, %v2485
      %v2487 = vsel %vm367, %v2432, 0.0
      %v2488 = vadd.f32 %v2486, %v2487
      %v2489 = vsel %vm367, %v2433, 0.0
      %v2490 = vadd.f32 %v2488, %v2489
      %v2491 = vsel %vm367, %v2434, 0.0
      %v2492 = vadd.f32 %v2490, %v2491
      %v2493 = vsel %vm367, %v2435, 0.0
      %v2494 = vadd.f32 %v2492, %v2493
      %v2495 = vsel %vm367, %v2436, 0.0
      %v2496 = vadd.f32 %v2494, %v2495
      %v2497 = vsel %vm367, %v2437, 0.0
      %v2498 = vadd.f32 %v2496, %v2497
      %v2499 = vsel %vm367, %v2438, 0.0
      %v2500 = vadd.f32 %v2498, %v2499
      %v2501 = vsel %vm367, %v2439, 0.0
      %v2502 = vadd.f32 %v2500, %v2501
      %v2503 = vrot.slane %v2502, 4
      %v2504 = vadd.f32 %v2502, %v2503
      %v2505 = vrot.slane %v2504, 2
      %v2506 = vadd.f32 %v2504, %v2505
      %v2507 = vrot.slane %v2506, 1
      %v2508 = vadd.f32 %v2506, %v2507
      %2509 = vst.msk [vmem:[%s262 + $0x1] sm:$0x1] %vm377, %v2508
      %p2510 = scmp.lt.s32.totalorder %s18, 1
      %s2511 = scalar_select %p2510, %s18, 1
      %s2512 = smul.addr %s2511, 32
      %s2513 = smul.addr %s2512, 8
      %s2514 = scalar_lea.vmem %s5, %s2513
      %p2515 = scmp.lt.s32.totalorder %s18, 1
      %s2516 = scalar_select %p2515, %s18, 1
      %s2517 = smul.addr %s2516, 2
      %s2518 = scalar_lea.vmem %s6, %s2517
      // Predicated region
      $region41: #{_lambda_.3} parent=39 // pred_check
        %p2519 = pneg %p146
      $region42: #{_lambda_.3} parent=39 // pred_check_branch
        %2521 = sbr.rel (%p2519) target = $region44
      $region43: #{_lambda_.3} parent=39 // pred_region
        _
      $region44: #{_lambda_.3} parent=39 // pred_fallthru
        _
      // Predicated region
      $region45: #{_lambda_.3} parent=39 // pred_check
        %p2522 = pneg %p172
      $region46: #{_lambda_.3} parent=39 // pred_check_branch
        %2524 = sbr.rel (%p2522) target = $region48
      $region47: #{_lambda_.3} parent=39 // pred_region
        _
      $region48: #{_lambda_.3} parent=39 // pred_fallthru
        _
    $region40: #{_lambda_.3} parent=5 // pred_fallthru
      _
    %p2525 = scmp.le.s32.totalorder 2, %s13
    // Predicated region
    $region49: #{_lambda_.3} parent=5 // pred_check
      %p2526 = pneg %p2525
    $region50: #{_lambda_.3} parent=5 // pred_check_branch
      %2528 = sbr.rel (%p2526) target = $region52
    $region51: #{_lambda_.3} parent=5 // pred_region
      %s2529 = ssub.s32 %s13, 2
      // Predicated region
      $region53: #{_lambda_.3} parent=51 // pred_check
        %p2530 = pneg %p152
      $region54: #{_lambda_.3} parent=51 // pred_check_branch
        %2532 = sbr.rel (%p2530) target = $region56
      $region55: #{_lambda_.3} parent=51 // pred_region
        %p2533 = scmp.lt.s32.totalorder %s19, 1
        %s2534 = scalar_select %p2533, %s19, 1
        %s2535 = smul.addr %s2534, 32
        %s2536 = smul.addr %s2535, 8
        %s2537 = scalar_lea.vmem %s5, %s2536
      $region56: #{_lambda_.3} parent=51 // pred_fallthru
        _
      // Predicated region
      $region57: #{_lambda_.3} parent=51 // pred_check
        %p2538 = pneg %p178
      $region58: #{_lambda_.3} parent=51 // pred_check_branch
        %2540 = sbr.rel (%p2538) target = $region60
      $region59: #{_lambda_.3} parent=51 // pred_region
        %p2541 = scmp.lt.s32.totalorder %s19, 1
        %s2542 = scalar_select %p2541, %s19, 1
        %s2543 = smul.addr %s2542, 2
        %s2544 = scalar_lea.vmem %s6, %s2543
      $region60: #{_lambda_.3} parent=51 // pred_fallthru
        _
    $region52: #{_lambda_.3} parent=5 // pred_fallthru
      _
  $region6: #{_lambda_.3} parent=0 // loop_footer
    %s17 = sadd.s32 1, %s13
  $region7: #{_lambda_.3} parent=0 // loop_footer_branch
    %12 = sbr.rel target = $region3
  $region8: #{_lambda_.3} parent=0 // loop_exit
    _

</llo_original>
